<compile_context>
chip_gen: v7x
topology: tpu7x:2x2x1
jax: 0.10.0
libtpu: 0.0.40
codegen_flags: <defaults>
</compile_context>

<pallas_src>
import functools

import jax
import jax.numpy as jnp
from jax import lax
from jax.experimental import pallas as pl
from jax.experimental.pallas import tpu as pltpu


def _h_tile(H):
    # 64 full-res rows per grid step bounds the per-step (double-buffered) img
    # VMEM block independent of H (v7x 64 MiB / v5e 16 MiB scoped-VMEM guard)
    # and yields 8 pooled rows per step, keeping the scratch stores sublane
    # (8)-aligned.  Small / awkward heights fall back to a single slab.
    return 64 if H % 64 == 0 else H


# ---------- fused kernel: 8x8 pool (per slab) + affine warp + blend ----------
def _pool_warp_blend_kernel(haff_ref, grid_ref, q_ref, img_ref, masks_ref,
                            out_ref, pooled_ref, *, c, m, hs, ws, th, W):
    i = pl.program_id(0)                       # batch element  ("parallel")
    t = pl.program_id(1)                       # 64-row slab    ("arbitrary")
    hw = hs * ws
    ths = th // 8                              # pooled rows produced per slab

    # ---- every step: 8x8 average-pool this row slab into VMEM scratch ----
    # H-pool: sublane-aligned reshape + sublane sum (no tiny-N MXU matmul).
    xt = img_ref[0].astype(jnp.float32)                                # (c, th, W)
    hpool = jnp.sum(xt.reshape(c, ths, 8, W), axis=2) * 0.125          # (c, ths, W)
    # W-pool: one small MXU matmul, K = W dense, bf16 in / f32 accumulate.
    wpool = jnp.dot(hpool.reshape(c * ths, W).astype(jnp.bfloat16), q_ref[...],
                    preferred_element_type=jnp.float32)                # (c*ths, ws)
    row0 = t * ths
    for ch in range(c):                        # c aligned sublane stores
        start = ch * hs + row0
        if hs % 8 == 0 and ths % 8 == 0:
            start = pl.multiple_of(start, 8)
        pooled_ref[pl.ds(start, ths), :] = wpool[ch * ths:(ch + 1) * ths, :]

    # ---- last slab only: warp all m planes + blend, write lane-dense block ----
    @pl.when(t == pl.num_programs(1) - 1)
    def _():
        # plane-dim softmax of the masks, recomputed in-kernel (no HBM round trip)
        msk = masks_ref[0]                                             # (m, hw)
        e = jnp.exp(msk - jnp.max(msk, axis=0, keepdims=True))
        bl = e / jnp.sum(e, axis=0, keepdims=True)                     # (m, hw)

        pooled_bf = pooled_ref[...].astype(jnp.bfloat16)               # (c*hs, ws)
        xn = grid_ref[0:1, :]            # (1, hw) affine_grid base x (align_corners)
        yn = grid_ref[1:2, :]            # (1, hw)
        xi = lax.broadcasted_iota(jnp.int32, (ws, hw), 0)              # loop-invariant
        yi = lax.broadcasted_iota(jnp.int32, (hs, hw), 0)

        acc = jnp.zeros((c, hw), jnp.float32)
        for j in range(m):               # m small & static -> unrolled, fits vregs
            base = (i * m + j) * 6
            a0 = haff_ref[base + 0]
            a1 = haff_ref[base + 1]
            a2 = haff_ref[base + 2]
            a3 = haff_ref[base + 3]
            a4 = haff_ref[base + 4]
            a5 = haff_ref[base + 5]
            # F.affine_grid (align_corners=True) sampling coordinates
            xs = a0 * xn + a1 * yn + a2
            ys = a3 * xn + a4 * yn + a5
            # F.grid_sample bilinear, padding_mode='zeros', align_corners=True
            ix = (xs + 1.0) * (0.5 * (ws - 1))
            iy = (ys + 1.0) * (0.5 * (hs - 1))
            ix0f = jnp.floor(ix)
            iy0f = jnp.floor(iy)
            fx = ix - ix0f
            fy = iy - iy0f
            ix0 = jnp.clip(ix0f, -4.0, float(ws + 4)).astype(jnp.int32)  # guard int cast
            iy0 = jnp.clip(iy0f, -4.0, float(hs + 4)).astype(jnp.int32)
            # Separable one-hot interpolation matrices.  Out-of-range corner
            # indices never match the iota -> zero weight == 'zeros' padding.
            Wx = (jnp.where(xi == ix0, 1.0 - fx, 0.0)
                  + jnp.where(xi == ix0 + 1, fx, 0.0))                 # (ws, hw)
            Wy = (jnp.where(yi == iy0, 1.0 - fy, 0.0)
                  + jnp.where(yi == iy0 + 1, fy, 0.0))                 # (hs, hw)
            # x-gather on the MXU (bf16 in / f32 acc), then y-gather as a VPU
            # weighted sublane reduce with the plane blend weight folded in.
            tmid = jnp.dot(pooled_bf, Wx.astype(jnp.bfloat16),
                           preferred_element_type=jnp.float32)         # (c*hs, hw)
            wyb = Wy * bl[j:j + 1, :]
            acc = acc + jnp.sum(tmid.reshape(c, hs, hw) * wyb[None, :, :], axis=1)

        out_ref[0] = acc                                               # (c, hw), lane-dense


def pool_warp_blend(img_bf16, haff_flat, masks_flat, grid_xy, q_bf16, *, th):
    b, c, H, W = img_bf16.shape
    _, m, hw = masks_flat.shape
    hs, ws = H // 8, W // 8
    kernel = functools.partial(_pool_warp_blend_kernel,
                               c=c, m=m, hs=hs, ws=ws, th=th, W=W)
    return pl.pallas_call(
        kernel,
        out_shape=jax.ShapeDtypeStruct((b, c, hw), jnp.float32),
        grid=(b, H // th),
        in_specs=[
            pl.BlockSpec(memory_space=pltpu.MemorySpace.SMEM),        # homography rows (b*m*6,)
            pl.BlockSpec((2, hw), lambda i, t: (0, 0)),               # base grid xn/yn (const)
            pl.BlockSpec((W, ws), lambda i, t: (0, 0)),               # W-pool matrix (const, bf16)
            pl.BlockSpec((1, c, th, W), lambda i, t: (i, 0, t, 0)),   # bf16 img row slab
            pl.BlockSpec((1, m, hw), lambda i, t: (i, 0, 0)),         # masks (blend softmax)
        ],
        out_specs=pl.BlockSpec((1, c, hw), lambda i, t: (i, 0, 0)),
        scratch_shapes=[pltpu.VMEM((c * hs, ws), jnp.float32)],       # pooled image accumulator
        compiler_params=pltpu.CompilerParams(
            dimension_semantics=("parallel", "arbitrary")),
    )(haff_flat, grid_xy, q_bf16, img_bf16, masks_flat)


# ------------------------------ forward (glue + kernel) ----------------------
def novel_view_homography(img, planar_masks, disp, intrs, baseline):
    b, c, H, W = img.shape
    _, m, hs, ws = planar_masks.shape
    hw = hs * ws
    assert (hs, ws) == (H // 8, W // 8) and H % 8 == 0 and W % 8 == 0
    assert hs > 1 and ws > 1, "align_corners=True grid needs hs, ws > 1"
    # keep in-kernel reshapes free relayouts and the flattened output lane-dense
    assert hs % 8 == 0 and hw % 128 == 0

    f32 = jnp.float32
    disp = disp.astype(f32)
    intrs = intrs.astype(f32)
    baseline = baseline.astype(f32)

    # ---- get_Rt ----
    R = jnp.broadcast_to(jnp.eye(3, dtype=f32), (b, 3, 3))
    t_vec = jnp.zeros((b, 3, 1), f32).at[:, 2, 0].set(-baseline)

    # ---- disp2depth ----
    focal = (intrs[:, 0, 0] + intrs[:, 1, 1]) * 0.5
    depth = baseline[:, None, None] * focal[:, None, None] / (disp * 2048.0)  # (b,hs,ws)
    # NOTE: disp ~ 0 -> inf/NaN, exactly like the reference module (not clamped).

    # ---- depth2normal: 3x3 sobel (padding=1) + L2 normalisation (tiny glue) ----
    dpad = jnp.pad(depth, ((0, 0), (1, 1), (1, 1)))
    gx = 0.5 * (dpad[:, 1:-1, 2:] - dpad[:, 1:-1, :-2])
    gy = 0.5 * (dpad[:, 2:, 1:-1] - dpad[:, :-2, 1:-1])
    dir_map = jnp.stack([-gx, -gy, jnp.ones_like(gx)], axis=1)                # (b,3,hs,ws)
    normal = dir_map / jnp.sqrt(jnp.sum(dir_map ** 2, axis=1))[:, None]

    # ---- get_planar_depth_normal: ~2K-element softmax/reduce kept in plain
    #      JAX per perf review (a separate grid=(1,) Pallas launch was pure
    #      overhead and produced the only non-lane-dense output). ----
    masks_flat = planar_masks.reshape(b, m, hw).astype(f32)
    e = jnp.exp(masks_flat - jnp.max(masks_flat, axis=-1, keepdims=True))
    wpix = e / jnp.sum(e, axis=-1, keepdims=True)                             # (b,m,hw)
    planar_depth = jnp.einsum("bmp,bp->bm", wpix, depth.reshape(b, hw))
    # bug-compatible with torch's normal.view(b, h*w, 3) memory reinterpretation
    planar_normal = jnp.einsum("bmp,bpk->bmk", wpix, normal.reshape(b, hw, 3))

    # ---- get_H: tiny 3x3 homography algebra (wrapper glue) ----
    # TODO(synk): torch.gesv-based batched 3x3 solve -> jnp.linalg.inv here.
    K_inv = jnp.linalg.inv(intrs)
    n_row = planar_normal.reshape(b * m, 1, 3)
    d = planar_depth.reshape(b * m, 1, 1)
    K_rep = jnp.tile(intrs, (m, 1, 1))        # torch K.repeat bug: K_rep[q] = K[q % b]
    Kinv_rep = jnp.repeat(K_inv, m, axis=0)
    R_rep = jnp.repeat(R, m, axis=0)
    t_rep = jnp.repeat(t_vec, m, axis=0)
    H_cal = R_rep - jnp.matmul(t_rep, n_row) / d
    Hmat = jnp.matmul(K_rep, jnp.matmul(H_cal, Kinv_rep))                     # (b*m,3,3)
    haff_flat = Hmat[:, :2, :].reshape(b * m * 6).astype(f32)                 # theta = H[:2,:]

    # ---- hoisted constants for the fused kernel ----
    col = jnp.arange(ws, dtype=f32)
    row = jnp.arange(hs, dtype=f32)
    xn = jnp.tile(2.0 * col / (ws - 1) - 1.0, hs)        # (hw,) align_corners=True
    yn = jnp.repeat(2.0 * row / (hs - 1) - 1.0, ws)      # (hw,)
    grid_xy = jnp.stack([xn, yn], axis=0)                # (2, hw)
    q_bf16 = (((jnp.arange(W)[:, None] // 8) == jnp.arange(ws)[None, :])
              .astype(f32) / 8.0).astype(jnp.bfloat16)   # (W, ws) W-pool matrix

    th = _h_tile(H)
    out_flat = pool_warp_blend(img.astype(jnp.bfloat16), haff_flat, masks_flat,
                               grid_xy, q_bf16, th=th)                        # (b, c, hw)
    return out_flat.reshape(b, c, hs, ws)


if __name__ == "__main__":
    key = jax.random.PRNGKey(0)
    b, c, m = 2, 3, 4
    H, W = 128, 128
    hs, ws = H // 8, W // 8

    k1, k2, k3, k4, k5 = jax.random.split(key, 5)
    img = jax.random.normal(k1, (b, c, H, W), jnp.float32)
    planar_masks = jax.random.normal(k2, (b, m, hs, ws), jnp.float32)
    disp = jax.random.uniform(k3, (b, hs, ws), jnp.float32, minval=5e-4, maxval=1.5e-3)
    baseline = jax.random.uniform(k4, (b,), jnp.float32, minval=0.04, maxval=0.06)
    f = 50.0 + 5.0 * jax.random.uniform(k5, (b,), jnp.float32)
    intrs = jnp.zeros((b, 3, 3), jnp.float32)
    intrs = intrs.at[:, 0, 0].set(f).at[:, 1, 1].set(f)
    intrs = intrs.at[:, 0, 2].set(ws / 2.0).at[:, 1, 2].set(hs / 2.0).at[:, 2, 2].set(1.0)

    out = jax.jit(novel_view_homography)(img, planar_masks, disp, intrs, baseline)
    out = jax.block_until_ready(out)
    assert out.shape == (b, c, hs, ws), out.shape
    assert bool(jnp.all(jnp.isfinite(out)))
    print("KERNEL_OK")
</pallas_src>

<mosaic_0001>
module attributes {stable_mosaic.version = 11 : i64} {
  func.func @_pool_warp_blend_kernel(%arg0: i32, %arg1: i32, %arg2: memref<48xf32, #tpu.memory_space<smem>>, %arg3: memref<2x256xf32, #tpu.memory_space<vmem>>, %arg4: memref<128x16xbf16, #tpu.memory_space<vmem>>, %arg5: memref<1x3x64x128xbf16, #tpu.memory_space<vmem>>, %arg6: memref<1x4x256xf32, #tpu.memory_space<vmem>>, %arg7: memref<1x3x256xf32, #tpu.memory_space<vmem>>, %arg8: memref<48x16xf32, #tpu.memory_space<vmem>>) attributes {dimension_semantics = [#tpu.dimension_semantics<parallel>, #tpu.dimension_semantics<arbitrary>], iteration_bounds = array<i64: 2, 2>, scalar_prefetch = 0 : i64, scratch_operands = 1 : i64, tpu.core_type = #tpu.core_type<tc>, window_params = [{transform_indices = @transform_0, window_bounds = array<i64: 48>}, {pipeline_mode = #tpu.pipeline_mode<synchronous>, transform_indices = @transform_1, window_bounds = array<i64: 2, 256>}, {pipeline_mode = #tpu.pipeline_mode<synchronous>, transform_indices = @transform_2, window_bounds = array<i64: 128, 16>}, {transform_indices = @transform_3, window_bounds = array<i64: 1, 3, 64, 128>}, {transform_indices = @transform_4, window_bounds = array<i64: 1, 4, 256>}, {transform_indices = @transform_5, window_bounds = array<i64: 1, 3, 256>}]} {
    %c0 = arith.constant 0 : index
    %c0_0 = arith.constant 0 : index
    %c0_1 = arith.constant 0 : index
    %c0_2 = arith.constant 0 : index
    %0 = vector.load %arg5[%c0, %c0_0, %c0_1, %c0_2] : memref<1x3x64x128xbf16, #tpu.memory_space<vmem>>, vector<1x3x64x128xbf16>
    %1 = vector.shape_cast %0 : vector<1x3x64x128xbf16> to vector<3x64x128xbf16>
    %2 = arith.extf %1 : vector<3x64x128xbf16> to vector<3x64x128xf32>
    %3 = vector.shape_cast %2 : vector<3x64x128xf32> to vector<3x8x8x128xf32>
    %cst = arith.constant dense<0.000000e+00> : vector<3x8x128xf32>
    %4 = vector.multi_reduction <add>, %3, %cst [2] : vector<3x8x8x128xf32> to vector<3x8x128xf32>
    %cst_3 = arith.constant 1.250000e-01 : f32
    %5 = vector.broadcast %cst_3 : f32 to vector<3x8x128xf32>
    %6 = arith.mulf %4, %5 : vector<3x8x128xf32>
    %7 = vector.shape_cast %6 : vector<3x8x128xf32> to vector<24x128xf32>
    %8 = arith.truncf %7 : vector<24x128xf32> to vector<24x128xbf16>
    %c0_4 = arith.constant 0 : index
    %c0_5 = arith.constant 0 : index
    %9 = vector.load %arg4[%c0_4, %c0_5] : memref<128x16xbf16, #tpu.memory_space<vmem>>, vector<128x16xbf16>
    %cst_6 = arith.constant dense<0.000000e+00> : vector<24x16xf32>
    %10 = tpu.matmul %8, %9, %cst_6 {dimension_numbers = #tpu.dot_dimension_numbers<[1], [0], [0], [1], [0, 0, 1, 1], [], []>} : vector<24x128xbf16>, vector<128x16xbf16>, vector<24x16xf32> -> vector<24x16xf32>
    %c8_i32 = arith.constant 8 : i32
    %11 = arith.muli %arg1, %c8_i32 : i32
    %c0_i32 = arith.constant 0 : i32
    %12 = arith.addi %c0_i32, %11 : i32
    %13 = tpu.assume_multiple %12, 8 : i32
    %14 = vector.extract_strided_slice %10 {offsets = [0, 0], sizes = [8, 16], strides = [1, 1]} : vector<24x16xf32> to vector<8x16xf32>
    %15 = arith.index_cast %13 : i32 to index
    %c0_7 = arith.constant 0 : index
    %16 = vector.load %arg8[%15, %c0_7] : memref<48x16xf32, #tpu.memory_space<vmem>>, vector<8x16xf32>
    tpu.vector_store %arg8[%15, %c0_7], %14 {strides = array<i32>} : memref<48x16xf32, #tpu.memory_space<vmem>>, vector<8x16xf32>,
    %c16_i32 = arith.constant 16 : i32
    %17 = arith.addi %c16_i32, %11 : i32
    %18 = tpu.assume_multiple %17, 8 : i32
    %19 = vector.extract_strided_slice %10 {offsets = [8, 0], sizes = [8, 16], strides = [1, 1]} : vector<24x16xf32> to vector<8x16xf32>
    %20 = arith.index_cast %18 : i32 to index
    %c0_8 = arith.constant 0 : index
    %21 = vector.load %arg8[%20, %c0_8] : memref<48x16xf32, #tpu.memory_space<vmem>>, vector<8x16xf32>
    tpu.vector_store %arg8[%20, %c0_8], %19 {strides = array<i32>} : memref<48x16xf32, #tpu.memory_space<vmem>>, vector<8x16xf32>,
    %c32_i32 = arith.constant 32 : i32
    %22 = arith.addi %c32_i32, %11 : i32
    %23 = tpu.assume_multiple %22, 8 : i32
    %24 = vector.extract_strided_slice %10 {offsets = [16, 0], sizes = [8, 16], strides = [1, 1]} : vector<24x16xf32> to vector<8x16xf32>
    %25 = arith.index_cast %23 : i32 to index
    %c0_9 = arith.constant 0 : index
    %26 = vector.load %arg8[%25, %c0_9] : memref<48x16xf32, #tpu.memory_space<vmem>>, vector<8x16xf32>
    tpu.vector_store %arg8[%25, %c0_9], %24 {strides = array<i32>} : memref<48x16xf32, #tpu.memory_space<vmem>>, vector<8x16xf32>,
    %c1_i32 = arith.constant 1 : i32
    %27 = arith.cmpi eq, %arg1, %c1_i32 : i32
    %28 = arith.extui %27 : i1 to i32
    %c0_i32_10 = arith.constant 0 : i32
    %29 = arith.cmpi ne, %28, %c0_i32_10 : i32
    scf.if %29 {
      %c0_11 = arith.constant 0 : index
      %c0_12 = arith.constant 0 : index
      %c0_13 = arith.constant 0 : index
      %30 = vector.load %arg6[%c0_11, %c0_12, %c0_13] : memref<1x4x256xf32, #tpu.memory_space<vmem>>, vector<1x4x256xf32>
      %31 = vector.shape_cast %30 : vector<1x4x256xf32> to vector<4x256xf32>
      %cst_14 = arith.constant dense<0xFF800000> : vector<256xf32>
      %32 = vector.multi_reduction <maximumf>, %31, %cst_14 [0] : vector<4x256xf32> to vector<256xf32>
      %33 = vector.shape_cast %32 : vector<256xf32> to vector<1x256xf32>
      %34 = vector.broadcast %33 : vector<1x256xf32> to vector<4x256xf32>
      %35 = arith.subf %31, %34 : vector<4x256xf32>
      %36 = math.exp %35 : vector<4x256xf32>
      %cst_15 = arith.constant dense<0.000000e+00> : vector<256xf32>
      %37 = vector.multi_reduction <add>, %36, %cst_15 [0] : vector<4x256xf32> to vector<256xf32>
      %38 = vector.shape_cast %37 : vector<256xf32> to vector<1x256xf32>
      %39 = vector.broadcast %38 : vector<1x256xf32> to vector<4x256xf32>
      %40 = arith.divf %36, %39 : vector<4x256xf32>
      %c0_16 = arith.constant 0 : index
      %c0_17 = arith.constant 0 : index
      %41 = vector.load %arg8[%c0_16, %c0_17] : memref<48x16xf32, #tpu.memory_space<vmem>>, vector<48x16xf32>
      %42 = arith.truncf %41 : vector<48x16xf32> to vector<48x16xbf16>
      %c0_18 = arith.constant 0 : index
      %c0_19 = arith.constant 0 : index
      %43 = vector.load %arg3[%c0_18, %c0_19] : memref<2x256xf32, #tpu.memory_space<vmem>>, vector<1x256xf32>
      %c1 = arith.constant 1 : index
      %c0_20 = arith.constant 0 : index
      %44 = vector.load %arg3[%c1, %c0_20] : memref<2x256xf32, #tpu.memory_space<vmem>>, vector<1x256xf32>
      %45 = tpu.iota {dimensions = array<i32: 0>} : vector<16x256xi32>
      %46 = tpu.iota {dimensions = array<i32: 0>} : vector<16x256xi32>
      %cst_21 = arith.constant 0.000000e+00 : f32
      %47 = vector.broadcast %cst_21 : f32 to vector<3x256xf32>
      %c4_i32 = arith.constant 4 : i32
      %48 = arith.muli %arg0, %c4_i32 : i32
      %c0_i32_22 = arith.constant 0 : i32
      %49 = arith.addi %48, %c0_i32_22 : i32
      %c6_i32 = arith.constant 6 : i32
      %50 = arith.muli %49, %c6_i32 : i32
      %c0_i32_23 = arith.constant 0 : i32
      %51 = arith.addi %50, %c0_i32_23 : i32
      %52 = arith.index_cast %51 : i32 to index
      %53 = memref.load %arg2[%52] : memref<48xf32, #tpu.memory_space<smem>>
      %c1_i32_24 = arith.constant 1 : i32
      %54 = arith.addi %50, %c1_i32_24 : i32
      %55 = arith.index_cast %54 : i32 to index
      %56 = memref.load %arg2[%55] : memref<48xf32, #tpu.memory_space<smem>>
      %c2_i32 = arith.constant 2 : i32
      %57 = arith.addi %50, %c2_i32 : i32
      %58 = arith.index_cast %57 : i32 to index
      %59 = memref.load %arg2[%58] : memref<48xf32, #tpu.memory_space<smem>>
      %c3_i32 = arith.constant 3 : i32
      %60 = arith.addi %50, %c3_i32 : i32
      %61 = arith.index_cast %60 : i32 to index
      %62 = memref.load %arg2[%61] : memref<48xf32, #tpu.memory_space<smem>>
      %c4_i32_25 = arith.constant 4 : i32
      %63 = arith.addi %50, %c4_i32_25 : i32
      %64 = arith.index_cast %63 : i32 to index
      %65 = memref.load %arg2[%64] : memref<48xf32, #tpu.memory_space<smem>>
      %c5_i32 = arith.constant 5 : i32
      %66 = arith.addi %50, %c5_i32 : i32
      %67 = arith.index_cast %66 : i32 to index
      %68 = memref.load %arg2[%67] : memref<48xf32, #tpu.memory_space<smem>>
      %69 = vector.broadcast %53 : f32 to vector<1x256xf32>
      %70 = arith.mulf %69, %43 : vector<1x256xf32>
      %71 = vector.broadcast %56 : f32 to vector<1x256xf32>
      %72 = arith.mulf %71, %44 : vector<1x256xf32>
      %73 = arith.addf %70, %72 : vector<1x256xf32>
      %74 = vector.broadcast %59 : f32 to vector<1x256xf32>
      %75 = arith.addf %73, %74 : vector<1x256xf32>
      %76 = vector.broadcast %62 : f32 to vector<1x256xf32>
      %77 = arith.mulf %76, %43 : vector<1x256xf32>
      %78 = vector.broadcast %65 : f32 to vector<1x256xf32>
      %79 = arith.mulf %78, %44 : vector<1x256xf32>
      %80 = arith.addf %77, %79 : vector<1x256xf32>
      %81 = vector.broadcast %68 : f32 to vector<1x256xf32>
      %82 = arith.addf %80, %81 : vector<1x256xf32>
      %cst_26 = arith.constant 1.000000e+00 : f32
      %83 = vector.broadcast %cst_26 : f32 to vector<1x256xf32>
      %84 = arith.addf %75, %83 : vector<1x256xf32>
      %cst_27 = arith.constant 7.500000e+00 : f32
      %85 = vector.broadcast %cst_27 : f32 to vector<1x256xf32>
      %86 = arith.mulf %84, %85 : vector<1x256xf32>
      %cst_28 = arith.constant 1.000000e+00 : f32
      %87 = vector.broadcast %cst_28 : f32 to vector<1x256xf32>
      %88 = arith.addf %82, %87 : vector<1x256xf32>
      %cst_29 = arith.constant 7.500000e+00 : f32
      %89 = vector.broadcast %cst_29 : f32 to vector<1x256xf32>
      %90 = arith.mulf %88, %89 : vector<1x256xf32>
      %91 = math.floor %86 : vector<1x256xf32>
      %92 = math.floor %90 : vector<1x256xf32>
      %93 = arith.subf %86, %91 : vector<1x256xf32>
      %94 = arith.subf %90, %92 : vector<1x256xf32>
      %cst_30 = arith.constant -4.000000e+00 : f32
      %cst_31 = arith.constant 2.000000e+01 : f32
      %95 = vector.broadcast %cst_30 : f32 to vector<1x256xf32>
      %96 = arith.maximumf %95, %91 : vector<1x256xf32>
      %97 = vector.broadcast %cst_31 : f32 to vector<1x256xf32>
      %98 = arith.minimumf %97, %96 : vector<1x256xf32>
      %99 = arith.fptosi %98 : vector<1x256xf32> to vector<1x256xi32>
      %cst_32 = arith.constant -4.000000e+00 : f32
      %cst_33 = arith.constant 2.000000e+01 : f32
      %100 = vector.broadcast %cst_32 : f32 to vector<1x256xf32>
      %101 = arith.maximumf %100, %92 : vector<1x256xf32>
      %102 = vector.broadcast %cst_33 : f32 to vector<1x256xf32>
      %103 = arith.minimumf %102, %101 : vector<1x256xf32>
      %104 = arith.fptosi %103 : vector<1x256xf32> to vector<1x256xi32>
      %105 = vector.broadcast %99 : vector<1x256xi32> to vector<16x256xi32>
      %106 = arith.cmpi eq, %45, %105 : vector<16x256xi32>
      %cst_34 = arith.constant 1.000000e+00 : f32
      %107 = vector.broadcast %cst_34 : f32 to vector<1x256xf32>
      %108 = arith.subf %107, %93 : vector<1x256xf32>
      %cst_35 = arith.constant 0.000000e+00 : f32
      %109 = vector.shape_cast %108 : vector<1x256xf32> to vector<1x256xf32>
      %110 = vector.broadcast %109 : vector<1x256xf32> to vector<16x256xf32>
      %111 = vector.broadcast %cst_35 : f32 to vector<16x256xf32>
      %112 = arith.select %106, %110, %111 : vector<16x256xi1>, vector<16x256xf32>
      %c1_i32_36 = arith.constant 1 : i32
      %113 = vector.broadcast %c1_i32_36 : i32 to vector<1x256xi32>
      %114 = arith.addi %99, %113 : vector<1x256xi32>
      %115 = vector.broadcast %114 : vector<1x256xi32> to vector<16x256xi32>
      %116 = arith.cmpi eq, %45, %115 : vector<16x256xi32>
      %cst_37 = arith.constant 0.000000e+00 : f32
      %117 = vector.shape_cast %93 : vector<1x256xf32> to vector<1x256xf32>
      %118 = vector.broadcast %117 : vector<1x256xf32> to vector<16x256xf32>
      %119 = vector.broadcast %cst_37 : f32 to vector<16x256xf32>
      %120 = arith.select %116, %118, %119 : vector<16x256xi1>, vector<16x256xf32>
      %121 = arith.addf %112, %120 : vector<16x256xf32>
      %122 = vector.broadcast %104 : vector<1x256xi32> to vector<16x256xi32>
      %123 = arith.cmpi eq, %46, %122 : vector<16x256xi32>
      %cst_38 = arith.constant 1.000000e+00 : f32
      %124 = vector.broadcast %cst_38 : f32 to vector<1x256xf32>
      %125 = arith.subf %124, %94 : vector<1x256xf32>
      %cst_39 = arith.constant 0.000000e+00 : f32
      %126 = vector.shape_cast %125 : vector<1x256xf32> to vector<1x256xf32>
      %127 = vector.broadcast %126 : vector<1x256xf32> to vector<16x256xf32>
      %128 = vector.broadcast %cst_39 : f32 to vector<16x256xf32>
      %129 = arith.select %123, %127, %128 : vector<16x256xi1>, vector<16x256xf32>
      %c1_i32_40 = arith.constant 1 : i32
      %130 = vector.broadcast %c1_i32_40 : i32 to vector<1x256xi32>
      %131 = arith.addi %104, %130 : vector<1x256xi32>
      %132 = vector.broadcast %131 : vector<1x256xi32> to vector<16x256xi32>
      %133 = arith.cmpi eq, %46, %132 : vector<16x256xi32>
      %cst_41 = arith.constant 0.000000e+00 : f32
      %134 = vector.shape_cast %94 : vector<1x256xf32> to vector<1x256xf32>
      %135 = vector.broadcast %134 : vector<1x256xf32> to vector<16x256xf32>
      %136 = vector.broadcast %cst_41 : f32 to vector<16x256xf32>
      %137 = arith.select %133, %135, %136 : vector<16x256xi1>, vector<16x256xf32>
      %138 = arith.addf %129, %137 : vector<16x256xf32>
      %139 = arith.truncf %121 : vector<16x256xf32> to vector<16x256xbf16>
      %cst_42 = arith.constant dense<0.000000e+00> : vector<48x256xf32>
      %140 = tpu.matmul %42, %139, %cst_42 {dimension_numbers = #tpu.dot_dimension_numbers<[1], [0], [0], [1], [0, 0, 1, 1], [], []>} : vector<48x16xbf16>, vector<16x256xbf16>, vector<48x256xf32> -> vector<48x256xf32>
      %141 = vector.extract_strided_slice %40 {offsets = [0, 0], sizes = [1, 256], strides = [1, 1]} : vector<4x256xf32> to vector<1x256xf32>
      %142 = vector.broadcast %141 : vector<1x256xf32> to vector<16x256xf32>
      %143 = arith.mulf %138, %142 : vector<16x256xf32>
      %144 = vector.shape_cast %140 : vector<48x256xf32> to vector<3x16x256xf32>
      %145 = vector.shape_cast %143 : vector<16x256xf32> to vector<1x16x256xf32>
      %146 = vector.broadcast %145 : vector<1x16x256xf32> to vector<3x16x256xf32>
      %147 = arith.mulf %144, %146 : vector<3x16x256xf32>
      %cst_43 = arith.constant dense<0.000000e+00> : vector<3x256xf32>
      %148 = vector.multi_reduction <add>, %147, %cst_43 [1] : vector<3x16x256xf32> to vector<3x256xf32>
      %149 = arith.addf %47, %148 : vector<3x256xf32>
      %c4_i32_44 = arith.constant 4 : i32
      %150 = arith.muli %arg0, %c4_i32_44 : i32
      %c1_i32_45 = arith.constant 1 : i32
      %151 = arith.addi %150, %c1_i32_45 : i32
      %c6_i32_46 = arith.constant 6 : i32
      %152 = arith.muli %151, %c6_i32_46 : i32
      %c0_i32_47 = arith.constant 0 : i32
      %153 = arith.addi %152, %c0_i32_47 : i32
      %154 = arith.index_cast %153 : i32 to index
      %155 = memref.load %arg2[%154] : memref<48xf32, #tpu.memory_space<smem>>
      %c1_i32_48 = arith.constant 1 : i32
      %156 = arith.addi %152, %c1_i32_48 : i32
      %157 = arith.index_cast %156 : i32 to index
      %158 = memref.load %arg2[%157] : memref<48xf32, #tpu.memory_space<smem>>
      %c2_i32_49 = arith.constant 2 : i32
      %159 = arith.addi %152, %c2_i32_49 : i32
      %160 = arith.index_cast %159 : i32 to index
      %161 = memref.load %arg2[%160] : memref<48xf32, #tpu.memory_space<smem>>
      %c3_i32_50 = arith.constant 3 : i32
      %162 = arith.addi %152, %c3_i32_50 : i32
      %163 = arith.index_cast %162 : i32 to index
      %164 = memref.load %arg2[%163] : memref<48xf32, #tpu.memory_space<smem>>
      %c4_i32_51 = arith.constant 4 : i32
      %165 = arith.addi %152, %c4_i32_51 : i32
      %166 = arith.index_cast %165 : i32 to index
      %167 = memref.load %arg2[%166] : memref<48xf32, #tpu.memory_space<smem>>
      %c5_i32_52 = arith.constant 5 : i32
      %168 = arith.addi %152, %c5_i32_52 : i32
      %169 = arith.index_cast %168 : i32 to index
      %170 = memref.load %arg2[%169] : memref<48xf32, #tpu.memory_space<smem>>
      %171 = vector.broadcast %155 : f32 to vector<1x256xf32>
      %172 = arith.mulf %171, %43 : vector<1x256xf32>
      %173 = vector.broadcast %158 : f32 to vector<1x256xf32>
      %174 = arith.mulf %173, %44 : vector<1x256xf32>
      %175 = arith.addf %172, %174 : vector<1x256xf32>
      %176 = vector.broadcast %161 : f32 to vector<1x256xf32>
      %177 = arith.addf %175, %176 : vector<1x256xf32>
      %178 = vector.broadcast %164 : f32 to vector<1x256xf32>
      %179 = arith.mulf %178, %43 : vector<1x256xf32>
      %180 = vector.broadcast %167 : f32 to vector<1x256xf32>
      %181 = arith.mulf %180, %44 : vector<1x256xf32>
      %182 = arith.addf %179, %181 : vector<1x256xf32>
      %183 = vector.broadcast %170 : f32 to vector<1x256xf32>
      %184 = arith.addf %182, %183 : vector<1x256xf32>
      %cst_53 = arith.constant 1.000000e+00 : f32
      %185 = vector.broadcast %cst_53 : f32 to vector<1x256xf32>
      %186 = arith.addf %177, %185 : vector<1x256xf32>
      %cst_54 = arith.constant 7.500000e+00 : f32
      %187 = vector.broadcast %cst_54 : f32 to vector<1x256xf32>
      %188 = arith.mulf %186, %187 : vector<1x256xf32>
      %cst_55 = arith.constant 1.000000e+00 : f32
      %189 = vector.broadcast %cst_55 : f32 to vector<1x256xf32>
      %190 = arith.addf %184, %189 : vector<1x256xf32>
      %cst_56 = arith.constant 7.500000e+00 : f32
      %191 = vector.broadcast %cst_56 : f32 to vector<1x256xf32>
      %192 = arith.mulf %190, %191 : vector<1x256xf32>
      %193 = math.floor %188 : vector<1x256xf32>
      %194 = math.floor %192 : vector<1x256xf32>
      %195 = arith.subf %188, %193 : vector<1x256xf32>
      %196 = arith.subf %192, %194 : vector<1x256xf32>
      %cst_57 = arith.constant -4.000000e+00 : f32
      %cst_58 = arith.constant 2.000000e+01 : f32
      %197 = vector.broadcast %cst_57 : f32 to vector<1x256xf32>
      %198 = arith.maximumf %197, %193 : vector<1x256xf32>
      %199 = vector.broadcast %cst_58 : f32 to vector<1x256xf32>
      %200 = arith.minimumf %199, %198 : vector<1x256xf32>
      %201 = arith.fptosi %200 : vector<1x256xf32> to vector<1x256xi32>
      %cst_59 = arith.constant -4.000000e+00 : f32
      %cst_60 = arith.constant 2.000000e+01 : f32
      %202 = vector.broadcast %cst_59 : f32 to vector<1x256xf32>
      %203 = arith.maximumf %202, %194 : vector<1x256xf32>
      %204 = vector.broadcast %cst_60 : f32 to vector<1x256xf32>
      %205 = arith.minimumf %204, %203 : vector<1x256xf32>
      %206 = arith.fptosi %205 : vector<1x256xf32> to vector<1x256xi32>
      %207 = vector.broadcast %201 : vector<1x256xi32> to vector<16x256xi32>
      %208 = arith.cmpi eq, %45, %207 : vector<16x256xi32>
      %cst_61 = arith.constant 1.000000e+00 : f32
      %209 = vector.broadcast %cst_61 : f32 to vector<1x256xf32>
      %210 = arith.subf %209, %195 : vector<1x256xf32>
      %cst_62 = arith.constant 0.000000e+00 : f32
      %211 = vector.shape_cast %210 : vector<1x256xf32> to vector<1x256xf32>
      %212 = vector.broadcast %211 : vector<1x256xf32> to vector<16x256xf32>
      %213 = vector.broadcast %cst_62 : f32 to vector<16x256xf32>
      %214 = arith.select %208, %212, %213 : vector<16x256xi1>, vector<16x256xf32>
      %c1_i32_63 = arith.constant 1 : i32
      %215 = vector.broadcast %c1_i32_63 : i32 to vector<1x256xi32>
      %216 = arith.addi %201, %215 : vector<1x256xi32>
      %217 = vector.broadcast %216 : vector<1x256xi32> to vector<16x256xi32>
      %218 = arith.cmpi eq, %45, %217 : vector<16x256xi32>
      %cst_64 = arith.constant 0.000000e+00 : f32
      %219 = vector.shape_cast %195 : vector<1x256xf32> to vector<1x256xf32>
      %220 = vector.broadcast %219 : vector<1x256xf32> to vector<16x256xf32>
      %221 = vector.broadcast %cst_64 : f32 to vector<16x256xf32>
      %222 = arith.select %218, %220, %221 : vector<16x256xi1>, vector<16x256xf32>
      %223 = arith.addf %214, %222 : vector<16x256xf32>
      %224 = vector.broadcast %206 : vector<1x256xi32> to vector<16x256xi32>
      %225 = arith.cmpi eq, %46, %224 : vector<16x256xi32>
      %cst_65 = arith.constant 1.000000e+00 : f32
      %226 = vector.broadcast %cst_65 : f32 to vector<1x256xf32>
      %227 = arith.subf %226, %196 : vector<1x256xf32>
      %cst_66 = arith.constant 0.000000e+00 : f32
      %228 = vector.shape_cast %227 : vector<1x256xf32> to vector<1x256xf32>
      %229 = vector.broadcast %228 : vector<1x256xf32> to vector<16x256xf32>
      %230 = vector.broadcast %cst_66 : f32 to vector<16x256xf32>
      %231 = arith.select %225, %229, %230 : vector<16x256xi1>, vector<16x256xf32>
      %c1_i32_67 = arith.constant 1 : i32
      %232 = vector.broadcast %c1_i32_67 : i32 to vector<1x256xi32>
      %233 = arith.addi %206, %232 : vector<1x256xi32>
      %234 = vector.broadcast %233 : vector<1x256xi32> to vector<16x256xi32>
      %235 = arith.cmpi eq, %46, %234 : vector<16x256xi32>
      %cst_68 = arith.constant 0.000000e+00 : f32
      %236 = vector.shape_cast %196 : vector<1x256xf32> to vector<1x256xf32>
      %237 = vector.broadcast %236 : vector<1x256xf32> to vector<16x256xf32>
      %238 = vector.broadcast %cst_68 : f32 to vector<16x256xf32>
      %239 = arith.select %235, %237, %238 : vector<16x256xi1>, vector<16x256xf32>
      %240 = arith.addf %231, %239 : vector<16x256xf32>
      %241 = arith.truncf %223 : vector<16x256xf32> to vector<16x256xbf16>
      %cst_69 = arith.constant dense<0.000000e+00> : vector<48x256xf32>
      %242 = tpu.matmul %42, %241, %cst_69 {dimension_numbers = #tpu.dot_dimension_numbers<[1], [0], [0], [1], [0, 0, 1, 1], [], []>} : vector<48x16xbf16>, vector<16x256xbf16>, vector<48x256xf32> -> vector<48x256xf32>
      %243 = vector.extract_strided_slice %40 {offsets = [1, 0], sizes = [1, 256], strides = [1, 1]} : vector<4x256xf32> to vector<1x256xf32>
      %244 = vector.broadcast %243 : vector<1x256xf32> to vector<16x256xf32>
      %245 = arith.mulf %240, %244 : vector<16x256xf32>
      %246 = vector.shape_cast %242 : vector<48x256xf32> to vector<3x16x256xf32>
      %247 = vector.shape_cast %245 : vector<16x256xf32> to vector<1x16x256xf32>
      %248 = vector.broadcast %247 : vector<1x16x256xf32> to vector<3x16x256xf32>
      %249 = arith.mulf %246, %248 : vector<3x16x256xf32>
      %cst_70 = arith.constant dense<0.000000e+00> : vector<3x256xf32>
      %250 = vector.multi_reduction <add>, %249, %cst_70 [1] : vector<3x16x256xf32> to vector<3x256xf32>
      %251 = arith.addf %149, %250 : vector<3x256xf32>
      %c4_i32_71 = arith.constant 4 : i32
      %252 = arith.muli %arg0, %c4_i32_71 : i32
      %c2_i32_72 = arith.constant 2 : i32
      %253 = arith.addi %252, %c2_i32_72 : i32
      %c6_i32_73 = arith.constant 6 : i32
      %254 = arith.muli %253, %c6_i32_73 : i32
      %c0_i32_74 = arith.constant 0 : i32
      %255 = arith.addi %254, %c0_i32_74 : i32
      %256 = arith.index_cast %255 : i32 to index
      %257 = memref.load %arg2[%256] : memref<48xf32, #tpu.memory_space<smem>>
      %c1_i32_75 = arith.constant 1 : i32
      %258 = arith.addi %254, %c1_i32_75 : i32
      %259 = arith.index_cast %258 : i32 to index
      %260 = memref.load %arg2[%259] : memref<48xf32, #tpu.memory_space<smem>>
      %c2_i32_76 = arith.constant 2 : i32
      %261 = arith.addi %254, %c2_i32_76 : i32
      %262 = arith.index_cast %261 : i32 to index
      %263 = memref.load %arg2[%262] : memref<48xf32, #tpu.memory_space<smem>>
      %c3_i32_77 = arith.constant 3 : i32
      %264 = arith.addi %254, %c3_i32_77 : i32
      %265 = arith.index_cast %264 : i32 to index
      %266 = memref.load %arg2[%265] : memref<48xf32, #tpu.memory_space<smem>>
      %c4_i32_78 = arith.constant 4 : i32
      %267 = arith.addi %254, %c4_i32_78 : i32
      %268 = arith.index_cast %267 : i32 to index
      %269 = memref.load %arg2[%268] : memref<48xf32, #tpu.memory_space<smem>>
      %c5_i32_79 = arith.constant 5 : i32
      %270 = arith.addi %254, %c5_i32_79 : i32
      %271 = arith.index_cast %270 : i32 to index
      %272 = memref.load %arg2[%271] : memref<48xf32, #tpu.memory_space<smem>>
      %273 = vector.broadcast %257 : f32 to vector<1x256xf32>
      %274 = arith.mulf %273, %43 : vector<1x256xf32>
      %275 = vector.broadcast %260 : f32 to vector<1x256xf32>
      %276 = arith.mulf %275, %44 : vector<1x256xf32>
      %277 = arith.addf %274, %276 : vector<1x256xf32>
      %278 = vector.broadcast %263 : f32 to vector<1x256xf32>
      %279 = arith.addf %277, %278 : vector<1x256xf32>
      %280 = vector.broadcast %266 : f32 to vector<1x256xf32>
      %281 = arith.mulf %280, %43 : vector<1x256xf32>
      %282 = vector.broadcast %269 : f32 to vector<1x256xf32>
      %283 = arith.mulf %282, %44 : vector<1x256xf32>
      %284 = arith.addf %281, %283 : vector<1x256xf32>
      %285 = vector.broadcast %272 : f32 to vector<1x256xf32>
      %286 = arith.addf %284, %285 : vector<1x256xf32>
      %cst_80 = arith.constant 1.000000e+00 : f32
      %287 = vector.broadcast %cst_80 : f32 to vector<1x256xf32>
      %288 = arith.addf %279, %287 : vector<1x256xf32>
      %cst_81 = arith.constant 7.500000e+00 : f32
      %289 = vector.broadcast %cst_81 : f32 to vector<1x256xf32>
      %290 = arith.mulf %288, %289 : vector<1x256xf32>
      %cst_82 = arith.constant 1.000000e+00 : f32
      %291 = vector.broadcast %cst_82 : f32 to vector<1x256xf32>
      %292 = arith.addf %286, %291 : vector<1x256xf32>
      %cst_83 = arith.constant 7.500000e+00 : f32
      %293 = vector.broadcast %cst_83 : f32 to vector<1x256xf32>
      %294 = arith.mulf %292, %293 : vector<1x256xf32>
      %295 = math.floor %290 : vector<1x256xf32>
      %296 = math.floor %294 : vector<1x256xf32>
      %297 = arith.subf %290, %295 : vector<1x256xf32>
      %298 = arith.subf %294, %296 : vector<1x256xf32>
      %cst_84 = arith.constant -4.000000e+00 : f32
      %cst_85 = arith.constant 2.000000e+01 : f32
      %299 = vector.broadcast %cst_84 : f32 to vector<1x256xf32>
      %300 = arith.maximumf %299, %295 : vector<1x256xf32>
      %301 = vector.broadcast %cst_85 : f32 to vector<1x256xf32>
      %302 = arith.minimumf %301, %300 : vector<1x256xf32>
      %303 = arith.fptosi %302 : vector<1x256xf32> to vector<1x256xi32>
      %cst_86 = arith.constant -4.000000e+00 : f32
      %cst_87 = arith.constant 2.000000e+01 : f32
      %304 = vector.broadcast %cst_86 : f32 to vector<1x256xf32>
      %305 = arith.maximumf %304, %296 : vector<1x256xf32>
      %306 = vector.broadcast %cst_87 : f32 to vector<1x256xf32>
      %307 = arith.minimumf %306, %305 : vector<1x256xf32>
      %308 = arith.fptosi %307 : vector<1x256xf32> to vector<1x256xi32>
      %309 = vector.broadcast %303 : vector<1x256xi32> to vector<16x256xi32>
      %310 = arith.cmpi eq, %45, %309 : vector<16x256xi32>
      %cst_88 = arith.constant 1.000000e+00 : f32
      %311 = vector.broadcast %cst_88 : f32 to vector<1x256xf32>
      %312 = arith.subf %311, %297 : vector<1x256xf32>
      %cst_89 = arith.constant 0.000000e+00 : f32
      %313 = vector.shape_cast %312 : vector<1x256xf32> to vector<1x256xf32>
      %314 = vector.broadcast %313 : vector<1x256xf32> to vector<16x256xf32>
      %315 = vector.broadcast %cst_89 : f32 to vector<16x256xf32>
      %316 = arith.select %310, %314, %315 : vector<16x256xi1>, vector<16x256xf32>
      %c1_i32_90 = arith.constant 1 : i32
      %317 = vector.broadcast %c1_i32_90 : i32 to vector<1x256xi32>
      %318 = arith.addi %303, %317 : vector<1x256xi32>
      %319 = vector.broadcast %318 : vector<1x256xi32> to vector<16x256xi32>
      %320 = arith.cmpi eq, %45, %319 : vector<16x256xi32>
      %cst_91 = arith.constant 0.000000e+00 : f32
      %321 = vector.shape_cast %297 : vector<1x256xf32> to vector<1x256xf32>
      %322 = vector.broadcast %321 : vector<1x256xf32> to vector<16x256xf32>
      %323 = vector.broadcast %cst_91 : f32 to vector<16x256xf32>
      %324 = arith.select %320, %322, %323 : vector<16x256xi1>, vector<16x256xf32>
      %325 = arith.addf %316, %324 : vector<16x256xf32>
      %326 = vector.broadcast %308 : vector<1x256xi32> to vector<16x256xi32>
      %327 = arith.cmpi eq, %46, %326 : vector<16x256xi32>
      %cst_92 = arith.constant 1.000000e+00 : f32
      %328 = vector.broadcast %cst_92 : f32 to vector<1x256xf32>
      %329 = arith.subf %328, %298 : vector<1x256xf32>
      %cst_93 = arith.constant 0.000000e+00 : f32
      %330 = vector.shape_cast %329 : vector<1x256xf32> to vector<1x256xf32>
      %331 = vector.broadcast %330 : vector<1x256xf32> to vector<16x256xf32>
      %332 = vector.broadcast %cst_93 : f32 to vector<16x256xf32>
      %333 = arith.select %327, %331, %332 : vector<16x256xi1>, vector<16x256xf32>
      %c1_i32_94 = arith.constant 1 : i32
      %334 = vector.broadcast %c1_i32_94 : i32 to vector<1x256xi32>
      %335 = arith.addi %308, %334 : vector<1x256xi32>
      %336 = vector.broadcast %335 : vector<1x256xi32> to vector<16x256xi32>
      %337 = arith.cmpi eq, %46, %336 : vector<16x256xi32>
      %cst_95 = arith.constant 0.000000e+00 : f32
      %338 = vector.shape_cast %298 : vector<1x256xf32> to vector<1x256xf32>
      %339 = vector.broadcast %338 : vector<1x256xf32> to vector<16x256xf32>
      %340 = vector.broadcast %cst_95 : f32 to vector<16x256xf32>
      %341 = arith.select %337, %339, %340 : vector<16x256xi1>, vector<16x256xf32>
      %342 = arith.addf %333, %341 : vector<16x256xf32>
      %343 = arith.truncf %325 : vector<16x256xf32> to vector<16x256xbf16>
      %cst_96 = arith.constant dense<0.000000e+00> : vector<48x256xf32>
      %344 = tpu.matmul %42, %343, %cst_96 {dimension_numbers = #tpu.dot_dimension_numbers<[1], [0], [0], [1], [0, 0, 1, 1], [], []>} : vector<48x16xbf16>, vector<16x256xbf16>, vector<48x256xf32> -> vector<48x256xf32>
      %345 = vector.extract_strided_slice %40 {offsets = [2, 0], sizes = [1, 256], strides = [1, 1]} : vector<4x256xf32> to vector<1x256xf32>
      %346 = vector.broadcast %345 : vector<1x256xf32> to vector<16x256xf32>
      %347 = arith.mulf %342, %346 : vector<16x256xf32>
      %348 = vector.shape_cast %344 : vector<48x256xf32> to vector<3x16x256xf32>
      %349 = vector.shape_cast %347 : vector<16x256xf32> to vector<1x16x256xf32>
      %350 = vector.broadcast %349 : vector<1x16x256xf32> to vector<3x16x256xf32>
      %351 = arith.mulf %348, %350 : vector<3x16x256xf32>
      %cst_97 = arith.constant dense<0.000000e+00> : vector<3x256xf32>
      %352 = vector.multi_reduction <add>, %351, %cst_97 [1] : vector<3x16x256xf32> to vector<3x256xf32>
      %353 = arith.addf %251, %352 : vector<3x256xf32>
      %c4_i32_98 = arith.constant 4 : i32
      %354 = arith.muli %arg0, %c4_i32_98 : i32
      %c3_i32_99 = arith.constant 3 : i32
      %355 = arith.addi %354, %c3_i32_99 : i32
      %c6_i32_100 = arith.constant 6 : i32
      %356 = arith.muli %355, %c6_i32_100 : i32
      %c0_i32_101 = arith.constant 0 : i32
      %357 = arith.addi %356, %c0_i32_101 : i32
      %358 = arith.index_cast %357 : i32 to index
      %359 = memref.load %arg2[%358] : memref<48xf32, #tpu.memory_space<smem>>
      %c1_i32_102 = arith.constant 1 : i32
      %360 = arith.addi %356, %c1_i32_102 : i32
      %361 = arith.index_cast %360 : i32 to index
      %362 = memref.load %arg2[%361] : memref<48xf32, #tpu.memory_space<smem>>
      %c2_i32_103 = arith.constant 2 : i32
      %363 = arith.addi %356, %c2_i32_103 : i32
      %364 = arith.index_cast %363 : i32 to index
      %365 = memref.load %arg2[%364] : memref<48xf32, #tpu.memory_space<smem>>
      %c3_i32_104 = arith.constant 3 : i32
      %366 = arith.addi %356, %c3_i32_104 : i32
      %367 = arith.index_cast %366 : i32 to index
      %368 = memref.load %arg2[%367] : memref<48xf32, #tpu.memory_space<smem>>
      %c4_i32_105 = arith.constant 4 : i32
      %369 = arith.addi %356, %c4_i32_105 : i32
      %370 = arith.index_cast %369 : i32 to index
      %371 = memref.load %arg2[%370] : memref<48xf32, #tpu.memory_space<smem>>
      %c5_i32_106 = arith.constant 5 : i32
      %372 = arith.addi %356, %c5_i32_106 : i32
      %373 = arith.index_cast %372 : i32 to index
      %374 = memref.load %arg2[%373] : memref<48xf32, #tpu.memory_space<smem>>
      %375 = vector.broadcast %359 : f32 to vector<1x256xf32>
      %376 = arith.mulf %375, %43 : vector<1x256xf32>
      %377 = vector.broadcast %362 : f32 to vector<1x256xf32>
      %378 = arith.mulf %377, %44 : vector<1x256xf32>
      %379 = arith.addf %376, %378 : vector<1x256xf32>
      %380 = vector.broadcast %365 : f32 to vector<1x256xf32>
      %381 = arith.addf %379, %380 : vector<1x256xf32>
      %382 = vector.broadcast %368 : f32 to vector<1x256xf32>
      %383 = arith.mulf %382, %43 : vector<1x256xf32>
      %384 = vector.broadcast %371 : f32 to vector<1x256xf32>
      %385 = arith.mulf %384, %44 : vector<1x256xf32>
      %386 = arith.addf %383, %385 : vector<1x256xf32>
      %387 = vector.broadcast %374 : f32 to vector<1x256xf32>
      %388 = arith.addf %386, %387 : vector<1x256xf32>
      %cst_107 = arith.constant 1.000000e+00 : f32
      %389 = vector.broadcast %cst_107 : f32 to vector<1x256xf32>
      %390 = arith.addf %381, %389 : vector<1x256xf32>
      %cst_108 = arith.constant 7.500000e+00 : f32
      %391 = vector.broadcast %cst_108 : f32 to vector<1x256xf32>
      %392 = arith.mulf %390, %391 : vector<1x256xf32>
      %cst_109 = arith.constant 1.000000e+00 : f32
      %393 = vector.broadcast %cst_109 : f32 to vector<1x256xf32>
      %394 = arith.addf %388, %393 : vector<1x256xf32>
      %cst_110 = arith.constant 7.500000e+00 : f32
      %395 = vector.broadcast %cst_110 : f32 to vector<1x256xf32>
      %396 = arith.mulf %394, %395 : vector<1x256xf32>
      %397 = math.floor %392 : vector<1x256xf32>
      %398 = math.floor %396 : vector<1x256xf32>
      %399 = arith.subf %392, %397 : vector<1x256xf32>
      %400 = arith.subf %396, %398 : vector<1x256xf32>
      %cst_111 = arith.constant -4.000000e+00 : f32
      %cst_112 = arith.constant 2.000000e+01 : f32
      %401 = vector.broadcast %cst_111 : f32 to vector<1x256xf32>
      %402 = arith.maximumf %401, %397 : vector<1x256xf32>
      %403 = vector.broadcast %cst_112 : f32 to vector<1x256xf32>
      %404 = arith.minimumf %403, %402 : vector<1x256xf32>
      %405 = arith.fptosi %404 : vector<1x256xf32> to vector<1x256xi32>
      %cst_113 = arith.constant -4.000000e+00 : f32
      %cst_114 = arith.constant 2.000000e+01 : f32
      %406 = vector.broadcast %cst_113 : f32 to vector<1x256xf32>
      %407 = arith.maximumf %406, %398 : vector<1x256xf32>
      %408 = vector.broadcast %cst_114 : f32 to vector<1x256xf32>
      %409 = arith.minimumf %408, %407 : vector<1x256xf32>
      %410 = arith.fptosi %409 : vector<1x256xf32> to vector<1x256xi32>
      %411 = vector.broadcast %405 : vector<1x256xi32> to vector<16x256xi32>
      %412 = arith.cmpi eq, %45, %411 : vector<16x256xi32>
      %cst_115 = arith.constant 1.000000e+00 : f32
      %413 = vector.broadcast %cst_115 : f32 to vector<1x256xf32>
      %414 = arith.subf %413, %399 : vector<1x256xf32>
      %cst_116 = arith.constant 0.000000e+00 : f32
      %415 = vector.shape_cast %414 : vector<1x256xf32> to vector<1x256xf32>
      %416 = vector.broadcast %415 : vector<1x256xf32> to vector<16x256xf32>
      %417 = vector.broadcast %cst_116 : f32 to vector<16x256xf32>
      %418 = arith.select %412, %416, %417 : vector<16x256xi1>, vector<16x256xf32>
      %c1_i32_117 = arith.constant 1 : i32
      %419 = vector.broadcast %c1_i32_117 : i32 to vector<1x256xi32>
      %420 = arith.addi %405, %419 : vector<1x256xi32>
      %421 = vector.broadcast %420 : vector<1x256xi32> to vector<16x256xi32>
      %422 = arith.cmpi eq, %45, %421 : vector<16x256xi32>
      %cst_118 = arith.constant 0.000000e+00 : f32
      %423 = vector.shape_cast %399 : vector<1x256xf32> to vector<1x256xf32>
      %424 = vector.broadcast %423 : vector<1x256xf32> to vector<16x256xf32>
      %425 = vector.broadcast %cst_118 : f32 to vector<16x256xf32>
      %426 = arith.select %422, %424, %425 : vector<16x256xi1>, vector<16x256xf32>
      %427 = arith.addf %418, %426 : vector<16x256xf32>
      %428 = vector.broadcast %410 : vector<1x256xi32> to vector<16x256xi32>
      %429 = arith.cmpi eq, %46, %428 : vector<16x256xi32>
      %cst_119 = arith.constant 1.000000e+00 : f32
      %430 = vector.broadcast %cst_119 : f32 to vector<1x256xf32>
      %431 = arith.subf %430, %400 : vector<1x256xf32>
      %cst_120 = arith.constant 0.000000e+00 : f32
      %432 = vector.shape_cast %431 : vector<1x256xf32> to vector<1x256xf32>
      %433 = vector.broadcast %432 : vector<1x256xf32> to vector<16x256xf32>
      %434 = vector.broadcast %cst_120 : f32 to vector<16x256xf32>
      %435 = arith.select %429, %433, %434 : vector<16x256xi1>, vector<16x256xf32>
      %c1_i32_121 = arith.constant 1 : i32
      %436 = vector.broadcast %c1_i32_121 : i32 to vector<1x256xi32>
      %437 = arith.addi %410, %436 : vector<1x256xi32>
      %438 = vector.broadcast %437 : vector<1x256xi32> to vector<16x256xi32>
      %439 = arith.cmpi eq, %46, %438 : vector<16x256xi32>
      %cst_122 = arith.constant 0.000000e+00 : f32
      %440 = vector.shape_cast %400 : vector<1x256xf32> to vector<1x256xf32>
      %441 = vector.broadcast %440 : vector<1x256xf32> to vector<16x256xf32>
      %442 = vector.broadcast %cst_122 : f32 to vector<16x256xf32>
      %443 = arith.select %439, %441, %442 : vector<16x256xi1>, vector<16x256xf32>
      %444 = arith.addf %435, %443 : vector<16x256xf32>
      %445 = arith.truncf %427 : vector<16x256xf32> to vector<16x256xbf16>
      %cst_123 = arith.constant dense<0.000000e+00> : vector<48x256xf32>
      %446 = tpu.matmul %42, %445, %cst_123 {dimension_numbers = #tpu.dot_dimension_numbers<[1], [0], [0], [1], [0, 0, 1, 1], [], []>} : vector<48x16xbf16>, vector<16x256xbf16>, vector<48x256xf32> -> vector<48x256xf32>
      %447 = vector.extract_strided_slice %40 {offsets = [3, 0], sizes = [1, 256], strides = [1, 1]} : vector<4x256xf32> to vector<1x256xf32>
      %448 = vector.broadcast %447 : vector<1x256xf32> to vector<16x256xf32>
      %449 = arith.mulf %444, %448 : vector<16x256xf32>
      %450 = vector.shape_cast %446 : vector<48x256xf32> to vector<3x16x256xf32>
      %451 = vector.shape_cast %449 : vector<16x256xf32> to vector<1x16x256xf32>
      %452 = vector.broadcast %451 : vector<1x16x256xf32> to vector<3x16x256xf32>
      %453 = arith.mulf %450, %452 : vector<3x16x256xf32>
      %cst_124 = arith.constant dense<0.000000e+00> : vector<3x256xf32>
      %454 = vector.multi_reduction <add>, %453, %cst_124 [1] : vector<3x16x256xf32> to vector<3x256xf32>
      %455 = arith.addf %353, %454 : vector<3x256xf32>
      %c0_125 = arith.constant 0 : index
      %c0_126 = arith.constant 0 : index
      %c0_127 = arith.constant 0 : index
      %456 = vector.load %arg7[%c0_125, %c0_126, %c0_127] : memref<1x3x256xf32, #tpu.memory_space<vmem>>, vector<1x3x256xf32>
      %457 = vector.shape_cast %456 : vector<1x3x256xf32> to vector<3x256xf32>
      %458 = vector.shape_cast %455 : vector<3x256xf32> to vector<1x3x256xf32>
      tpu.vector_store %arg7[%c0_125, %c0_126, %c0_127], %458 {strides = array<i32>} : memref<1x3x256xf32, #tpu.memory_space<vmem>>, vector<1x3x256xf32>,
    } else {
    }
    return
  }
  func.func @transform_0(%arg0: i32, %arg1: i32) -> i32 {
    %c0_i32 = arith.constant 0 : i32
    %c0_i32_0 = arith.constant 0 : i32
    return %c0_i32 : i32
  }
  func.func @transform_1(%arg0: i32, %arg1: i32) -> (i32, i32) {
    %c0_i32 = arith.constant 0 : i32
    %c0_i32_0 = arith.constant 0 : i32
    %c0_i32_1 = arith.constant 0 : i32
    return %c0_i32, %c0_i32_0 : i32, i32
  }
  func.func @transform_2(%arg0: i32, %arg1: i32) -> (i32, i32) {
    %c0_i32 = arith.constant 0 : i32
    %c0_i32_0 = arith.constant 0 : i32
    %c0_i32_1 = arith.constant 0 : i32
    return %c0_i32, %c0_i32_0 : i32, i32
  }
  func.func @transform_3(%arg0: i32, %arg1: i32) -> (i32, i32, i32, i32) {
    %c0_i32 = arith.constant 0 : i32
    %c0_i32_0 = arith.constant 0 : i32
    %c0_i32_1 = arith.constant 0 : i32
    return %arg0, %c0_i32, %arg1, %c0_i32_0 : i32, i32, i32, i32
  }
  func.func @transform_4(%arg0: i32, %arg1: i32) -> (i32, i32, i32) {
    %c0_i32 = arith.constant 0 : i32
    %c0_i32_0 = arith.constant 0 : i32
    %c0_i32_1 = arith.constant 0 : i32
    return %arg0, %c0_i32, %c0_i32_0 : i32, i32, i32
  }
  func.func @transform_5(%arg0: i32, %arg1: i32) -> (i32, i32, i32) {
    %c0_i32 = arith.constant 0 : i32
    %c0_i32_0 = arith.constant 0 : i32
    %c0_i32_1 = arith.constant 0 : i32
    return %arg0, %c0_i32, %c0_i32_0 : i32, i32, i32
  }
}

</mosaic_0001>

<llo_original>
// kernel: custom-call.11
$region0: #{custom-call.11}
  %s0 = inlined_call_operand.vmem [shape: f32[2,3,3], index: 0, kind: input, shape index: {}]
  %s1 = inlined_call_operand.vmem [shape: f32[2,3,3], index: 1, kind: output, shape index: {0}]
  %s2 = inlined_call_operand.hbm [shape: s32[2,3], index: 2, kind: output, shape index: {1}]
  %s3 = inlined_call_operand.vmem [shape: s32[2,3], index: 3, kind: output, shape index: {2}]
  %4 = xla_tuple %s1, %s2, %s3
  $region1: #{custom-call.11} parent=0
    #allocation0 [shape = 'u8[4096]{0}', space=vmem, size = 0x1000, scoped, tag = 'operand span for operand 0']
    #allocation1 [shape = 'u8[4096]{0}', space=vmem, size = 0x1000, scoped, tag = 'packed  for operand 0']
    #allocation2 [shape = 'u8[4096]{0}', space=vmem, size = 0x1000, scoped, tag = 'operand span for operand 1']
    #allocation3 [shape = 'u8[4096]{0}', space=vmem, size = 0x1000, scoped, tag = 'packed  for operand 1']
    #allocation4 [shape = 'u8[4096]{0}', space=vmem, size = 0x1000, scoped, tag = 'operand span for operand 2']
    #allocation5 [shape = 'u8[2048]{0}', space=vmem, size = 0x800, scoped, tag = 'packed  for operand 2']
    #allocation6 [shape = 's32[2]{0}', space=sflag, size = 0x8, scoped, tag = 'scoped memory for custom-call.11']
    #allocation7 [shape = 'u8[4096]{0}', space=vmem, size = 0x1000, scoped, tag = 'operand span for operand 3']
    #allocation8 [shape = 'u8[2048]{0}', space=vmem, size = 0x800, scoped, tag = 'packed  for operand 3']
    %5 = vsyncpa [#allocation6], 0
    %s6 = scalar_lea.sflag [#allocation6], 1
    %7 = vsyncpa %s6, 0
    loop: start=0, step=1, limit=4
    $region2: #{custom-call.11} parent=1 // loop_pre_header
      _
    $region3: #{custom-call.11} parent=1 // loop_header
      %s9 = sphi 0, %s13
      %p10 = scmp.ge.s32.totalorder %s9, 4
      %s21 = sphi 0, %s23
      %s24 = sphi 0, %s21
      %s25 = sphi 0, %s24
      %s41 = sphi 0, %s25
      %s49 = sphi 0, %s51
      %s52 = sphi 0, %s49
      %s53 = sphi 0, %s52
      %s69 = sphi 0, %s53
    $region4: #{custom-call.11} parent=1 // loop_header_branch
      %12 = sbr.rel (%p10) target = $region8
    $region5: #{custom-call.11} parent=1 // loop_body
      %s14 = ssub.s32 %s9, 1
      %s15 = ssub.s32 %s9, 2
      %s16 = sadd.s32 %s9, 1
      %s17 = sshrl.u32 %s9, 3
      %s18 = sshrl.u32 %s16, 3
      %s19 = ssub.s32 %s17, %s18
      %p20 = scmp.eq.s32.totalorder %s19, 0
      %s22 = sadd.s32 %s21, 1
      %s23 = scalar_select %p20, %s21, %s22
      %p26 = pneg %p20
      %p27 = scmp.eq.s32.totalorder %s9, 1
      %p28 = por %p26, %p27
      %p29 = scmp.ne.s32.totalorder %s21, %s24
      %p30 = scmp.eq.s32.totalorder %s9, 0
      %p31 = por %p29, %p30
      %p32 = scmp.ne.s32.totalorder %s21, %s24
      %p33 = scmp.eq.s32.totalorder %s14, 1
      %p34 = por %p32, %p33
      %p35 = scmp.ne.s32.totalorder %s24, %s25
      %p36 = scmp.eq.s32.totalorder %s14, 0
      %p37 = por %p35, %p36
      %p38 = scmp.ne.s32.totalorder %s24, %s25
      %p39 = scmp.eq.s32.totalorder %s15, 1
      %p40 = por %p38, %p39
      %p42 = scmp.ne.s32.totalorder %s25, %s41
      %p43 = scmp.eq.s32.totalorder %s15, 0
      %p44 = por %p42, %p43
      %s45 = sshrl.u32 %s9, 3
      %s46 = sshrl.u32 %s16, 3
      %s47 = ssub.s32 %s45, %s46
      %p48 = scmp.eq.s32.totalorder %s47, 0
      %s50 = sadd.s32 %s49, 1
      %s51 = scalar_select %p48, %s49, %s50
      %p54 = pneg %p48
      %p55 = scmp.eq.s32.totalorder %s9, 1
      %p56 = por %p54, %p55
      %p57 = scmp.ne.s32.totalorder %s49, %s52
      %p58 = scmp.eq.s32.totalorder %s9, 0
      %p59 = por %p57, %p58
      %p60 = scmp.ne.s32.totalorder %s49, %s52
      %p61 = scmp.eq.s32.totalorder %s14, 1
      %p62 = por %p60, %p61
      %p63 = scmp.ne.s32.totalorder %s52, %s53
      %p64 = scmp.eq.s32.totalorder %s14, 0
      %p65 = por %p63, %p64
      %p66 = scmp.ne.s32.totalorder %s52, %s53
      %p67 = scmp.eq.s32.totalorder %s15, 1
      %p68 = por %p66, %p67
      %p70 = scmp.ne.s32.totalorder %s53, %s69
      %p71 = scmp.eq.s32.totalorder %s15, 0
      %p72 = por %p70, %p71
      %p73 = scmp.le.s32.totalorder 1, %s9
      %p74 = scmp.lt.s32.totalorder %s9, 3
      %p75 = pnand %p73, %p74
      %p76 = pneg %p75
      // Predicated region
      $region9: #{custom-call.11} parent=5 // pred_check
        _
      $region10: #{custom-call.11} parent=5 // pred_check_branch
        %78 = sbr.rel (%p75) target = $region12
      $region11: #{custom-call.11} parent=5 // pred_region
        %s79 = ssub.s32 %s9, 1
      $region12: #{custom-call.11} parent=5 // pred_fallthru
        _
      %p80 = scmp.lt.s32.totalorder %s9, 2
      // Predicated region
      $region13: #{custom-call.11} parent=5 // pred_check
        %p81 = pneg %p80
      $region14: #{custom-call.11} parent=5 // pred_check_branch
        %83 = sbr.rel (%p81) target = $region16
      $region15: #{custom-call.11} parent=5 // pred_region
        %s84 = sand.u32 %s9, 1
        %s85 = sand.u32 %s9, 1
        %s86 = smul.addr %s85, 4
        %s87 = scalar_lea.vmem [#allocation1], %s86
        %s88 = smul.addr %s9, 4
        %s89 = scalar_lea.vmem %s0, %s88
        // Predicated region
        $region17: #{custom-call.11} parent=15 // pred_check
          _
        $region18: #{custom-call.11} parent=15 // pred_check_branch
          %91 = sbr.rel (0) target = $region20
        $region19: #{custom-call.11} parent=15 // pred_region
          // Predicated region
          $region21: #{custom-call.11} parent=19 // pred_check
            _
          $region22: #{custom-call.11} parent=19 // pred_check_branch
            %93 = sbr.rel target = $region24
          $region23: #{custom-call.11} parent=19 // pred_region
            // Predicated region
            $region36: #{custom-call.11} parent=23 // pred_check
              _
            $region37: #{custom-call.11} parent=23 // pred_check_branch
              %108 = sbr.rel (0) target = $region39
            $region38: #{custom-call.11} parent=23 // pred_region
              loop: start=0, step=1, limit=1
              $region40: #{custom-call.11} parent=38 // loop_pre_header
                _
              $region41: #{custom-call.11} parent=38 // loop_header
                %s111 = sphi 0, %s115
                %p112 = scmp.ge.s32.totalorder %s111, 1
                %s116 = sphi %s89, %s89
                %s117 = sphi %s87, %s87
              $region42: #{custom-call.11} parent=38 // loop_header_branch
                %114 = sbr.rel (%p112) target = $region46
              $region43: #{custom-call.11} parent=38 // loop_body
                %v118 = vld [vmem:[%s116] sm:$0xf]
                %119 = vst [vmem:[%s117] sm:$0xf] %v118
              $region44: #{custom-call.11} parent=38 // loop_footer
                %s115 = sadd.s32 1, %s111
              $region45: #{custom-call.11} parent=38 // loop_footer_branch
                %110 = sbr.rel target = $region41
              $region46: #{custom-call.11} parent=38 // loop_exit
                _
            $region39: #{custom-call.11} parent=23 // pred_fallthru
              _
          $region24: #{custom-call.11} parent=19 // pred_fallthru
            _
          // Predicated region
          $region25: #{custom-call.11} parent=19 // pred_check
            _
          $region26: #{custom-call.11} parent=19 // pred_check_branch
            %95 = sbr.rel (0) target = $region28
          $region27: #{custom-call.11} parent=19 // pred_region
            loop: start=0, step=1, limit=1
            $region29: #{custom-call.11} parent=27 // loop_pre_header
              _
            $region30: #{custom-call.11} parent=27 // loop_header
              %s98 = sphi 0, %s102
              %p99 = scmp.ge.s32.totalorder %s98, 1
              %s103 = sphi %s89, %s89
              %s104 = sphi %s87, %s87
            $region31: #{custom-call.11} parent=27 // loop_header_branch
              %101 = sbr.rel (%p99) target = $region35
            $region32: #{custom-call.11} parent=27 // loop_body
              %v105 = vld [vmem:[%s103] sm:$0xf]
              %106 = vst [vmem:[%s104] sm:$0xf] %v105
            $region33: #{custom-call.11} parent=27 // loop_footer
              %s102 = sadd.s32 1, %s98
            $region34: #{custom-call.11} parent=27 // loop_footer_branch
              %97 = sbr.rel target = $region30
            $region35: #{custom-call.11} parent=27 // loop_exit
              _
          $region28: #{custom-call.11} parent=19 // pred_fallthru
            _
        $region20: #{custom-call.11} parent=15 // pred_fallthru
          _
        %120 = vnop
      $region16: #{custom-call.11} parent=5 // pred_fallthru
        _
      %p121 = scmp.le.s32.totalorder 1, %s9
      %p122 = scmp.lt.s32.totalorder %s9, 3
      %p123 = pnand %p121, %p122
      %p124 = pneg %p123
      // Predicated region
      $region47: #{custom-call.11} parent=5 // pred_check
        _
      $region48: #{custom-call.11} parent=5 // pred_check_branch
        %126 = sbr.rel (%p123) target = $region50
      $region49: #{custom-call.11} parent=5 // pred_region
        #allocation9 [shape = 's32[3,128]{1,0}', space=vmem, size = 0x1000, scoped, tag = 'scratch for permutations']
        %s127 = ssub.s32 %s9, 1
        %s128 = sand.u32 %s14, 1
        %s129 = sand.u32 %s14, 1
        %s130 = smul.addr %s129, 4
        %s131 = scalar_lea.vmem [#allocation1], %s130
        %s132 = sand.u32 %s14, 1
        %s133 = sand.u32 %s14, 1
        %s134 = smul.addr %s133, 4
        %s135 = scalar_lea.vmem [#allocation1], %s134
        %s136 = sand.u32 %s14, 1
        %s137 = sand.u32 %s14, 1
        %s138 = smul.addr %s137, 4
        %s139 = scalar_lea.vmem [#allocation3], %s138
        %p140 = pneg %p37
        %p141 = pneg %p34
        %s142 = sand.u32 %s24, 1
        %s143 = scalar_lea.sflag [#allocation6], %s142
        %s144 = sand.u32 %s24, 1
        %s145 = smul.addr %s144, 2
        %s146 = scalar_lea.vmem [#allocation5], %s145
        %p147 = pneg %p65
        %p148 = pneg %p62
        %s149 = sand.u32 %s52, 1
        %s150 = sand.u32 %s52, 1
        %s151 = smul.addr %s150, 2
        %s152 = scalar_lea.vmem [#allocation8], %s151
        %s154 = sshllo.u32 0, 4
        %v155 = vld [vmem:[%s135] sm:%s154]
        %156 = vst [vmem:[#allocation0] sm:%s154] %v155
        %s157 = sshrl.u32 %s14, 3
        %s158 = sshrl.u32 %s14, 3
        %v159 = vld [vmem:[#allocation0] sm:$0xff]
        %160 = vst [vmem:[#allocation2] sm:$0xff] %v159
        %s161 = sand.u32 %s14, 7
        %s162 = scalar_lea.vmem [#allocation4], %s161
        %s163 = sand.u32 %s14, 7
        %s164 = scalar_lea.vmem [#allocation7], %s163
        %165 = vst [vmem:[%s162] sm:$0x1] 0
        %v166 = vlaneseq
        %v167 = vshrl.u32 %v166, 7
        %v168 = vmov %v167
        %170 = vst [vmem:[#allocation9] sm:$0xff] %v168
        loop: start=0, step=1, limit=3
        $region52: #{custom-call.11} parent=49 // loop_pre_header
          _
        $region53: #{custom-call.11} parent=49 // loop_header
          %s172 = sphi 0, %s176
          %p173 = scmp.ge.s32.totalorder %s172, 3
        $region54: #{custom-call.11} parent=49 // loop_header_branch
          %175 = sbr.rel (%p173) target = $region58
        $region55: #{custom-call.11} parent=49 // loop_body
          %v177 = vstv %s172
          %v178 = vlaneseq
          %v179 = vshrl.u32 %v178, 7
          %v180 = vmov %v179
          %v181 = vld [vmem:[#allocation2] sm:$0xff]
          %v182 = vand.u32 2147483647, %v181
          %v184 = vstv %s172
          %vm185 = vcmp.ge.s32.totalorder %v180, %v184
          %vm186 = vcmp.lt.s32.totalorder %v180, 3
          %vm187 = vmand %vm185, %vm186
          %vm188 = vcmp.lt.f32.partialorder -inf, %v182
          %vm189 = vmand %vm187, %vm188
          %v190 = vsel %vm189, %v180, %v177
          %v191 = vsel %vm189, %v182, -inf
          %v192 = vrot.slane %v191, 1
          %v193 = vrot.slane %v190, 1
          %vm194 = vcmp.ge.f32.partialorder %v192, %v191
          %v195 = vsel %vm194, %v192, %v191
          %v196 = vsel %vm194, %v193, %v190
          %v197 = vrot.slane %v192, 1
          %v198 = vrot.slane %v193, 1
          %vm199 = vcmp.ge.f32.partialorder %v197, %v195
          %v200 = vsel %vm199, %v197, %v195
          %v201 = vsel %vm199, %v198, %v196
          %v202 = vrot.slane %v197, 1
          %v203 = vrot.slane %v198, 1
          %vm204 = vcmp.ge.f32.partialorder %v202, %v200
          %v205 = vsel %vm204, %v202, %v200
          %v206 = vsel %vm204, %v203, %v201
          %v207 = vrot.slane %v202, 1
          %v208 = vrot.slane %v203, 1
          %vm209 = vcmp.ge.f32.partialorder %v207, %v205
          %v210 = vsel %vm209, %v207, %v205
          %v211 = vsel %vm209, %v208, %v206
          %v212 = vrot.slane %v207, 1
          %v213 = vrot.slane %v208, 1
          %vm214 = vcmp.ge.f32.partialorder %v212, %v210
          %v215 = vsel %vm214, %v212, %v210
          %v216 = vsel %vm214, %v213, %v211
          %v217 = vrot.slane %v212, 1
          %v218 = vrot.slane %v213, 1
          %vm219 = vcmp.ge.f32.partialorder %v217, %v215
          %v220 = vsel %vm219, %v217, %v215
          %v221 = vsel %vm219, %v218, %v216
          %v222 = vrot.slane %v217, 1
          %v223 = vrot.slane %v218, 1
          %vm224 = vcmp.ge.f32.partialorder %v222, %v220
          %v225 = vsel %vm224, %v222, %v220
          %v226 = vsel %vm224, %v223, %v221
          %s227 = ssub.s32 128, %s172
          %228 = vrot.lane.b32.xlu0 %v226, %s227
          %v229 = vpop.permute.xlu0 %228
          %s230 = vtos %v229
          %v231 = vstv %s172
          %v232 = vlaneseq
          %v233 = vand.u32 %v232, 127
          %vm234 = vcmp.eq.s32.totalorder %v233, %v231
          %v235 = vstv %s230
          %v236 = vld [vmem:[%s162] ss:$0 sm:$0xff]
          %v237 = vsel %vm234, %v235, %v236
          %238 = vst [vmem:[%s162] sm:$0x1] %v237
          %s239 = scalar_lea.vmem [#allocation2], %s172
          %s240 = scalar_lea.vmem [#allocation2], %s230
          %v241 = vld [vmem:[%s239] ss:$0 sm:$0xff]
          %v242 = vld [vmem:[%s240] ss:$0 sm:$0xff]
          %243 = vst [vmem:[%s240] sm:$0x1] %v241
          %244 = vst [vmem:[%s239] sm:$0x1] %v242
          %s245 = scalar_lea.vmem [#allocation9], %s172
          %s246 = scalar_lea.vmem [#allocation9], %s230
          %v247 = vld [vmem:[%s245] ss:$0 sm:$0xff]
          %v248 = vld [vmem:[%s246] ss:$0 sm:$0xff]
          %249 = vst [vmem:[%s246] sm:$0x1] %v247
          %250 = vst [vmem:[%s245] sm:$0x1] %v248
          %vm251 = vcmp.ne.f32.partialorder %v242, 0.0
          %vm252 = vmand %vm234, %vm251
          %v253 = vsel %vm252, %v242, 1.0
          %v254 = vlaneseq
          %v255 = vand.u32 %v254, 127
          %v256 = vstv %s172
          %vm257 = vcmp.gt.s32.totalorder %v255, %v256
          %v258 = vsel %vm257, %v242, 0.0
          %v259 = vlaneseq
          %v260 = vshrl.u32 %v259, 7
          %v261 = vmov %v260
          %v262 = vld [vmem:[#allocation2] sm:$0xff]
          %v264 = vstv %s172
          %vm265 = vcmp.gt.s32.totalorder %v261, %v264
          %v266 = vsel %vm265, %v253, 1.0
          %v267 = vrcp.pop %v266
          %v268 = vmul.f32 %v262, %v267
          %vm269 = vmand %vm265, %vm234
          %v270 = vsel %vm269, %v268, 0.0
          %271 = vadd.xlane.f32.xlu0 %v270
          %v272 = vpop.xlane.xlu0 %271
          %v273 = vmul.f32 %v272, %v258
          %v274 = vsub.f32 %v268, %v273
          %275 = vst [vmem:[#allocation2] sm:$0xff] %v274
        $region56: #{custom-call.11} parent=49 // loop_footer
          %s176 = sadd.s32 1, %s172
        $region57: #{custom-call.11} parent=49 // loop_footer_branch
          %171 = sbr.rel target = $region53
        $region58: #{custom-call.11} parent=49 // loop_exit
          _
        %v276 = vld [vmem:[#allocation9] sm:$0xff]
        %s277 = scalar_lea.vmem [#allocation9], 8
        %s278 = scalar_lea.vmem [#allocation9], 16
        %s279 = scalar_lea.vmem [#allocation9], 24
        %s280 = scalar_lea.vmem [#allocation9], 32
        %s281 = scalar_lea.vmem [#allocation9], 40
        %s282 = scalar_lea.vmem [#allocation9], 48
        %s283 = scalar_lea.vmem [#allocation9], 56
        %s284 = scalar_lea.vmem [#allocation9], 64
        %s285 = scalar_lea.vmem [#allocation9], 72
        %s286 = scalar_lea.vmem [#allocation9], 80
        %s287 = scalar_lea.vmem [#allocation9], 88
        %s288 = scalar_lea.vmem [#allocation9], 96
        %s289 = scalar_lea.vmem [#allocation9], 104
        %s290 = scalar_lea.vmem [#allocation9], 112
        %s291 = scalar_lea.vmem [#allocation9], 120
        %292 = vxpose.xlu0.b32.start [1/16] %v276, 128
        %293 = vxpose.xlu0.b32.cont [2/16] 0, 128
        %294 = vxpose.xlu0.b32.cont [3/16] 0, 128
        %295 = vxpose.xlu0.b32.cont [4/16] 0, 128
        %296 = vxpose.xlu0.b32.cont [5/16] 0, 128
        %297 = vxpose.xlu0.b32.cont [6/16] 0, 128
        %298 = vxpose.xlu0.b32.cont [7/16] 0, 128
        %299 = vxpose.xlu0.b32.cont [8/16] 0, 128
        %300 = vxpose.xlu0.b32.cont [9/16] 0, 128
        %301 = vxpose.xlu0.b32.cont [10/16] 0, 128
        %302 = vxpose.xlu0.b32.cont [11/16] 0, 128
        %303 = vxpose.xlu0.b32.cont [12/16] 0, 128
        %304 = vxpose.xlu0.b32.cont [13/16] 0, 128
        %305 = vxpose.xlu0.b32.cont [14/16] 0, 128
        %306 = vxpose.xlu0.b32.cont [15/16] 0, 128
        %307 = vxpose.xlu0.b32.end [16/16] 0, 128
        %v308 = vpop.trf.xlu0
        %v309 = vpop.trf.xlu0
        %v310 = vpop.trf.xlu0
        %v311 = vpop.trf.xlu0
        %v312 = vpop.trf.xlu0
        %v313 = vpop.trf.xlu0
        %v314 = vpop.trf.xlu0
        %v315 = vpop.trf.xlu0
        %v316 = vpop.trf.xlu0
        %v317 = vpop.trf.xlu0
        %v318 = vpop.trf.xlu0
        %v319 = vpop.trf.xlu0
        %v320 = vpop.trf.xlu0
        %v321 = vpop.trf.xlu0
        %v322 = vpop.trf.xlu0
        %v323 = vpop.trf.xlu0
        %324 = vst [vmem:[%s164] sm:$0x1] %v308
        %s326 = sshllo.u32 0, 4
        %v328 = vld [vmem:[#allocation2] sm:%s326]
        %s329 = sshllo.u32 0, 4
        %330 = vst [vmem:[%s139] sm:%s329] %v328
        %s332 = sshllo.u32 0, 2
        %v334 = vld [vmem:[#allocation4] sm:%s332]
        %s335 = sshllo.u32 0, 2
        %336 = vst [vmem:[%s146] sm:%s335] %v334
        %s338 = sshllo.u32 0, 2
        %v340 = vld [vmem:[#allocation7] sm:%s338]
        %s341 = sshllo.u32 0, 2
        %342 = vst [vmem:[%s152] sm:%s341] %v340
        %s343 = sand.u32 %s14, 1
        %s344 = sand.u32 %s14, 1
        %s345 = smul.addr %s344, 4
        %s346 = scalar_lea.vmem [#allocation3], %s345
        %s347 = sand.u32 %s24, 1
        %s348 = scalar_lea.sflag [#allocation6], %s347
        %s349 = sand.u32 %s24, 1
        %s350 = smul.addr %s349, 2
        %s351 = scalar_lea.vmem [#allocation5], %s350
        %s352 = sand.u32 %s52, 1
        %s353 = sand.u32 %s52, 1
        %s354 = smul.addr %s353, 2
        %s355 = scalar_lea.vmem [#allocation8], %s354
        %s356 = smul.addr %s14, 4
        %s357 = scalar_lea.vmem %s1, %s356
        // Predicated region
        $region59: #{custom-call.11} parent=49 // pred_check
          _
        $region60: #{custom-call.11} parent=49 // pred_check_branch
          %359 = sbr.rel (0) target = $region62
        $region61: #{custom-call.11} parent=49 // pred_region
          // Predicated region
          $region63: #{custom-call.11} parent=61 // pred_check
            _
          $region64: #{custom-call.11} parent=61 // pred_check_branch
            %361 = sbr.rel target = $region66
          $region65: #{custom-call.11} parent=61 // pred_region
            // Predicated region
            $region78: #{custom-call.11} parent=65 // pred_check
              _
            $region79: #{custom-call.11} parent=65 // pred_check_branch
              %376 = sbr.rel (0) target = $region81
            $region80: #{custom-call.11} parent=65 // pred_region
              loop: start=0, step=1, limit=1
              $region82: #{custom-call.11} parent=80 // loop_pre_header
                _
              $region83: #{custom-call.11} parent=80 // loop_header
                %s379 = sphi 0, %s383
                %p380 = scmp.ge.s32.totalorder %s379, 1
                %s384 = sphi %s346, %s346
                %s385 = sphi %s357, %s357
              $region84: #{custom-call.11} parent=80 // loop_header_branch
                %382 = sbr.rel (%p380) target = $region88
              $region85: #{custom-call.11} parent=80 // loop_body
                %v386 = vld [vmem:[%s384] sm:$0xf]
                %387 = vst [vmem:[%s385] sm:$0xf] %v386
              $region86: #{custom-call.11} parent=80 // loop_footer
                %s383 = sadd.s32 1, %s379
              $region87: #{custom-call.11} parent=80 // loop_footer_branch
                %378 = sbr.rel target = $region83
              $region88: #{custom-call.11} parent=80 // loop_exit
                _
            $region81: #{custom-call.11} parent=65 // pred_fallthru
              _
          $region66: #{custom-call.11} parent=61 // pred_fallthru
            _
          // Predicated region
          $region67: #{custom-call.11} parent=61 // pred_check
            _
          $region68: #{custom-call.11} parent=61 // pred_check_branch
            %363 = sbr.rel (0) target = $region70
          $region69: #{custom-call.11} parent=61 // pred_region
            loop: start=0, step=1, limit=1
            $region71: #{custom-call.11} parent=69 // loop_pre_header
              _
            $region72: #{custom-call.11} parent=69 // loop_header
              %s366 = sphi 0, %s370
              %p367 = scmp.ge.s32.totalorder %s366, 1
              %s371 = sphi %s346, %s346
              %s372 = sphi %s357, %s357
            $region73: #{custom-call.11} parent=69 // loop_header_branch
              %369 = sbr.rel (%p367) target = $region77
            $region74: #{custom-call.11} parent=69 // loop_body
              %v373 = vld [vmem:[%s371] sm:$0xf]
              %374 = vst [vmem:[%s372] sm:$0xf] %v373
            $region75: #{custom-call.11} parent=69 // loop_footer
              %s370 = sadd.s32 1, %s366
            $region76: #{custom-call.11} parent=69 // loop_footer_branch
              %365 = sbr.rel target = $region72
            $region77: #{custom-call.11} parent=69 // loop_exit
              _
          $region70: #{custom-call.11} parent=61 // pred_fallthru
            _
        $region62: #{custom-call.11} parent=49 // pred_fallthru
          _
        %388 = vnop
        // Predicated region
        $region89: #{custom-call.11} parent=49 // pred_check
          %p389 = pneg %p34
        $region90: #{custom-call.11} parent=49 // pred_check_branch
          %391 = sbr.rel (%p389) target = $region92
        $region91: #{custom-call.11} parent=49 // pred_region
          %s392 = sshrl.u32 %s14, 3
          %s394 = ssub.s32 32, 32
          %395 = vsyncadd %s348, %s394
          %s396 = smul.addr %s392, 32
          %s397 = scalar_lea.hbm %s2, %s396
          %s399 = sshll.u32 %s351, 4
          %s400 = int_to_ptr.vmem [resolvable:$true] %s399
          %402 = dma.vmem_to_hbm [thread:$0]  %s400, 32, %s397, %s348
        $region92: #{custom-call.11} parent=49 // pred_fallthru
          _
        // Predicated region
        $region93: #{custom-call.11} parent=49 // pred_check
          %p403 = pneg %p62
        $region94: #{custom-call.11} parent=49 // pred_check_branch
          %405 = sbr.rel (%p403) target = $region96
        $region95: #{custom-call.11} parent=49 // pred_region
          %s406 = sshrl.u32 %s14, 3
          %s407 = smul.addr %s406, 2
          %s408 = scalar_lea.vmem %s3, %s407
          // Predicated region
          $region97: #{custom-call.11} parent=95 // pred_check
            _
          $region98: #{custom-call.11} parent=95 // pred_check_branch
            %410 = sbr.rel (0) target = $region100
          $region99: #{custom-call.11} parent=95 // pred_region
            // Predicated region
            $region101: #{custom-call.11} parent=99 // pred_check
              _
            $region102: #{custom-call.11} parent=99 // pred_check_branch
              %412 = sbr.rel target = $region104
            $region103: #{custom-call.11} parent=99 // pred_region
              // Predicated region
              $region116: #{custom-call.11} parent=103 // pred_check
                _
              $region117: #{custom-call.11} parent=103 // pred_check_branch
                %427 = sbr.rel (0) target = $region119
              $region118: #{custom-call.11} parent=103 // pred_region
                loop: start=0, step=1, limit=1
                $region120: #{custom-call.11} parent=118 // loop_pre_header
                  _
                $region121: #{custom-call.11} parent=118 // loop_header
                  %s430 = sphi 0, %s434
                  %p431 = scmp.ge.s32.totalorder %s430, 1
                  %s435 = sphi %s355, %s355
                  %s436 = sphi %s408, %s408
                $region122: #{custom-call.11} parent=118 // loop_header_branch
                  %433 = sbr.rel (%p431) target = $region126
                $region123: #{custom-call.11} parent=118 // loop_body
                  %v437 = vld [vmem:[%s435] sm:$0x3]
                  %438 = vst [vmem:[%s436] sm:$0x3] %v437
                $region124: #{custom-call.11} parent=118 // loop_footer
                  %s434 = sadd.s32 1, %s430
                $region125: #{custom-call.11} parent=118 // loop_footer_branch
                  %429 = sbr.rel target = $region121
                $region126: #{custom-call.11} parent=118 // loop_exit
                  _
              $region119: #{custom-call.11} parent=103 // pred_fallthru
                _
            $region104: #{custom-call.11} parent=99 // pred_fallthru
              _
            // Predicated region
            $region105: #{custom-call.11} parent=99 // pred_check
              _
            $region106: #{custom-call.11} parent=99 // pred_check_branch
              %414 = sbr.rel (0) target = $region108
            $region107: #{custom-call.11} parent=99 // pred_region
              loop: start=0, step=1, limit=1
              $region109: #{custom-call.11} parent=107 // loop_pre_header
                _
              $region110: #{custom-call.11} parent=107 // loop_header
                %s417 = sphi 0, %s421
                %p418 = scmp.ge.s32.totalorder %s417, 1
                %s422 = sphi %s355, %s355
                %s423 = sphi %s408, %s408
              $region111: #{custom-call.11} parent=107 // loop_header_branch
                %420 = sbr.rel (%p418) target = $region115
              $region112: #{custom-call.11} parent=107 // loop_body
                %v424 = vld [vmem:[%s422] sm:$0x3]
                %425 = vst [vmem:[%s423] sm:$0x3] %v424
              $region113: #{custom-call.11} parent=107 // loop_footer
                %s421 = sadd.s32 1, %s417
              $region114: #{custom-call.11} parent=107 // loop_footer_branch
                %416 = sbr.rel target = $region110
              $region115: #{custom-call.11} parent=107 // loop_exit
                _
            $region108: #{custom-call.11} parent=99 // pred_fallthru
              _
          $region100: #{custom-call.11} parent=95 // pred_fallthru
            _
          %439 = vnop
        $region96: #{custom-call.11} parent=49 // pred_fallthru
          _
      $region50: #{custom-call.11} parent=5 // pred_fallthru
        _
      %p440 = scmp.le.s32.totalorder 2, %s9
      // Predicated region
      $region127: #{custom-call.11} parent=5 // pred_check
        %p441 = pneg %p440
      $region128: #{custom-call.11} parent=5 // pred_check_branch
        %443 = sbr.rel (%p441) target = $region130
      $region129: #{custom-call.11} parent=5 // pred_region
        %s444 = ssub.s32 %s9, 2
        %s445 = sand.u32 %s15, 1
        %s446 = sand.u32 %s15, 1
        %s447 = smul.addr %s446, 4
        %s448 = scalar_lea.vmem [#allocation3], %s447
        // Predicated region
        $region131: #{custom-call.11} parent=129 // pred_check
          %p449 = pneg %p40
        $region132: #{custom-call.11} parent=129 // pred_check_branch
          %451 = sbr.rel (%p449) target = $region134
        $region133: #{custom-call.11} parent=129 // pred_region
          %s452 = sand.u32 %s25, 1
          %s453 = scalar_lea.sflag [#allocation6], %s452
          %s454 = sand.u32 %s25, 1
          %s455 = smul.addr %s454, 2
          %s456 = scalar_lea.vmem [#allocation5], %s455
          %457 = dma.done %s453, 32
        $region134: #{custom-call.11} parent=129 // pred_fallthru
          _
        // Predicated region
        $region135: #{custom-call.11} parent=129 // pred_check
          %p458 = pneg %p68
        $region136: #{custom-call.11} parent=129 // pred_check_branch
          %460 = sbr.rel (%p458) target = $region138
        $region137: #{custom-call.11} parent=129 // pred_region
          %s461 = sand.u32 %s53, 1
          %s462 = sand.u32 %s53, 1
          %s463 = smul.addr %s462, 2
          %s464 = scalar_lea.vmem [#allocation8], %s463
        $region138: #{custom-call.11} parent=129 // pred_fallthru
          _
      $region130: #{custom-call.11} parent=5 // pred_fallthru
        _
    $region6: #{custom-call.11} parent=1 // loop_footer
      %s13 = sadd.s32 1, %s9
    $region7: #{custom-call.11} parent=1 // loop_footer_branch
      %8 = sbr.rel target = $region3
    $region8: #{custom-call.11} parent=1 // loop_exit
      _
    %465 = vsyncpa [#allocation6], 1
    %s466 = scalar_lea.sflag [#allocation6], 1
    %467 = vsyncpa %s466, 1

// kernel: custom-call.12
$region0: #{custom-call.12}
  %s0 = inlined_call_operand.vmem [shape: f32[2,1,3,3], index: 0, kind: input, shape index: {}]
  %s1 = inlined_call_operand.vmem [shape: f32[2,1,3,3], index: 1, kind: output, shape index: {}]
  $region1: #{custom-call.12} parent=0
    #allocation0 [shape = 'u8[4096]{0}', space=vmem, size = 0x1000, scoped, tag = 'operand span for operand 0']
    #allocation1 [shape = 'u8[4096]{0}', space=vmem, size = 0x1000, scoped, tag = 'packed  for operand 0']
    #allocation2 [shape = 'u8[4096]{0}', space=vmem, size = 0x1000, scoped, tag = 'operand span for operand 1']
    #allocation3 [shape = 'u8[4096]{0}', space=vmem, size = 0x1000, scoped, tag = 'packed  for operand 1']
    loop: start=0, step=1, limit=4
    $region2: #{custom-call.12} parent=1 // loop_pre_header
      _
    $region3: #{custom-call.12} parent=1 // loop_header
      %s3 = sphi 0, %s7
      %p4 = scmp.ge.s32.totalorder %s3, 4
      %s10 = sphi 0, %s36
      %s11 = sphi 0, %s32
      %s12 = sphi 0, %s28
      %s13 = sphi 0, %s24
      %s14 = sphi 0, %s10
      %s15 = sphi 0, %s11
      %s16 = sphi 0, %s12
      %s17 = sphi 0, %s13
      %s18 = sphi 0, %s14
      %s19 = sphi 0, %s15
      %s20 = sphi 0, %s16
      %s21 = sphi 0, %s17
    $region4: #{custom-call.12} parent=1 // loop_header_branch
      %6 = sbr.rel (%p4) target = $region8
    $region5: #{custom-call.12} parent=1 // loop_body
      %s8 = ssub.s32 %s3, 1
      %s9 = ssub.s32 %s3, 2
      %s22 = sadd.s32 1, %s13
      %p23 = scmp.ge.s32.totalorder %s22, 1
      %s24 = scalar_select %p23, 0, %s22
      %s25 = sadd.s32 1, %s12
      %s26 = scalar_select %p23, %s25, %s12
      %p27 = scmp.ge.s32.totalorder %s26, 1
      %s28 = scalar_select %p27, 0, %s26
      %s29 = sadd.s32 1, %s11
      %s30 = scalar_select %p27, %s29, %s11
      %p31 = scmp.ge.s32.totalorder %s30, 1
      %s32 = scalar_select %p31, 0, %s30
      %s33 = sadd.s32 1, %s10
      %s34 = scalar_select %p31, %s33, %s10
      %p35 = scmp.ge.s32.totalorder %s34, 2
      %s36 = scalar_select %p35, 0, %s34
      %p37 = scmp.le.s32.totalorder 1, %s3
      %p38 = scmp.lt.s32.totalorder %s3, 3
      %p39 = pnand %p37, %p38
      %p40 = pneg %p39
      // Predicated region
      $region9: #{custom-call.12} parent=5 // pred_check
        _
      $region10: #{custom-call.12} parent=5 // pred_check_branch
        %42 = sbr.rel (%p39) target = $region12
      $region11: #{custom-call.12} parent=5 // pred_region
        %s43 = ssub.s32 %s3, 1
      $region12: #{custom-call.12} parent=5 // pred_fallthru
        _
      %p44 = scmp.lt.s32.totalorder %s3, 2
      // Predicated region
      $region13: #{custom-call.12} parent=5 // pred_check
        %p45 = pneg %p44
      $region14: #{custom-call.12} parent=5 // pred_check_branch
        %47 = sbr.rel (%p45) target = $region16
      $region15: #{custom-call.12} parent=5 // pred_region
        %s48 = sand.u32 %s3, 1
        %s49 = sand.u32 %s3, 1
        %s50 = smul.addr %s49, 4
        %s51 = scalar_lea.vmem [#allocation1], %s50
        %s52 = sadd.s32 %s13, %s12
        %s53 = sadd.s32 %s52, %s11
        %s54 = sadd.s32 %s53, %s10
        %s55 = smul.addr %s54, 4
        %s56 = scalar_lea.vmem %s0, %s55
        // Predicated region
        $region17: #{custom-call.12} parent=15 // pred_check
          _
        $region18: #{custom-call.12} parent=15 // pred_check_branch
          %58 = sbr.rel (0) target = $region20
        $region19: #{custom-call.12} parent=15 // pred_region
          // Predicated region
          $region21: #{custom-call.12} parent=19 // pred_check
            _
          $region22: #{custom-call.12} parent=19 // pred_check_branch
            %60 = sbr.rel target = $region24
          $region23: #{custom-call.12} parent=19 // pred_region
            // Predicated region
            $region36: #{custom-call.12} parent=23 // pred_check
              _
            $region37: #{custom-call.12} parent=23 // pred_check_branch
              %75 = sbr.rel (0) target = $region39
            $region38: #{custom-call.12} parent=23 // pred_region
              loop: start=0, step=1, limit=1
              $region40: #{custom-call.12} parent=38 // loop_pre_header
                _
              $region41: #{custom-call.12} parent=38 // loop_header
                %s78 = sphi 0, %s82
                %p79 = scmp.ge.s32.totalorder %s78, 1
                %s83 = sphi %s56, %s56
                %s84 = sphi %s51, %s51
              $region42: #{custom-call.12} parent=38 // loop_header_branch
                %81 = sbr.rel (%p79) target = $region46
              $region43: #{custom-call.12} parent=38 // loop_body
                %v85 = vld [vmem:[%s83] sm:$0xf]
                %86 = vst [vmem:[%s84] sm:$0xf] %v85
              $region44: #{custom-call.12} parent=38 // loop_footer
                %s82 = sadd.s32 1, %s78
              $region45: #{custom-call.12} parent=38 // loop_footer_branch
                %77 = sbr.rel target = $region41
              $region46: #{custom-call.12} parent=38 // loop_exit
                _
            $region39: #{custom-call.12} parent=23 // pred_fallthru
              _
          $region24: #{custom-call.12} parent=19 // pred_fallthru
            _
          // Predicated region
          $region25: #{custom-call.12} parent=19 // pred_check
            _
          $region26: #{custom-call.12} parent=19 // pred_check_branch
            %62 = sbr.rel (0) target = $region28
          $region27: #{custom-call.12} parent=19 // pred_region
            loop: start=0, step=1, limit=1
            $region29: #{custom-call.12} parent=27 // loop_pre_header
              _
            $region30: #{custom-call.12} parent=27 // loop_header
              %s65 = sphi 0, %s69
              %p66 = scmp.ge.s32.totalorder %s65, 1
              %s70 = sphi %s56, %s56
              %s71 = sphi %s51, %s51
            $region31: #{custom-call.12} parent=27 // loop_header_branch
              %68 = sbr.rel (%p66) target = $region35
            $region32: #{custom-call.12} parent=27 // loop_body
              %v72 = vld [vmem:[%s70] sm:$0xf]
              %73 = vst [vmem:[%s71] sm:$0xf] %v72
            $region33: #{custom-call.12} parent=27 // loop_footer
              %s69 = sadd.s32 1, %s65
            $region34: #{custom-call.12} parent=27 // loop_footer_branch
              %64 = sbr.rel target = $region30
            $region35: #{custom-call.12} parent=27 // loop_exit
              _
          $region28: #{custom-call.12} parent=19 // pred_fallthru
            _
        $region20: #{custom-call.12} parent=15 // pred_fallthru
          _
        %87 = vnop
      $region16: #{custom-call.12} parent=5 // pred_fallthru
        _
      %p88 = scmp.le.s32.totalorder 1, %s3
      %p89 = scmp.lt.s32.totalorder %s3, 3
      %p90 = pnand %p88, %p89
      %p91 = pneg %p90
      // Predicated region
      $region47: #{custom-call.12} parent=5 // pred_check
        _
      $region48: #{custom-call.12} parent=5 // pred_check_branch
        %93 = sbr.rel (%p90) target = $region50
      $region49: #{custom-call.12} parent=5 // pred_region
        #allocation4 [shape = 'f32[3,3]{1,0}', space=vmem, size = 0x1000, scoped, tag = 'rescaled input a']
        %s94 = ssub.s32 %s3, 1
        %s95 = sand.u32 %s8, 1
        %s96 = sand.u32 %s8, 1
        %s97 = smul.addr %s96, 4
        %s98 = scalar_lea.vmem [#allocation1], %s97
        %s99 = sand.u32 %s8, 1
        %s100 = sand.u32 %s8, 1
        %s101 = smul.addr %s100, 4
        %s102 = scalar_lea.vmem [#allocation1], %s101
        %s103 = sand.u32 %s8, 1
        %s104 = sand.u32 %s8, 1
        %s105 = smul.addr %s104, 4
        %s106 = scalar_lea.vmem [#allocation3], %s105
        %s108 = sshllo.u32 0, 4
        %v109 = vld [vmem:[%s102] sm:%s108]
        %110 = vst [vmem:[#allocation0] sm:%s108] %v109
        %v111 = vlaneseq
        %v112 = vand.u32 %v111, 127
        %vm113 = vcmp.lt.s32.totalorder %v112, 3
        %v114 = vlaneseq
        %v115 = vshrl.u32 %v114, 7
        %vm117 = vcmp.eq.s32.totalorder %v115, %v112
        %v118 = vld [vmem:[#allocation0] sm:$0xff]
        %v119 = vsel %vm117, %v118, 0.0
        %120 = vadd.xlane.f32.xlu0 %v119
        %v121 = vpop.xlane.xlu0 %120
        %vm122 = vcmp.le.s32.totalorder %v115, %v112
        %vm123 = vmand %vm122, %vm113
        %v124 = vsel %vm123, %v118, 0.0
        %v125 = vrcp.pop %v121
        %v126 = vmul.f32 %v124, %v125
        %127 = vst [vmem:[#allocation4] sm:$0xff] %v126
        %v128 = vlaneseq
        %v129 = vand.u32 %v128, 127
        %v130 = vlaneseq
        %v131 = vshrl.u32 %v130, 7
        %vm133 = vcmp.eq.s32.totalorder %v129, %v131
        %v134 = vlaneseq
        %v135 = vand.u32 %v134, 127
        %vm136 = vcmp.eq.s32.totalorder %v135, 2
        %v137 = vsel %vm136, 1.0, -1.0
        %v138 = vsel %vm133, %v137, 0.0
        %s139 = scalar_lea.vmem [#allocation4], 1
        %v140 = vld [vmem:[%s139] ss:$0 sm:$0xff]
        %v141 = vxor.u32 %v140, 2147483648
        %v142 = vlaneseq
        %v143 = vand.u32 %v142, 127
        %vm144 = vcmp.eq.s32.totalorder %v143, 1
        %v145 = vmul.f32 %v141, %v138
        %146 = vadd.xlane.f32.xlu0 %v145
        %v147 = vpop.xlane.xlu0 %146
        %v148 = vsel %vm144, %v147, %v138
        %v149 = vld [vmem:[#allocation4] ss:$0 sm:$0xff]
        %v150 = vxor.u32 %v149, 2147483648
        %v151 = vlaneseq
        %v152 = vand.u32 %v151, 127
        %vm153 = vcmp.eq.s32.totalorder %v152, 0
        %v154 = vmul.f32 %v150, %v148
        %155 = vadd.xlane.f32.xlu0 %v154
        %v156 = vpop.xlane.xlu0 %155
        %v157 = vsel %vm153, %v156, %v148
        %v158 = vrcp.pop %v121
        %v159 = vmul.f32 %v157, %v158
        %vm160 = vweird.f32 %v121
        %v161 = vsel %vm160, %v157, %v159
        %162 = vst [vmem:[#allocation2] sm:$0xff] %v161
        %s164 = sshllo.u32 0, 4
        %v166 = vld [vmem:[#allocation2] sm:%s164]
        %s167 = sshllo.u32 0, 4
        %168 = vst [vmem:[%s106] sm:%s167] %v166
        %s169 = sand.u32 %s8, 1
        %s170 = sand.u32 %s8, 1
        %s171 = smul.addr %s170, 4
        %s172 = scalar_lea.vmem [#allocation3], %s171
        %s173 = sadd.s32 %s17, %s16
        %s174 = sadd.s32 %s173, %s15
        %s175 = sadd.s32 %s174, %s14
        %s176 = smul.addr %s175, 4
        %s177 = scalar_lea.vmem %s1, %s176
        // Predicated region
        $region51: #{custom-call.12} parent=49 // pred_check
          _
        $region52: #{custom-call.12} parent=49 // pred_check_branch
          %179 = sbr.rel (0) target = $region54
        $region53: #{custom-call.12} parent=49 // pred_region
          // Predicated region
          $region55: #{custom-call.12} parent=53 // pred_check
            _
          $region56: #{custom-call.12} parent=53 // pred_check_branch
            %181 = sbr.rel target = $region58
          $region57: #{custom-call.12} parent=53 // pred_region
            // Predicated region
            $region70: #{custom-call.12} parent=57 // pred_check
              _
            $region71: #{custom-call.12} parent=57 // pred_check_branch
              %196 = sbr.rel (0) target = $region73
            $region72: #{custom-call.12} parent=57 // pred_region
              loop: start=0, step=1, limit=1
              $region74: #{custom-call.12} parent=72 // loop_pre_header
                _
              $region75: #{custom-call.12} parent=72 // loop_header
                %s199 = sphi 0, %s203
                %p200 = scmp.ge.s32.totalorder %s199, 1
                %s204 = sphi %s172, %s172
                %s205 = sphi %s177, %s177
              $region76: #{custom-call.12} parent=72 // loop_header_branch
                %202 = sbr.rel (%p200) target = $region80
              $region77: #{custom-call.12} parent=72 // loop_body
                %v206 = vld [vmem:[%s204] sm:$0xf]
                %207 = vst [vmem:[%s205] sm:$0xf] %v206
              $region78: #{custom-call.12} parent=72 // loop_footer
                %s203 = sadd.s32 1, %s199
              $region79: #{custom-call.12} parent=72 // loop_footer_branch
                %198 = sbr.rel target = $region75
              $region80: #{custom-call.12} parent=72 // loop_exit
                _
            $region73: #{custom-call.12} parent=57 // pred_fallthru
              _
          $region58: #{custom-call.12} parent=53 // pred_fallthru
            _
          // Predicated region
          $region59: #{custom-call.12} parent=53 // pred_check
            _
          $region60: #{custom-call.12} parent=53 // pred_check_branch
            %183 = sbr.rel (0) target = $region62
          $region61: #{custom-call.12} parent=53 // pred_region
            loop: start=0, step=1, limit=1
            $region63: #{custom-call.12} parent=61 // loop_pre_header
              _
            $region64: #{custom-call.12} parent=61 // loop_header
              %s186 = sphi 0, %s190
              %p187 = scmp.ge.s32.totalorder %s186, 1
              %s191 = sphi %s172, %s172
              %s192 = sphi %s177, %s177
            $region65: #{custom-call.12} parent=61 // loop_header_branch
              %189 = sbr.rel (%p187) target = $region69
            $region66: #{custom-call.12} parent=61 // loop_body
              %v193 = vld [vmem:[%s191] sm:$0xf]
              %194 = vst [vmem:[%s192] sm:$0xf] %v193
            $region67: #{custom-call.12} parent=61 // loop_footer
              %s190 = sadd.s32 1, %s186
            $region68: #{custom-call.12} parent=61 // loop_footer_branch
              %185 = sbr.rel target = $region64
            $region69: #{custom-call.12} parent=61 // loop_exit
              _
          $region62: #{custom-call.12} parent=53 // pred_fallthru
            _
        $region54: #{custom-call.12} parent=49 // pred_fallthru
          _
        %208 = vnop
      $region50: #{custom-call.12} parent=5 // pred_fallthru
        _
      %p209 = scmp.le.s32.totalorder 2, %s3
      // Predicated region
      $region81: #{custom-call.12} parent=5 // pred_check
        %p210 = pneg %p209
      $region82: #{custom-call.12} parent=5 // pred_check_branch
        %212 = sbr.rel (%p210) target = $region84
      $region83: #{custom-call.12} parent=5 // pred_region
        %s213 = ssub.s32 %s3, 2
        %s214 = sand.u32 %s9, 1
        %s215 = sand.u32 %s9, 1
        %s216 = smul.addr %s215, 4
        %s217 = scalar_lea.vmem [#allocation3], %s216
      $region84: #{custom-call.12} parent=5 // pred_fallthru
        _
    $region6: #{custom-call.12} parent=1 // loop_footer
      %s7 = sadd.s32 1, %s3
    $region7: #{custom-call.12} parent=1 // loop_footer_branch
      %2 = sbr.rel target = $region3
    $region8: #{custom-call.12} parent=1 // loop_exit
      _

// kernel: custom-call.13
$region0: #{custom-call.13}
  %s0 = inlined_call_operand.vmem [shape: f32[2,1,3,3], index: 0, kind: input, shape index: {}]
  %s1 = inlined_call_operand.vmem [shape: f32[2,1,3,3], index: 1, kind: output, shape index: {}]
  $region1: #{custom-call.13} parent=0
    #allocation0 [shape = 'u8[4096]{0}', space=vmem, size = 0x1000, scoped, tag = 'operand span for operand 0']
    #allocation1 [shape = 'u8[4096]{0}', space=vmem, size = 0x1000, scoped, tag = 'packed  for operand 0']
    #allocation2 [shape = 'u8[4096]{0}', space=vmem, size = 0x1000, scoped, tag = 'operand span for operand 1']
    #allocation3 [shape = 'u8[4096]{0}', space=vmem, size = 0x1000, scoped, tag = 'packed  for operand 1']
    loop: start=0, step=1, limit=4
    $region2: #{custom-call.13} parent=1 // loop_pre_header
      _
    $region3: #{custom-call.13} parent=1 // loop_header
      %s3 = sphi 0, %s7
      %p4 = scmp.ge.s32.totalorder %s3, 4
      %s10 = sphi 0, %s36
      %s11 = sphi 0, %s32
      %s12 = sphi 0, %s28
      %s13 = sphi 0, %s24
      %s14 = sphi 0, %s10
      %s15 = sphi 0, %s11
      %s16 = sphi 0, %s12
      %s17 = sphi 0, %s13
      %s18 = sphi 0, %s14
      %s19 = sphi 0, %s15
      %s20 = sphi 0, %s16
      %s21 = sphi 0, %s17
    $region4: #{custom-call.13} parent=1 // loop_header_branch
      %6 = sbr.rel (%p4) target = $region8
    $region5: #{custom-call.13} parent=1 // loop_body
      %s8 = ssub.s32 %s3, 1
      %s9 = ssub.s32 %s3, 2
      %s22 = sadd.s32 1, %s13
      %p23 = scmp.ge.s32.totalorder %s22, 1
      %s24 = scalar_select %p23, 0, %s22
      %s25 = sadd.s32 1, %s12
      %s26 = scalar_select %p23, %s25, %s12
      %p27 = scmp.ge.s32.totalorder %s26, 1
      %s28 = scalar_select %p27, 0, %s26
      %s29 = sadd.s32 1, %s11
      %s30 = scalar_select %p27, %s29, %s11
      %p31 = scmp.ge.s32.totalorder %s30, 1
      %s32 = scalar_select %p31, 0, %s30
      %s33 = sadd.s32 1, %s10
      %s34 = scalar_select %p31, %s33, %s10
      %p35 = scmp.ge.s32.totalorder %s34, 2
      %s36 = scalar_select %p35, 0, %s34
      %p37 = scmp.le.s32.totalorder 1, %s3
      %p38 = scmp.lt.s32.totalorder %s3, 3
      %p39 = pnand %p37, %p38
      %p40 = pneg %p39
      // Predicated region
      $region9: #{custom-call.13} parent=5 // pred_check
        _
      $region10: #{custom-call.13} parent=5 // pred_check_branch
        %42 = sbr.rel (%p39) target = $region12
      $region11: #{custom-call.13} parent=5 // pred_region
        %s43 = ssub.s32 %s3, 1
      $region12: #{custom-call.13} parent=5 // pred_fallthru
        _
      %p44 = scmp.lt.s32.totalorder %s3, 2
      // Predicated region
      $region13: #{custom-call.13} parent=5 // pred_check
        %p45 = pneg %p44
      $region14: #{custom-call.13} parent=5 // pred_check_branch
        %47 = sbr.rel (%p45) target = $region16
      $region15: #{custom-call.13} parent=5 // pred_region
        %s48 = sand.u32 %s3, 1
        %s49 = sand.u32 %s3, 1
        %s50 = smul.addr %s49, 4
        %s51 = scalar_lea.vmem [#allocation1], %s50
        %s52 = sadd.s32 %s13, %s12
        %s53 = sadd.s32 %s52, %s11
        %s54 = sadd.s32 %s53, %s10
        %s55 = smul.addr %s54, 4
        %s56 = scalar_lea.vmem %s0, %s55
        // Predicated region
        $region17: #{custom-call.13} parent=15 // pred_check
          _
        $region18: #{custom-call.13} parent=15 // pred_check_branch
          %58 = sbr.rel (0) target = $region20
        $region19: #{custom-call.13} parent=15 // pred_region
          // Predicated region
          $region21: #{custom-call.13} parent=19 // pred_check
            _
          $region22: #{custom-call.13} parent=19 // pred_check_branch
            %60 = sbr.rel target = $region24
          $region23: #{custom-call.13} parent=19 // pred_region
            // Predicated region
            $region36: #{custom-call.13} parent=23 // pred_check
              _
            $region37: #{custom-call.13} parent=23 // pred_check_branch
              %75 = sbr.rel (0) target = $region39
            $region38: #{custom-call.13} parent=23 // pred_region
              loop: start=0, step=1, limit=1
              $region40: #{custom-call.13} parent=38 // loop_pre_header
                _
              $region41: #{custom-call.13} parent=38 // loop_header
                %s78 = sphi 0, %s82
                %p79 = scmp.ge.s32.totalorder %s78, 1
                %s83 = sphi %s56, %s56
                %s84 = sphi %s51, %s51
              $region42: #{custom-call.13} parent=38 // loop_header_branch
                %81 = sbr.rel (%p79) target = $region46
              $region43: #{custom-call.13} parent=38 // loop_body
                %v85 = vld [vmem:[%s83] sm:$0xf]
                %86 = vst [vmem:[%s84] sm:$0xf] %v85
              $region44: #{custom-call.13} parent=38 // loop_footer
                %s82 = sadd.s32 1, %s78
              $region45: #{custom-call.13} parent=38 // loop_footer_branch
                %77 = sbr.rel target = $region41
              $region46: #{custom-call.13} parent=38 // loop_exit
                _
            $region39: #{custom-call.13} parent=23 // pred_fallthru
              _
          $region24: #{custom-call.13} parent=19 // pred_fallthru
            _
          // Predicated region
          $region25: #{custom-call.13} parent=19 // pred_check
            _
          $region26: #{custom-call.13} parent=19 // pred_check_branch
            %62 = sbr.rel (0) target = $region28
          $region27: #{custom-call.13} parent=19 // pred_region
            loop: start=0, step=1, limit=1
            $region29: #{custom-call.13} parent=27 // loop_pre_header
              _
            $region30: #{custom-call.13} parent=27 // loop_header
              %s65 = sphi 0, %s69
              %p66 = scmp.ge.s32.totalorder %s65, 1
              %s70 = sphi %s56, %s56
              %s71 = sphi %s51, %s51
            $region31: #{custom-call.13} parent=27 // loop_header_branch
              %68 = sbr.rel (%p66) target = $region35
            $region32: #{custom-call.13} parent=27 // loop_body
              %v72 = vld [vmem:[%s70] sm:$0xf]
              %73 = vst [vmem:[%s71] sm:$0xf] %v72
            $region33: #{custom-call.13} parent=27 // loop_footer
              %s69 = sadd.s32 1, %s65
            $region34: #{custom-call.13} parent=27 // loop_footer_branch
              %64 = sbr.rel target = $region30
            $region35: #{custom-call.13} parent=27 // loop_exit
              _
          $region28: #{custom-call.13} parent=19 // pred_fallthru
            _
        $region20: #{custom-call.13} parent=15 // pred_fallthru
          _
        %87 = vnop
      $region16: #{custom-call.13} parent=5 // pred_fallthru
        _
      %p88 = scmp.le.s32.totalorder 1, %s3
      %p89 = scmp.lt.s32.totalorder %s3, 3
      %p90 = pnand %p88, %p89
      %p91 = pneg %p90
      // Predicated region
      $region47: #{custom-call.13} parent=5 // pred_check
        _
      $region48: #{custom-call.13} parent=5 // pred_check_branch
        %93 = sbr.rel (%p90) target = $region50
      $region49: #{custom-call.13} parent=5 // pred_region
        #allocation4 [shape = 'f32[3,3]{1,0}', space=vmem, size = 0x1000, scoped, tag = 'rescaled input a']
        %s94 = ssub.s32 %s3, 1
        %s95 = sand.u32 %s8, 1
        %s96 = sand.u32 %s8, 1
        %s97 = smul.addr %s96, 4
        %s98 = scalar_lea.vmem [#allocation1], %s97
        %s99 = sand.u32 %s8, 1
        %s100 = sand.u32 %s8, 1
        %s101 = smul.addr %s100, 4
        %s102 = scalar_lea.vmem [#allocation1], %s101
        %s103 = sand.u32 %s8, 1
        %s104 = sand.u32 %s8, 1
        %s105 = smul.addr %s104, 4
        %s106 = scalar_lea.vmem [#allocation3], %s105
        %s108 = sshllo.u32 0, 4
        %v109 = vld [vmem:[%s102] sm:%s108]
        %110 = vst [vmem:[#allocation0] sm:%s108] %v109
        %v111 = vlaneseq
        %v112 = vand.u32 %v111, 127
        %vm113 = vcmp.lt.s32.totalorder %v112, 3
        %v114 = vlaneseq
        %v115 = vshrl.u32 %v114, 7
        %vm117 = vcmp.eq.s32.totalorder %v115, %v112
        %v118 = vld [vmem:[#allocation0] sm:$0xff]
        %v119 = vsel %vm117, %v118, 0.0
        %120 = vadd.xlane.f32.xlu0 %v119
        %v121 = vpop.xlane.xlu0 %120
        %vm122 = vcmp.ge.s32.totalorder %v115, %v112
        %vm123 = vmand %vm122, %vm113
        %v124 = vsel %vm123, %v118, 0.0
        %v125 = vrcp.pop %v121
        %v126 = vmul.f32 %v124, %v125
        %127 = vst [vmem:[#allocation4] sm:$0xff] %v126
        %v128 = vlaneseq
        %v129 = vand.u32 %v128, 127
        %v130 = vlaneseq
        %v131 = vshrl.u32 %v130, 7
        %vm133 = vcmp.eq.s32.totalorder %v129, %v131
        %v134 = vlaneseq
        %v135 = vand.u32 %v134, 127
        %vm136 = vcmp.eq.s32.totalorder %v135, 0
        %v137 = vsel %vm136, 1.0, -1.0
        %v138 = vsel %vm133, %v137, 0.0
        %s139 = scalar_lea.vmem [#allocation4], 1
        %v140 = vld [vmem:[%s139] ss:$0 sm:$0xff]
        %v141 = vxor.u32 %v140, 2147483648
        %v142 = vlaneseq
        %v143 = vand.u32 %v142, 127
        %vm144 = vcmp.eq.s32.totalorder %v143, 1
        %v145 = vmul.f32 %v141, %v138
        %146 = vadd.xlane.f32.xlu0 %v145
        %v147 = vpop.xlane.xlu0 %146
        %v148 = vsel %vm144, %v147, %v138
        %s149 = scalar_lea.vmem [#allocation4], 2
        %v150 = vld [vmem:[%s149] ss:$0 sm:$0xff]
        %v151 = vxor.u32 %v150, 2147483648
        %v152 = vlaneseq
        %v153 = vand.u32 %v152, 127
        %vm154 = vcmp.eq.s32.totalorder %v153, 2
        %v155 = vmul.f32 %v151, %v148
        %156 = vadd.xlane.f32.xlu0 %v155
        %v157 = vpop.xlane.xlu0 %156
        %v158 = vsel %vm154, %v157, %v148
        %v159 = vrcp.pop %v121
        %v160 = vmul.f32 %v158, %v159
        %vm161 = vweird.f32 %v121
        %v162 = vsel %vm161, %v158, %v160
        %163 = vst [vmem:[#allocation2] sm:$0xff] %v162
        %s165 = sshllo.u32 0, 4
        %v167 = vld [vmem:[#allocation2] sm:%s165]
        %s168 = sshllo.u32 0, 4
        %169 = vst [vmem:[%s106] sm:%s168] %v167
        %s170 = sand.u32 %s8, 1
        %s171 = sand.u32 %s8, 1
        %s172 = smul.addr %s171, 4
        %s173 = scalar_lea.vmem [#allocation3], %s172
        %s174 = sadd.s32 %s17, %s16
        %s175 = sadd.s32 %s174, %s15
        %s176 = sadd.s32 %s175, %s14
        %s177 = smul.addr %s176, 4
        %s178 = scalar_lea.vmem %s1, %s177
        // Predicated region
        $region51: #{custom-call.13} parent=49 // pred_check
          _
        $region52: #{custom-call.13} parent=49 // pred_check_branch
          %180 = sbr.rel (0) target = $region54
        $region53: #{custom-call.13} parent=49 // pred_region
          // Predicated region
          $region55: #{custom-call.13} parent=53 // pred_check
            _
          $region56: #{custom-call.13} parent=53 // pred_check_branch
            %182 = sbr.rel target = $region58
          $region57: #{custom-call.13} parent=53 // pred_region
            // Predicated region
            $region70: #{custom-call.13} parent=57 // pred_check
              _
            $region71: #{custom-call.13} parent=57 // pred_check_branch
              %197 = sbr.rel (0) target = $region73
            $region72: #{custom-call.13} parent=57 // pred_region
              loop: start=0, step=1, limit=1
              $region74: #{custom-call.13} parent=72 // loop_pre_header
                _
              $region75: #{custom-call.13} parent=72 // loop_header
                %s200 = sphi 0, %s204
                %p201 = scmp.ge.s32.totalorder %s200, 1
                %s205 = sphi %s173, %s173
                %s206 = sphi %s178, %s178
              $region76: #{custom-call.13} parent=72 // loop_header_branch
                %203 = sbr.rel (%p201) target = $region80
              $region77: #{custom-call.13} parent=72 // loop_body
                %v207 = vld [vmem:[%s205] sm:$0xf]
                %208 = vst [vmem:[%s206] sm:$0xf] %v207
              $region78: #{custom-call.13} parent=72 // loop_footer
                %s204 = sadd.s32 1, %s200
              $region79: #{custom-call.13} parent=72 // loop_footer_branch
                %199 = sbr.rel target = $region75
              $region80: #{custom-call.13} parent=72 // loop_exit
                _
            $region73: #{custom-call.13} parent=57 // pred_fallthru
              _
          $region58: #{custom-call.13} parent=53 // pred_fallthru
            _
          // Predicated region
          $region59: #{custom-call.13} parent=53 // pred_check
            _
          $region60: #{custom-call.13} parent=53 // pred_check_branch
            %184 = sbr.rel (0) target = $region62
          $region61: #{custom-call.13} parent=53 // pred_region
            loop: start=0, step=1, limit=1
            $region63: #{custom-call.13} parent=61 // loop_pre_header
              _
            $region64: #{custom-call.13} parent=61 // loop_header
              %s187 = sphi 0, %s191
              %p188 = scmp.ge.s32.totalorder %s187, 1
              %s192 = sphi %s173, %s173
              %s193 = sphi %s178, %s178
            $region65: #{custom-call.13} parent=61 // loop_header_branch
              %190 = sbr.rel (%p188) target = $region69
            $region66: #{custom-call.13} parent=61 // loop_body
              %v194 = vld [vmem:[%s192] sm:$0xf]
              %195 = vst [vmem:[%s193] sm:$0xf] %v194
            $region67: #{custom-call.13} parent=61 // loop_footer
              %s191 = sadd.s32 1, %s187
            $region68: #{custom-call.13} parent=61 // loop_footer_branch
              %186 = sbr.rel target = $region64
            $region69: #{custom-call.13} parent=61 // loop_exit
              _
          $region62: #{custom-call.13} parent=53 // pred_fallthru
            _
        $region54: #{custom-call.13} parent=49 // pred_fallthru
          _
        %209 = vnop
      $region50: #{custom-call.13} parent=5 // pred_fallthru
        _
      %p210 = scmp.le.s32.totalorder 2, %s3
      // Predicated region
      $region81: #{custom-call.13} parent=5 // pred_check
        %p211 = pneg %p210
      $region82: #{custom-call.13} parent=5 // pred_check_branch
        %213 = sbr.rel (%p211) target = $region84
      $region83: #{custom-call.13} parent=5 // pred_region
        %s214 = ssub.s32 %s3, 2
        %s215 = sand.u32 %s9, 1
        %s216 = sand.u32 %s9, 1
        %s217 = smul.addr %s216, 4
        %s218 = scalar_lea.vmem [#allocation3], %s217
      $region84: #{custom-call.13} parent=5 // pred_fallthru
        _
    $region6: #{custom-call.13} parent=1 // loop_footer
      %s7 = sadd.s32 1, %s3
    $region7: #{custom-call.13} parent=1 // loop_footer_branch
      %2 = sbr.rel target = $region3
    $region8: #{custom-call.13} parent=1 // loop_exit
      _

// kernel: tile.18
$region0: #{tile.18}
  #allocation0 [shape = 's32[1]{0}', space=sflag, size = 0x4, scoped, tag = 'scoped memory for tile.18']
  %s0 = inlined_call_operand.vmem [shape: f32[16], index: 0, kind: input, shape index: {}]
  %s1 = inlined_call_operand.vmem [shape: f32[16,16], index: 1, kind: output, shape index: {}]
  // Predicated region
  $region2: #{tile.18} parent=0 // pred_check
    _
  $region3: #{tile.18} parent=0 // pred_check_branch
    %3 = sbr.rel (0) target = $region5
  $region4: #{tile.18} parent=0 // pred_region
    _
  $region5: #{tile.18} parent=0 // pred_fallthru
    _
  %v4 = vld [vmem:[%s0] ss:$0 sm:$0xff]
  %5 = vst [vmem:[%s1] sm:$0xff] %v4
  %s6 = scalar_lea.vmem %s1, 8
  %7 = vst [vmem:[%s6] sm:$0xff] %v4

// kernel: div.38
$region0: #{div.38}
  %s0 = inlined_call_operand.vmem [shape: f32[2,4], index: 0, kind: input, shape index: {}]
  %s1 = inlined_call_operand.vmem [shape: f32[8], index: 1, kind: output, shape index: {}]
  $region1: #{div.38} parent=0
    #allocation0 [shape = 'u8[4096]{0}', space=vmem, size = 0x1000, scoped, tag = 'scoped mem for output reshape']
    #allocation1 [shape = 'u8[4096]{0}', space=vmem, size = 0x1000, scoped, tag = 'scoped mem for input reshape']
    %s3 = sshllo.u32 0, 2
    %v4 = vld [vmem:[%s0] sm:%s3]
    %5 = vst [vmem:[#allocation1] sm:%s3] %v4
    %v6 = vld [vmem:[#allocation1] sm:$0x1]
    %vm7 = vcmask 31744
    %8 = vst.msk [vmem:[#allocation0] sm:$0x1] %vm7, %v6
    %s9 = scalar_lea.vmem [#allocation1], 1
    %v10 = vld [vmem:[%s9] sm:$0x1]
    %11 = vrot.lane.b32.xlu0 %v10, 4
    %v12 = vpop.permute.xlu0 %11
    %vm13 = vcmask 64544
    %14 = vst.msk [vmem:[#allocation0] sm:$0x1] %vm13, %v12
    %s16 = sshllo.u32 0, 1
    %v18 = vld [vmem:[#allocation0] sm:%s16]
    %s19 = sshllo.u32 0, 1
    %20 = vst [vmem:[%s1] sm:%s19] %v18

// kernel: novel_view_homography.1
$region0: #{novel_view_homography.1}
  #allocation0 [shape = 'u32[]', space=smem, size = 0x4, offset = 0x4, fixed_abs, tag = 'smem constant byte address 0x4 - core index']
  #allocation1 [shape = 'u32[144,128]{1,0:T(1,128)}', space=vmem, size = 0x12000, scoped, tag = 'internal scratch']
  #allocation2 [shape = 'f32[48,16]{1,0:T(8,128)}', space=vmem, size = 0x6000, scoped, tag = 'scratch operand']
  %s0 = inlined_call_operand.vmem [shape: f32[48], index: 0, kind: input, shape index: {}]
  %s1 = inlined_call_operand.vmem [shape: f32[2,256], index: 1, kind: input, shape index: {}]
  %s2 = inlined_call_operand.vmem [shape: bf16[128,16], index: 2, kind: input, shape index: {}]
  %s3 = inlined_call_operand.vmem [shape: bf16[2,3,128,128], index: 3, kind: input, shape index: {}]
  %s4 = inlined_call_operand.vmem [shape: f32[2,4,256], index: 4, kind: input, shape index: {}]
  %s5 = inlined_call_operand.vmem [shape: f32[2,3,256], index: 5, kind: output, shape index: {}]
  %s6 = sld [smem:[#allocation0]]
  $region102: #{novel_view_homography.1} parent=0
    _
  %s8 = ssub.s32 1, %s6
  %s9 = scalar_select 0, %s8, %s6
  $region1: #{novel_view_homography.1} parent=0
    #allocation3 [shape = 'u8[512]{0}', space=smem, size = 0x200, scoped, tag = 'input window, operand 0, single buffered']
    #allocation4 [shape = 's32[2]{0}', space=sflag, size = 0x8, scoped, tag = 'scoped memory for novel_view_homography.1']
    #allocation5 [shape = 'u8[98304]{0}', space=vmem, size = 0x18000, scoped, tag = 'input window, operand 3']
    %10 = vsyncpa [#allocation4], 0
    loop: start=0, step=1, limit=6
    $region2: #{novel_view_homography.1} parent=1 // loop_pre_header
      _
    $region3: #{novel_view_homography.1} parent=1 // loop_header
      %s12 = sphi 0, %s16
      %p13 = scmp.ge.s32.totalorder %s12, 6
      %s19 = sphi 0, %s31
      %s20 = sphi 0, %s27
      %s21 = sphi 0, %s19
      %s22 = sphi 0, %s20
      %s23 = sphi 0, %s21
      %s24 = sphi 0, %s22
      %s32 = sphi 0, %s32
      %s34 = sphi 0, %s32
      %s35 = sphi 0, %s34
      %s49 = sphi 0, %s35
      %s53 = sphi 0, %s53
      %s55 = sphi 0, %s53
      %s56 = sphi 0, %s55
      %s70 = sphi 0, %s56
      %s74 = sphi 0, %s74
      %s76 = sphi 0, %s74
      %s77 = sphi 0, %s76
      %s91 = sphi 0, %s77
      %s99 = sphi 0, %s101
      %s102 = sphi 0, %s99
      %s103 = sphi 0, %s102
      %s119 = sphi 0, %s103
      %s125 = sphi 0, %s127
      %s128 = sphi 0, %s125
      %s129 = sphi 0, %s128
      %s145 = sphi 0, %s129
      %s151 = sphi 0, %s153
      %s154 = sphi 0, %s151
      %s155 = sphi 0, %s154
      %s171 = sphi 0, %s155
    $region4: #{novel_view_homography.1} parent=1 // loop_header_branch
      %15 = sbr.rel (%p13) target = $region8
    $region5: #{novel_view_homography.1} parent=1 // loop_body
      %s17 = ssub.s32 %s12, 1
      %s18 = ssub.s32 %s12, 2
      %s25 = sadd.s32 1, %s20
      %p26 = scmp.ge.s32.totalorder %s25, 2
      %s27 = scalar_select %p26, 0, %s25
      %s28 = sadd.s32 1, %s19
      %s29 = scalar_select %p26, %s28, %s19
      %p30 = scmp.ge.s32.totalorder %s29, 2
      %s31 = scalar_select %p30, 0, %s29
      %s33 = sadd.s32 %s32, 1
      %p36 = scmp.eq.s32.totalorder %s12, 3
      %p37 = scmp.ne.s32.totalorder %s32, %s34
      %p38 = scmp.eq.s32.totalorder %s12, 0
      %p39 = por %p37, %p38
      %p40 = scmp.ne.s32.totalorder %s32, %s34
      %p41 = scmp.eq.s32.totalorder %s17, 3
      %p42 = por %p40, %p41
      %p43 = scmp.ne.s32.totalorder %s34, %s35
      %p44 = scmp.eq.s32.totalorder %s17, 0
      %p45 = por %p43, %p44
      %p46 = scmp.ne.s32.totalorder %s34, %s35
      %p47 = scmp.eq.s32.totalorder %s18, 3
      %p48 = por %p46, %p47
      %p50 = scmp.ne.s32.totalorder %s35, %s49
      %p51 = scmp.eq.s32.totalorder %s18, 0
      %p52 = por %p50, %p51
      %s54 = sadd.s32 %s53, 1
      %p57 = scmp.eq.s32.totalorder %s12, 3
      %p58 = scmp.ne.s32.totalorder %s53, %s55
      %p59 = scmp.eq.s32.totalorder %s12, 0
      %p60 = por %p58, %p59
      %p61 = scmp.ne.s32.totalorder %s53, %s55
      %p62 = scmp.eq.s32.totalorder %s17, 3
      %p63 = por %p61, %p62
      %p64 = scmp.ne.s32.totalorder %s55, %s56
      %p65 = scmp.eq.s32.totalorder %s17, 0
      %p66 = por %p64, %p65
      %p67 = scmp.ne.s32.totalorder %s55, %s56
      %p68 = scmp.eq.s32.totalorder %s18, 3
      %p69 = por %p67, %p68
      %p71 = scmp.ne.s32.totalorder %s56, %s70
      %p72 = scmp.eq.s32.totalorder %s18, 0
      %p73 = por %p71, %p72
      %s75 = sadd.s32 %s74, 1
      %p78 = scmp.eq.s32.totalorder %s12, 3
      %p79 = scmp.ne.s32.totalorder %s74, %s76
      %p80 = scmp.eq.s32.totalorder %s12, 0
      %p81 = por %p79, %p80
      %p82 = scmp.ne.s32.totalorder %s74, %s76
      %p83 = scmp.eq.s32.totalorder %s17, 3
      %p84 = por %p82, %p83
      %p85 = scmp.ne.s32.totalorder %s76, %s77
      %p86 = scmp.eq.s32.totalorder %s17, 0
      %p87 = por %p85, %p86
      %p88 = scmp.ne.s32.totalorder %s76, %s77
      %p89 = scmp.eq.s32.totalorder %s18, 3
      %p90 = por %p88, %p89
      %p92 = scmp.ne.s32.totalorder %s77, %s91
      %p93 = scmp.eq.s32.totalorder %s18, 0
      %p94 = por %p92, %p93
      %s95 = ssub.s32 %s19, %s31
      %s96 = ssub.s32 %s20, %s27
      %s97 = sor.u32 %s95, %s96
      %p98 = scmp.eq.s32.totalorder %s97, 0
      %s100 = sadd.s32 %s99, 1
      %s101 = scalar_select %p98, %s99, %s100
      %p104 = pneg %p98
      %p105 = scmp.eq.s32.totalorder %s12, 3
      %p106 = por %p104, %p105
      %p107 = scmp.ne.s32.totalorder %s99, %s102
      %p108 = scmp.eq.s32.totalorder %s12, 0
      %p109 = por %p107, %p108
      %p110 = scmp.ne.s32.totalorder %s99, %s102
      %p111 = scmp.eq.s32.totalorder %s17, 3
      %p112 = por %p110, %p111
      %p113 = scmp.ne.s32.totalorder %s102, %s103
      %p114 = scmp.eq.s32.totalorder %s17, 0
      %p115 = por %p113, %p114
      %p116 = scmp.ne.s32.totalorder %s102, %s103
      %p117 = scmp.eq.s32.totalorder %s18, 3
      %p118 = por %p116, %p117
      %p120 = scmp.ne.s32.totalorder %s103, %s119
      %p121 = scmp.eq.s32.totalorder %s18, 0
      %p122 = por %p120, %p121
      %s123 = ssub.s32 %s19, %s31
      %p124 = scmp.eq.s32.totalorder %s123, 0
      %s126 = sadd.s32 %s125, 1
      %s127 = scalar_select %p124, %s125, %s126
      %p130 = pneg %p124
      %p131 = scmp.eq.s32.totalorder %s12, 3
      %p132 = por %p130, %p131
      %p133 = scmp.ne.s32.totalorder %s125, %s128
      %p134 = scmp.eq.s32.totalorder %s12, 0
      %p135 = por %p133, %p134
      %p136 = scmp.ne.s32.totalorder %s125, %s128
      %p137 = scmp.eq.s32.totalorder %s17, 3
      %p138 = por %p136, %p137
      %p139 = scmp.ne.s32.totalorder %s128, %s129
      %p140 = scmp.eq.s32.totalorder %s17, 0
      %p141 = por %p139, %p140
      %p142 = scmp.ne.s32.totalorder %s128, %s129
      %p143 = scmp.eq.s32.totalorder %s18, 3
      %p144 = por %p142, %p143
      %p146 = scmp.ne.s32.totalorder %s129, %s145
      %p147 = scmp.eq.s32.totalorder %s18, 0
      %p148 = por %p146, %p147
      %s149 = ssub.s32 %s19, %s31
      %p150 = scmp.eq.s32.totalorder %s149, 0
      %s152 = sadd.s32 %s151, 1
      %s153 = scalar_select %p150, %s151, %s152
      %p156 = pneg %p150
      %p157 = scmp.eq.s32.totalorder %s12, 3
      %p158 = por %p156, %p157
      %p159 = scmp.ne.s32.totalorder %s151, %s154
      %p160 = scmp.eq.s32.totalorder %s12, 0
      %p161 = por %p159, %p160
      %p162 = scmp.ne.s32.totalorder %s151, %s154
      %p163 = scmp.eq.s32.totalorder %s17, 3
      %p164 = por %p162, %p163
      %p165 = scmp.ne.s32.totalorder %s154, %s155
      %p166 = scmp.eq.s32.totalorder %s17, 0
      %p167 = por %p165, %p166
      %p168 = scmp.ne.s32.totalorder %s154, %s155
      %p169 = scmp.eq.s32.totalorder %s18, 3
      %p170 = por %p168, %p169
      %p172 = scmp.ne.s32.totalorder %s155, %s171
      %p173 = scmp.eq.s32.totalorder %s18, 0
      %p174 = por %p172, %p173
      %p175 = scmp.le.s32.totalorder 1, %s12
      %p176 = scmp.lt.s32.totalorder %s12, 5
      %p177 = pnand %p175, %p176
      %p178 = pneg %p177
      // Predicated region
      $region9: #{novel_view_homography.1} parent=5 // pred_check
        _
      $region10: #{novel_view_homography.1} parent=5 // pred_check_branch
        %180 = sbr.rel (%p177) target = $region12
      $region11: #{novel_view_homography.1} parent=5 // pred_region
        %s181 = ssub.s32 %s12, 1
        // Predicated region
        $region13: #{novel_view_homography.1} parent=11 // pred_check
          %p182 = pneg %p45
        $region14: #{novel_view_homography.1} parent=11 // pred_check_branch
          %184 = sbr.rel (%p182) target = $region16
        $region15: #{novel_view_homography.1} parent=11 // pred_region
          %s186 = ssub.s32 16, 16
          %187 = vsyncadd [#allocation4], %s186
          %s189 = sshll.u32 %s0, 4
          %s190 = int_to_ptr.vmem [resolvable:$true] %s189
          %192 = dma.vmem_to_smem %s190, 16, [#allocation3], [#allocation4]
        $region16: #{novel_view_homography.1} parent=11 // pred_fallthru
          _
        // Predicated region
        $region17: #{novel_view_homography.1} parent=11 // pred_check
          %p193 = pneg %p66
        $region18: #{novel_view_homography.1} parent=11 // pred_check_branch
          %195 = sbr.rel (%p193) target = $region20
        $region19: #{novel_view_homography.1} parent=11 // pred_region
          _
        $region20: #{novel_view_homography.1} parent=11 // pred_fallthru
          _
        // Predicated region
        $region21: #{novel_view_homography.1} parent=11 // pred_check
          %p196 = pneg %p87
        $region22: #{novel_view_homography.1} parent=11 // pred_check_branch
          %198 = sbr.rel (%p196) target = $region24
        $region23: #{novel_view_homography.1} parent=11 // pred_region
          _
        $region24: #{novel_view_homography.1} parent=11 // pred_fallthru
          _
      $region12: #{novel_view_homography.1} parent=5 // pred_fallthru
        _
      %p199 = scmp.lt.s32.totalorder %s12, 4
      // Predicated region
      $region25: #{novel_view_homography.1} parent=5 // pred_check
        %p200 = pneg %p199
      $region26: #{novel_view_homography.1} parent=5 // pred_check_branch
        %202 = sbr.rel (%p200) target = $region28
      $region27: #{novel_view_homography.1} parent=5 // pred_region
        // Predicated region
        $region29: #{novel_view_homography.1} parent=27 // pred_check
          %p203 = pneg %p109
        $region30: #{novel_view_homography.1} parent=27 // pred_check_branch
          %205 = sbr.rel (%p203) target = $region32
        $region31: #{novel_view_homography.1} parent=27 // pred_region
          %s206 = sand.u32 %s99, 1
          %s207 = sand.u32 %s99, 1
          %s208 = smul.addr %s207, 96
          %s209 = scalar_lea.vmem [#allocation5], %s208
          %s210 = smul.u32 8, %s20
          %s211 = smul.addr %s19, 48
          %s212 = sadd.s32 %s210, %s211
          %s213 = smul.addr %s212, 4
          %s214 = scalar_lea.vmem %s3, %s213
          // Predicated region
          $region33: #{novel_view_homography.1} parent=31 // pred_check
            _
          $region34: #{novel_view_homography.1} parent=31 // pred_check_branch
            %216 = sbr.rel (0) target = $region36
          $region35: #{novel_view_homography.1} parent=31 // pred_region
            // Predicated region
            $region37: #{novel_view_homography.1} parent=35 // pred_check
              _
            $region38: #{novel_view_homography.1} parent=35 // pred_check_branch
              %218 = sbr.rel target = $region40
            $region39: #{novel_view_homography.1} parent=35 // pred_region
              // Predicated region
              $region52: #{novel_view_homography.1} parent=39 // pred_check
                _
              $region53: #{novel_view_homography.1} parent=39 // pred_check_branch
                %279 = sbr.rel (0) target = $region55
              $region54: #{novel_view_homography.1} parent=39 // pred_region
                loop: start=0, step=1, limit=1
                $region56: #{novel_view_homography.1} parent=54 // loop_pre_header
                  _
                $region57: #{novel_view_homography.1} parent=54 // loop_header
                  %s281 = sphi 0, %s285
                  %p282 = scmp.ge.s32.totalorder %s281, 1
                  %s286 = sphi %s214, %s214
                  %s287 = sphi %s209, %s209
                $region58: #{novel_view_homography.1} parent=54 // loop_header_branch
                  %284 = sbr.rel (%p282) target = $region62
                $region59: #{novel_view_homography.1} parent=54 // loop_body
                  _
                $region60: #{novel_view_homography.1} parent=54 // loop_footer
                  %s285 = sadd.s32 1, %s281
                $region61: #{novel_view_homography.1} parent=54 // loop_footer_branch
                  %280 = sbr.rel target = $region57
                $region62: #{novel_view_homography.1} parent=54 // loop_exit
                  _
                loop: start=0, step=1, limit=1
                $region63: #{novel_view_homography.1} parent=54 // loop_pre_header
                  _
                $region64: #{novel_view_homography.1} parent=54 // loop_header
                  %s290 = sphi 0, %s294
                  %p291 = scmp.ge.s32.totalorder %s290, 1
                  %s295 = sphi %s214, %s214
                  %s296 = sphi %s209, %s209
                $region65: #{novel_view_homography.1} parent=54 // loop_header_branch
                  %293 = sbr.rel (%p291) target = $region69
                $region66: #{novel_view_homography.1} parent=54 // loop_body
                  %v297 = vld [vmem:[%s295] sm:$0xf]
                  %298 = vst [vmem:[%s296] sm:$0xf] %v297
                  %v299 = vld [vmem:[%s295 + $0x4] sm:$0xf]
                  %300 = vst [vmem:[%s296 + $0x4] sm:$0xf] %v299
                  %v301 = vld [vmem:[%s295 + $0x8] sm:$0xf]
                  %302 = vst [vmem:[%s296 + $0x8] sm:$0xf] %v301
                  %v303 = vld [vmem:[%s295 + $0xc] sm:$0xf]
                  %304 = vst [vmem:[%s296 + $0xc] sm:$0xf] %v303
                  %v305 = vld [vmem:[%s295 + $0x10] sm:$0xf]
                  %306 = vst [vmem:[%s296 + $0x10] sm:$0xf] %v305
                  %v307 = vld [vmem:[%s295 + $0x14] sm:$0xf]
                  %308 = vst [vmem:[%s296 + $0x14] sm:$0xf] %v307
                  %v309 = vld [vmem:[%s295 + $0x18] sm:$0xf]
                  %310 = vst [vmem:[%s296 + $0x18] sm:$0xf] %v309
                  %v311 = vld [vmem:[%s295 + $0x1c] sm:$0xf]
                  %312 = vst [vmem:[%s296 + $0x1c] sm:$0xf] %v311
                  %v313 = vld [vmem:[%s295 + $0x40] sm:$0xf]
                  %314 = vst [vmem:[%s296 + $0x20] sm:$0xf] %v313
                  %v315 = vld [vmem:[%s295 + $0x44] sm:$0xf]
                  %316 = vst [vmem:[%s296 + $0x24] sm:$0xf] %v315
                  %v317 = vld [vmem:[%s295 + $0x48] sm:$0xf]
                  %318 = vst [vmem:[%s296 + $0x28] sm:$0xf] %v317
                  %v319 = vld [vmem:[%s295 + $0x4c] sm:$0xf]
                  %320 = vst [vmem:[%s296 + $0x2c] sm:$0xf] %v319
                  %v321 = vld [vmem:[%s295 + $0x50] sm:$0xf]
                  %322 = vst [vmem:[%s296 + $0x30] sm:$0xf] %v321
                  %v323 = vld [vmem:[%s295 + $0x54] sm:$0xf]
                  %324 = vst [vmem:[%s296 + $0x34] sm:$0xf] %v323
                  %v325 = vld [vmem:[%s295 + $0x58] sm:$0xf]
                  %326 = vst [vmem:[%s296 + $0x38] sm:$0xf] %v325
                  %v327 = vld [vmem:[%s295 + $0x5c] sm:$0xf]
                  %328 = vst [vmem:[%s296 + $0x3c] sm:$0xf] %v327
                  %v329 = vld [vmem:[%s295 + $0x80] sm:$0xf]
                  %330 = vst [vmem:[%s296 + $0x40] sm:$0xf] %v329
                  %v331 = vld [vmem:[%s295 + $0x84] sm:$0xf]
                  %332 = vst [vmem:[%s296 + $0x44] sm:$0xf] %v331
                  %v333 = vld [vmem:[%s295 + $0x88] sm:$0xf]
                  %334 = vst [vmem:[%s296 + $0x48] sm:$0xf] %v333
                  %v335 = vld [vmem:[%s295 + $0x8c] sm:$0xf]
                  %336 = vst [vmem:[%s296 + $0x4c] sm:$0xf] %v335
                  %v337 = vld [vmem:[%s295 + $0x90] sm:$0xf]
                  %338 = vst [vmem:[%s296 + $0x50] sm:$0xf] %v337
                  %v339 = vld [vmem:[%s295 + $0x94] sm:$0xf]
                  %340 = vst [vmem:[%s296 + $0x54] sm:$0xf] %v339
                  %v341 = vld [vmem:[%s295 + $0x98] sm:$0xf]
                  %342 = vst [vmem:[%s296 + $0x58] sm:$0xf] %v341
                  %v343 = vld [vmem:[%s295 + $0x9c] sm:$0xf]
                  %344 = vst [vmem:[%s296 + $0x5c] sm:$0xf] %v343
                $region67: #{novel_view_homography.1} parent=54 // loop_footer
                  %s294 = sadd.s32 1, %s290
                $region68: #{novel_view_homography.1} parent=54 // loop_footer_branch
                  %289 = sbr.rel target = $region64
                $region69: #{novel_view_homography.1} parent=54 // loop_exit
                  _
              $region55: #{novel_view_homography.1} parent=39 // pred_fallthru
                _
            $region40: #{novel_view_homography.1} parent=35 // pred_fallthru
              _
            // Predicated region
            $region41: #{novel_view_homography.1} parent=35 // pred_check
              _
            $region42: #{novel_view_homography.1} parent=35 // pred_check_branch
              %220 = sbr.rel (0) target = $region44
            $region43: #{novel_view_homography.1} parent=35 // pred_region
              loop: start=0, step=1, limit=1
              $region45: #{novel_view_homography.1} parent=43 // loop_pre_header
                _
              $region46: #{novel_view_homography.1} parent=43 // loop_header
                %s223 = sphi 0, %s227
                %p224 = scmp.ge.s32.totalorder %s223, 1
                %s228 = sphi %s214, %s214
                %s229 = sphi %s209, %s209
              $region47: #{novel_view_homography.1} parent=43 // loop_header_branch
                %226 = sbr.rel (%p224) target = $region51
              $region48: #{novel_view_homography.1} parent=43 // loop_body
                %v230 = vld [vmem:[%s228] sm:$0xf]
                %231 = vst [vmem:[%s229] sm:$0xf] %v230
                %v232 = vld [vmem:[%s228 + $0x4] sm:$0xf]
                %233 = vst [vmem:[%s229 + $0x4] sm:$0xf] %v232
                %v234 = vld [vmem:[%s228 + $0x8] sm:$0xf]
                %235 = vst [vmem:[%s229 + $0x8] sm:$0xf] %v234
                %v236 = vld [vmem:[%s228 + $0xc] sm:$0xf]
                %237 = vst [vmem:[%s229 + $0xc] sm:$0xf] %v236
                %v238 = vld [vmem:[%s228 + $0x10] sm:$0xf]
                %239 = vst [vmem:[%s229 + $0x10] sm:$0xf] %v238
                %v240 = vld [vmem:[%s228 + $0x14] sm:$0xf]
                %241 = vst [vmem:[%s229 + $0x14] sm:$0xf] %v240
                %v242 = vld [vmem:[%s228 + $0x18] sm:$0xf]
                %243 = vst [vmem:[%s229 + $0x18] sm:$0xf] %v242
                %v244 = vld [vmem:[%s228 + $0x1c] sm:$0xf]
                %245 = vst [vmem:[%s229 + $0x1c] sm:$0xf] %v244
                %v246 = vld [vmem:[%s228 + $0x40] sm:$0xf]
                %247 = vst [vmem:[%s229 + $0x20] sm:$0xf] %v246
                %v248 = vld [vmem:[%s228 + $0x44] sm:$0xf]
                %249 = vst [vmem:[%s229 + $0x24] sm:$0xf] %v248
                %v250 = vld [vmem:[%s228 + $0x48] sm:$0xf]
                %251 = vst [vmem:[%s229 + $0x28] sm:$0xf] %v250
                %v252 = vld [vmem:[%s228 + $0x4c] sm:$0xf]
                %253 = vst [vmem:[%s229 + $0x2c] sm:$0xf] %v252
                %v254 = vld [vmem:[%s228 + $0x50] sm:$0xf]
                %255 = vst [vmem:[%s229 + $0x30] sm:$0xf] %v254
                %v256 = vld [vmem:[%s228 + $0x54] sm:$0xf]
                %257 = vst [vmem:[%s229 + $0x34] sm:$0xf] %v256
                %v258 = vld [vmem:[%s228 + $0x58] sm:$0xf]
                %259 = vst [vmem:[%s229 + $0x38] sm:$0xf] %v258
                %v260 = vld [vmem:[%s228 + $0x5c] sm:$0xf]
                %261 = vst [vmem:[%s229 + $0x3c] sm:$0xf] %v260
                %v262 = vld [vmem:[%s228 + $0x80] sm:$0xf]
                %263 = vst [vmem:[%s229 + $0x40] sm:$0xf] %v262
                %v264 = vld [vmem:[%s228 + $0x84] sm:$0xf]
                %265 = vst [vmem:[%s229 + $0x44] sm:$0xf] %v264
                %v266 = vld [vmem:[%s228 + $0x88] sm:$0xf]
                %267 = vst [vmem:[%s229 + $0x48] sm:$0xf] %v266
                %v268 = vld [vmem:[%s228 + $0x8c] sm:$0xf]
                %269 = vst [vmem:[%s229 + $0x4c] sm:$0xf] %v268
                %v270 = vld [vmem:[%s228 + $0x90] sm:$0xf]
                %271 = vst [vmem:[%s229 + $0x50] sm:$0xf] %v270
                %v272 = vld [vmem:[%s228 + $0x94] sm:$0xf]
                %273 = vst [vmem:[%s229 + $0x54] sm:$0xf] %v272
                %v274 = vld [vmem:[%s228 + $0x98] sm:$0xf]
                %275 = vst [vmem:[%s229 + $0x58] sm:$0xf] %v274
                %v276 = vld [vmem:[%s228 + $0x9c] sm:$0xf]
                %277 = vst [vmem:[%s229 + $0x5c] sm:$0xf] %v276
              $region49: #{novel_view_homography.1} parent=43 // loop_footer
                %s227 = sadd.s32 1, %s223
              $region50: #{novel_view_homography.1} parent=43 // loop_footer_branch
                %222 = sbr.rel target = $region46
              $region51: #{novel_view_homography.1} parent=43 // loop_exit
                _
            $region44: #{novel_view_homography.1} parent=35 // pred_fallthru
              _
          $region36: #{novel_view_homography.1} parent=31 // pred_fallthru
            _
          %345 = vnop
        $region32: #{novel_view_homography.1} parent=27 // pred_fallthru
          _
        // Predicated region
        $region70: #{novel_view_homography.1} parent=27 // pred_check
          %p346 = pneg %p135
        $region71: #{novel_view_homography.1} parent=27 // pred_check_branch
          %348 = sbr.rel (%p346) target = $region73
        $region72: #{novel_view_homography.1} parent=27 // pred_region
          %p349 = scmp.lt.s32.totalorder %s19, 1
          %s350 = scalar_select %p349, %s19, 1
          %s351 = smul.addr %s350, 2
          %s352 = smul.addr %s351, 4
          %s353 = scalar_lea.vmem %s4, %s352
        $region73: #{novel_view_homography.1} parent=27 // pred_fallthru
          _
      $region28: #{novel_view_homography.1} parent=5 // pred_fallthru
        _
      %p354 = scmp.le.s32.totalorder 1, %s12
      %p355 = scmp.lt.s32.totalorder %s12, 5
      %p356 = pnand %p354, %p355
      %p357 = pneg %p356
      // Predicated region
      $region74: #{novel_view_homography.1} parent=5 // pred_check
        _
      $region75: #{novel_view_homography.1} parent=5 // pred_check_branch
        %359 = sbr.rel (%p356) target = $region77
      $region76: #{novel_view_homography.1} parent=5 // pred_region
        %s360 = ssub.s32 %s12, 1
        // Predicated region
        $region78: #{novel_view_homography.1} parent=76 // pred_check
          %p361 = pneg %p45
        $region79: #{novel_view_homography.1} parent=76 // pred_check_branch
          %363 = sbr.rel (%p361) target = $region81
        $region80: #{novel_view_homography.1} parent=76 // pred_region
          %364 = dma.done [#allocation4], 16
        $region81: #{novel_view_homography.1} parent=76 // pred_fallthru
          _
        %s365 = sand.u32 %s102, 1
        %s366 = sand.u32 %s102, 1
        %s367 = smul.addr %s366, 96
        %s368 = scalar_lea.vmem [#allocation5], %s367
        // Predicated region
        $region82: #{novel_view_homography.1} parent=76 // pred_check
          %p369 = pneg %p115
        $region83: #{novel_view_homography.1} parent=76 // pred_check_branch
          %371 = sbr.rel (%p369) target = $region85
        $region84: #{novel_view_homography.1} parent=76 // pred_region
          _
        $region85: #{novel_view_homography.1} parent=76 // pred_fallthru
          _
        %372 = sfence
        %p373 = pneg %p45
        %p374 = pneg %p42
        %p375 = pneg %p66
        %p376 = pneg %p63
        %p377 = pneg %p87
        %p378 = pneg %p84
        %s379 = sand.u32 %s102, 1
        %s380 = sand.u32 %s102, 1
        %s381 = smul.addr %s380, 96
        %s382 = scalar_lea.vmem [#allocation5], %s381
        %p383 = pneg %p115
        %p384 = pneg %p112
        %p385 = scmp.lt.s32.totalorder %s21, 1
        %s386 = scalar_select %p385, %s21, 1
        %s387 = smul.addr %s386, 2
        %s388 = smul.addr %s387, 4
        %s389 = scalar_lea.vmem %s4, %s388
        %p390 = pneg %p141
        %p391 = pneg %p138
        %p392 = pneg %p167
        %p393 = pneg %p164
        %p394 = scmp.lt.s32.totalorder %s21, 1
        %s395 = scalar_select %p394, %s21, 1
        %s396 = smul.addr %s395, 2
        %s397 = smul.addr %s396, 4
        %s398 = scalar_lea.vmem %s5, %s397
        %s399 = smul.u32 8, %s22
        %p400 = scmp.lt.s32.totalorder %s21, 1
        %s401 = scalar_select %p400, %s21, 1
        %s402 = smul.addr %s401, 2
        %s403 = smul.addr %s402, 4
        %s404 = scalar_lea.vmem %s4, %s403
        %p405 = scmp.lt.s32.totalorder %s21, 1
        %s406 = scalar_select %p405, %s21, 1
        %s407 = smul.addr %s406, 2
        %s408 = smul.addr %s407, 4
        %s409 = scalar_lea.vmem %s5, %s408
        %v411 = vld [vmem:[%s368] sm:$0xf]
        %v412 = vld [vmem:[%s368 + $0x4] sm:$0xf]
        %v413 = vld [vmem:[%s368 + $0x8] sm:$0xf]
        %v414 = vld [vmem:[%s368 + $0xc] sm:$0xf]
        %v415 = vld [vmem:[%s368 + $0x10] sm:$0xf]
        %v416 = vld [vmem:[%s368 + $0x14] sm:$0xf]
        %v417 = vld [vmem:[%s368 + $0x18] sm:$0xf]
        %v418 = vld [vmem:[%s368 + $0x1c] sm:$0xf]
        %v419 = vld [vmem:[%s368 + $0x20] sm:$0xf]
        %v420 = vld [vmem:[%s368 + $0x24] sm:$0xf]
        %v421 = vld [vmem:[%s368 + $0x28] sm:$0xf]
        %v422 = vld [vmem:[%s368 + $0x2c] sm:$0xf]
        %v423 = vld [vmem:[%s368 + $0x30] sm:$0xf]
        %v424 = vld [vmem:[%s368 + $0x34] sm:$0xf]
        %v425 = vld [vmem:[%s368 + $0x38] sm:$0xf]
        %v426 = vld [vmem:[%s368 + $0x3c] sm:$0xf]
        %v427 = vld [vmem:[%s368 + $0x40] sm:$0xf]
        %v428 = vld [vmem:[%s368 + $0x44] sm:$0xf]
        %v429 = vld [vmem:[%s368 + $0x48] sm:$0xf]
        %v430 = vld [vmem:[%s368 + $0x4c] sm:$0xf]
        %v431 = vld [vmem:[%s368 + $0x50] sm:$0xf]
        %v432 = vld [vmem:[%s368 + $0x54] sm:$0xf]
        %v433 = vld [vmem:[%s368 + $0x58] sm:$0xf]
        %v434 = vld [vmem:[%s368 + $0x5c] sm:$0xf]
        %v435 = vunpack.c.l.bf16 %v411
        %v436 = vunpack.c.l.bf16 %v412
        %v437 = vunpack.c.l.bf16 %v413
        %v438 = vunpack.c.l.bf16 %v414
        %v439 = vunpack.c.l.bf16 %v415
        %v440 = vunpack.c.l.bf16 %v416
        %v441 = vunpack.c.l.bf16 %v417
        %v442 = vunpack.c.l.bf16 %v418
        %v443 = vunpack.c.l.bf16 %v419
        %v444 = vunpack.c.l.bf16 %v420
        %v445 = vunpack.c.l.bf16 %v421
        %v446 = vunpack.c.l.bf16 %v422
        %v447 = vunpack.c.l.bf16 %v423
        %v448 = vunpack.c.l.bf16 %v424
        %v449 = vunpack.c.l.bf16 %v425
        %v450 = vunpack.c.l.bf16 %v426
        %v451 = vunpack.c.l.bf16 %v427
        %v452 = vunpack.c.l.bf16 %v428
        %v453 = vunpack.c.l.bf16 %v429
        %v454 = vunpack.c.l.bf16 %v430
        %v455 = vunpack.c.l.bf16 %v431
        %v456 = vunpack.c.l.bf16 %v432
        %v457 = vunpack.c.l.bf16 %v433
        %v458 = vunpack.c.l.bf16 %v434
        %v459 = vrot.slane %v435, 4
        %v460 = vadd.f32 %v435, %v459
        %v461 = vrot.slane %v460, 2
        %v462 = vadd.f32 %v460, %v461
        %v463 = vrot.slane %v462, 1
        %v464 = vadd.f32 %v462, %v463
        %v465 = vrot.slane %v436, 4
        %v466 = vadd.f32 %v436, %v465
        %v467 = vrot.slane %v466, 2
        %v468 = vadd.f32 %v466, %v467
        %v469 = vrot.slane %v468, 1
        %v470 = vadd.f32 %v468, %v469
        %v471 = vrot.slane %v437, 4
        %v472 = vadd.f32 %v437, %v471
        %v473 = vrot.slane %v472, 2
        %v474 = vadd.f32 %v472, %v473
        %v475 = vrot.slane %v474, 1
        %v476 = vadd.f32 %v474, %v475
        %v477 = vrot.slane %v438, 4
        %v478 = vadd.f32 %v438, %v477
        %v479 = vrot.slane %v478, 2
        %v480 = vadd.f32 %v478, %v479
        %v481 = vrot.slane %v480, 1
        %v482 = vadd.f32 %v480, %v481
        %v483 = vrot.slane %v439, 4
        %v484 = vadd.f32 %v439, %v483
        %v485 = vrot.slane %v484, 2
        %v486 = vadd.f32 %v484, %v485
        %v487 = vrot.slane %v486, 1
        %v488 = vadd.f32 %v486, %v487
        %v489 = vrot.slane %v440, 4
        %v490 = vadd.f32 %v440, %v489
        %v491 = vrot.slane %v490, 2
        %v492 = vadd.f32 %v490, %v491
        %v493 = vrot.slane %v492, 1
        %v494 = vadd.f32 %v492, %v493
        %v495 = vrot.slane %v441, 4
        %v496 = vadd.f32 %v441, %v495
        %v497 = vrot.slane %v496, 2
        %v498 = vadd.f32 %v496, %v497
        %v499 = vrot.slane %v498, 1
        %v500 = vadd.f32 %v498, %v499
        %v501 = vrot.slane %v442, 4
        %v502 = vadd.f32 %v442, %v501
        %v503 = vrot.slane %v502, 2
        %v504 = vadd.f32 %v502, %v503
        %v505 = vrot.slane %v504, 1
        %v506 = vadd.f32 %v504, %v505
        %v507 = vrot.slane %v443, 4
        %v508 = vadd.f32 %v443, %v507
        %v509 = vrot.slane %v508, 2
        %v510 = vadd.f32 %v508, %v509
        %v511 = vrot.slane %v510, 1
        %v512 = vadd.f32 %v510, %v511
        %v513 = vrot.slane %v444, 4
        %v514 = vadd.f32 %v444, %v513
        %v515 = vrot.slane %v514, 2
        %v516 = vadd.f32 %v514, %v515
        %v517 = vrot.slane %v516, 1
        %v518 = vadd.f32 %v516, %v517
        %v519 = vrot.slane %v445, 4
        %v520 = vadd.f32 %v445, %v519
        %v521 = vrot.slane %v520, 2
        %v522 = vadd.f32 %v520, %v521
        %v523 = vrot.slane %v522, 1
        %v524 = vadd.f32 %v522, %v523
        %v525 = vrot.slane %v446, 4
        %v526 = vadd.f32 %v446, %v525
        %v527 = vrot.slane %v526, 2
        %v528 = vadd.f32 %v526, %v527
        %v529 = vrot.slane %v528, 1
        %v530 = vadd.f32 %v528, %v529
        %v531 = vrot.slane %v447, 4
        %v532 = vadd.f32 %v447, %v531
        %v533 = vrot.slane %v532, 2
        %v534 = vadd.f32 %v532, %v533
        %v535 = vrot.slane %v534, 1
        %v536 = vadd.f32 %v534, %v535
        %v537 = vrot.slane %v448, 4
        %v538 = vadd.f32 %v448, %v537
        %v539 = vrot.slane %v538, 2
        %v540 = vadd.f32 %v538, %v539
        %v541 = vrot.slane %v540, 1
        %v542 = vadd.f32 %v540, %v541
        %v543 = vrot.slane %v449, 4
        %v544 = vadd.f32 %v449, %v543
        %v545 = vrot.slane %v544, 2
        %v546 = vadd.f32 %v544, %v545
        %v547 = vrot.slane %v546, 1
        %v548 = vadd.f32 %v546, %v547
        %v549 = vrot.slane %v450, 4
        %v550 = vadd.f32 %v450, %v549
        %v551 = vrot.slane %v550, 2
        %v552 = vadd.f32 %v550, %v551
        %v553 = vrot.slane %v552, 1
        %v554 = vadd.f32 %v552, %v553
        %v555 = vrot.slane %v451, 4
        %v556 = vadd.f32 %v451, %v555
        %v557 = vrot.slane %v556, 2
        %v558 = vadd.f32 %v556, %v557
        %v559 = vrot.slane %v558, 1
        %v560 = vadd.f32 %v558, %v559
        %v561 = vrot.slane %v452, 4
        %v562 = vadd.f32 %v452, %v561
        %v563 = vrot.slane %v562, 2
        %v564 = vadd.f32 %v562, %v563
        %v565 = vrot.slane %v564, 1
        %v566 = vadd.f32 %v564, %v565
        %v567 = vrot.slane %v453, 4
        %v568 = vadd.f32 %v453, %v567
        %v569 = vrot.slane %v568, 2
        %v570 = vadd.f32 %v568, %v569
        %v571 = vrot.slane %v570, 1
        %v572 = vadd.f32 %v570, %v571
        %v573 = vrot.slane %v454, 4
        %v574 = vadd.f32 %v454, %v573
        %v575 = vrot.slane %v574, 2
        %v576 = vadd.f32 %v574, %v575
        %v577 = vrot.slane %v576, 1
        %v578 = vadd.f32 %v576, %v577
        %v579 = vrot.slane %v455, 4
        %v580 = vadd.f32 %v455, %v579
        %v581 = vrot.slane %v580, 2
        %v582 = vadd.f32 %v580, %v581
        %v583 = vrot.slane %v582, 1
        %v584 = vadd.f32 %v582, %v583
        %v585 = vrot.slane %v456, 4
        %v586 = vadd.f32 %v456, %v585
        %v587 = vrot.slane %v586, 2
        %v588 = vadd.f32 %v586, %v587
        %v589 = vrot.slane %v588, 1
        %v590 = vadd.f32 %v588, %v589
        %v591 = vrot.slane %v457, 4
        %v592 = vadd.f32 %v457, %v591
        %v593 = vrot.slane %v592, 2
        %v594 = vadd.f32 %v592, %v593
        %v595 = vrot.slane %v594, 1
        %v596 = vadd.f32 %v594, %v595
        %v597 = vrot.slane %v458, 4
        %v598 = vadd.f32 %v458, %v597
        %v599 = vrot.slane %v598, 2
        %v600 = vadd.f32 %v598, %v599
        %v601 = vrot.slane %v600, 1
        %v602 = vadd.f32 %v600, %v601
        %v603 = vmul.f32 %v464, 0.125
        %v604 = vmul.f32 %v470, 0.125
        %v605 = vmul.f32 %v476, 0.125
        %v606 = vmul.f32 %v482, 0.125
        %v607 = vmul.f32 %v488, 0.125
        %v608 = vmul.f32 %v494, 0.125
        %v609 = vmul.f32 %v500, 0.125
        %v610 = vmul.f32 %v506, 0.125
        %v611 = vmul.f32 %v512, 0.125
        %v612 = vmul.f32 %v518, 0.125
        %v613 = vmul.f32 %v524, 0.125
        %v614 = vmul.f32 %v530, 0.125
        %v615 = vmul.f32 %v536, 0.125
        %v616 = vmul.f32 %v542, 0.125
        %v617 = vmul.f32 %v548, 0.125
        %v618 = vmul.f32 %v554, 0.125
        %v619 = vmul.f32 %v560, 0.125
        %v620 = vmul.f32 %v566, 0.125
        %v621 = vmul.f32 %v572, 0.125
        %v622 = vmul.f32 %v578, 0.125
        %v623 = vmul.f32 %v584, 0.125
        %v624 = vmul.f32 %v590, 0.125
        %v625 = vmul.f32 %v596, 0.125
        %v626 = vmul.f32 %v602, 0.125
        %v627 = vpack.c.bf16 %v603, %v603
        %v628 = vpack.c.bf16 %v604, %v604
        %v629 = vpack.c.bf16 %v605, %v605
        %v630 = vpack.c.bf16 %v606, %v606
        %v631 = vpack.c.bf16 %v607, %v607
        %v632 = vpack.c.bf16 %v608, %v608
        %v633 = vpack.c.bf16 %v609, %v609
        %v634 = vpack.c.bf16 %v610, %v610
        %v635 = vpack.c.bf16 %v611, %v611
        %v636 = vpack.c.bf16 %v612, %v612
        %v637 = vpack.c.bf16 %v613, %v613
        %v638 = vpack.c.bf16 %v614, %v614
        %v639 = vpack.c.bf16 %v615, %v615
        %v640 = vpack.c.bf16 %v616, %v616
        %v641 = vpack.c.bf16 %v617, %v617
        %v642 = vpack.c.bf16 %v618, %v618
        %v643 = vpack.c.bf16 %v619, %v619
        %v644 = vpack.c.bf16 %v620, %v620
        %v645 = vpack.c.bf16 %v621, %v621
        %v646 = vpack.c.bf16 %v622, %v622
        %v647 = vpack.c.bf16 %v623, %v623
        %v648 = vpack.c.bf16 %v624, %v624
        %v649 = vpack.c.bf16 %v625, %v625
        %v650 = vpack.c.bf16 %v626, %v626
        %v651 = vld [vmem:[%s2] sm:$0xf]
        %v652 = vld [vmem:[%s2 + $0x4] sm:$0xf]
        %v653 = vld [vmem:[%s2 + $0x8] sm:$0xf]
        %v654 = vld [vmem:[%s2 + $0xc] sm:$0xf]
        %v655 = vld [vmem:[%s2 + $0x10] sm:$0xf]
        %v656 = vld [vmem:[%s2 + $0x14] sm:$0xf]
        %v657 = vld [vmem:[%s2 + $0x18] sm:$0xf]
        %v658 = vld [vmem:[%s2 + $0x1c] sm:$0xf]
        %v659 = vld [vmem:[%s2 + $0x20] sm:$0xf]
        %v660 = vld [vmem:[%s2 + $0x24] sm:$0xf]
        %v661 = vld [vmem:[%s2 + $0x28] sm:$0xf]
        %v662 = vld [vmem:[%s2 + $0x2c] sm:$0xf]
        %v663 = vld [vmem:[%s2 + $0x30] sm:$0xf]
        %v664 = vld [vmem:[%s2 + $0x34] sm:$0xf]
        %v665 = vld [vmem:[%s2 + $0x38] sm:$0xf]
        %v666 = vld [vmem:[%s2 + $0x3c] sm:$0xf]
        %v691 = vunpack.c.l.b16 %v627
        %v692 = vunpack.c.l.b16 %v628
        %v693 = vunpack.c.l.b16 %v629
        %v694 = vunpack.c.l.b16 %v630
        %v695 = vunpack.c.l.b16 %v631
        %v696 = vunpack.c.l.b16 %v632
        %v697 = vunpack.c.l.b16 %v633
        %v698 = vunpack.c.l.b16 %v634
        %v699 = vunpack.c.l.b16 %v635
        %v700 = vunpack.c.l.b16 %v636
        %v701 = vunpack.c.l.b16 %v637
        %v702 = vunpack.c.l.b16 %v638
        %v703 = vunpack.c.l.b16 %v639
        %v704 = vunpack.c.l.b16 %v640
        %v705 = vunpack.c.l.b16 %v641
        %v706 = vunpack.c.l.b16 %v642
        %v707 = vunpack.c.l.b16 %v643
        %v708 = vunpack.c.l.b16 %v644
        %v709 = vunpack.c.l.b16 %v645
        %v710 = vunpack.c.l.b16 %v646
        %v711 = vunpack.c.l.b16 %v647
        %v712 = vunpack.c.l.b16 %v648
        %v713 = vunpack.c.l.b16 %v649
        %v714 = vunpack.c.l.b16 %v650
        %vm715 = vcmask 1041409
        %v716 = vsel %vm715, %v692, %v691
        %vm717 = vcmask 1042434
        %v718 = vsel %vm717, %v693, %v716
        %vm719 = vcmask 1043459
        %v720 = vsel %vm719, %v694, %v718
        %vm721 = vcmask 1044484
        %v722 = vsel %vm721, %v695, %v720
        %vm723 = vcmask 1045509
        %v724 = vsel %vm723, %v696, %v722
        %vm725 = vcmask 1046534
        %v726 = vsel %vm725, %v697, %v724
        %vm727 = vcmask 1047559
        %v728 = vsel %vm727, %v698, %v726
        %v729 = vsel %vm715, %v700, %v699
        %v730 = vsel %vm717, %v701, %v729
        %v731 = vsel %vm719, %v702, %v730
        %v732 = vsel %vm721, %v703, %v731
        %v733 = vsel %vm723, %v704, %v732
        %v734 = vsel %vm725, %v705, %v733
        %v735 = vsel %vm727, %v706, %v734
        %v736 = vsel %vm715, %v708, %v707
        %v737 = vsel %vm717, %v709, %v736
        %v738 = vsel %vm719, %v710, %v737
        %v739 = vsel %vm721, %v711, %v738
        %v740 = vsel %vm723, %v712, %v739
        %v741 = vsel %vm725, %v713, %v740
        %v742 = vsel %vm727, %v714, %v741
        %v743 = vpack.c.b16 %v735, %v728
        %v744 = vpack.c.b16 %v742, %v742
        %v763 = vunpack.c.l.b16 %v651
        %v764 = vunpack.c.l.b16 %v652
        %v765 = vunpack.c.l.b16 %v653
        %v766 = vunpack.c.l.b16 %v654
        %v767 = vunpack.c.l.b16 %v655
        %v768 = vunpack.c.l.b16 %v656
        %v769 = vunpack.c.l.b16 %v657
        %v770 = vunpack.c.l.b16 %v658
        %v771 = vunpack.c.l.b16 %v659
        %v772 = vunpack.c.l.b16 %v660
        %v773 = vunpack.c.l.b16 %v661
        %v774 = vunpack.c.l.b16 %v662
        %v775 = vunpack.c.l.b16 %v663
        %v776 = vunpack.c.l.b16 %v664
        %v777 = vunpack.c.l.b16 %v665
        %v778 = vunpack.c.l.b16 %v666
        %v779 = vpack.c.b16 %v764, %v763
        %v780 = vpack.c.b16 %v766, %v765
        %v781 = vpack.c.b16 %v768, %v767
        %v782 = vpack.c.b16 %v770, %v769
        %v783 = vpack.c.b16 %v772, %v771
        %v784 = vpack.c.b16 %v774, %v773
        %v785 = vpack.c.b16 %v776, %v775
        %v786 = vpack.c.b16 %v778, %v777
        %795 = vmatprep.subr.bf16.mxu0 0
        %796 = vmatpush1.bf16.msra.mxu0 %v779
        %797 = vmatprep.subr.bf16.mxu0 0
        %798 = vmatpush1.bf16.msra.mxu0 %v780
        %799 = vmatprep.subr.bf16.mxu0 0
        %800 = vmatpush1.bf16.msra.mxu0 %v781
        %801 = vmatprep.subr.bf16.mxu0 0
        %802 = vmatpush1.bf16.msra.mxu0 %v782
        %803 = vmatprep.subr.bf16.mxu0 0
        %804 = vmatpush1.bf16.msra.mxu0 %v783
        %805 = vmatprep.subr.bf16.mxu0 0
        %806 = vmatpush1.bf16.msra.mxu0 %v784
        %807 = vmatprep.subr.bf16.mxu0 0
        %808 = vmatpush1.bf16.msra.mxu0 %v785
        %809 = vmatprep.subr.bf16.mxu0 0
        %810 = vmatpush1.bf16.msra.mxu0 %v786
        %811 = vmatprep.subr.bf16.mxu0 0
        %812 = vmatpush1.bf16.msra.mxu0 0
        %813 = vmatprep.subr.bf16.mxu0 0
        %814 = vmatpush1.bf16.msra.mxu0 0
        %815 = vmatprep.subr.bf16.mxu0 0
        %816 = vmatpush1.bf16.msra.mxu0 0
        %817 = vmatprep.subr.bf16.mxu0 0
        %818 = vmatpush1.bf16.msra.mxu0 0
        %819 = vmatprep.subr.bf16.mxu0 0
        %820 = vmatpush1.bf16.msra.mxu0 0
        %821 = vmatprep.subr.bf16.mxu0 0
        %822 = vmatpush1.bf16.msra.mxu0 0
        %823 = vmatprep.subr.bf16.mxu0 0
        %824 = vmatpush1.bf16.msra.mxu0 0
        %825 = vmatprep.subr.bf16.mxu0 0
        %826 = vmatpush1.bf16.msra.mxu0 0
        %827 = vmatprep.mubr.bf16.mxu0 0
        %828 = vmatmul.mubr.bf16.gmra.mrb[0].mxu0 %v743
        %v829 = vpop.f32.mrb[0].mxu0
        %v830 = vadd.f32 0.0, %v829
        %v831 = vpop.f32.mrb[0].mxu0
        %v832 = vpop.f32.mrb[0].mxu0
        %v833 = vadd.f32 0.0, %v832
        %v834 = vpop.f32.mrb[0].mxu0
        %835 = vmatprep.mubr.bf16.mxu0 0
        %836 = vmatmul.mubr.bf16.gmra.mrb[0].mxu0 %v744
        %v837 = vpop.f32.mrb[0].mxu0
        %v838 = vadd.f32 0.0, %v837
        %v839 = vpop.f32.mrb[0].mxu0
        %v840 = vpop.f32.mrb[0].mxu0
        %v841 = vpop.f32.mrb[0].mxu0
        %842 = vdwg.mxu0
        %s843 = smul.u32 %s22, 8
        %s844 = scalar_lea.vmem [#allocation2], %s843
        %vm845 = vcmask 130048
        %846 = vst.msk [vmem:[%s844] sm:$0xff] %vm845, %v830
        %s847 = sadd.s32 %s843, 16
        %s848 = scalar_lea.vmem [#allocation2], %s847
        %849 = vst.msk [vmem:[%s848] sm:$0xff] %vm845, %v833
        %s850 = sadd.s32 %s843, 32
        %s851 = scalar_lea.vmem [#allocation2], %s850
        %852 = vst.msk [vmem:[%s851] sm:$0xff] %vm845, %v838
        %p853 = scmp.eq.s32.totalorder %s22, 1
        // Predicated region
        $region86: #{novel_view_homography.1} parent=76 // pred_check
          %p854 = pneg %p853
        $region87: #{novel_view_homography.1} parent=76 // pred_check_branch
          %856 = sbr.rel (%p854) target = $region89
        $region88: #{novel_view_homography.1} parent=76 // pred_region
          %v857 = vld [vmem:[%s404] sm:$0xff]
          %v859 = vcombine.high %v857, %v857
          %vm861 = vcmask 1043456
          %v862 = vsel %vm861, %v857, -inf
          %v863 = vrot.slane %v862, 4
          %v864 = vmax.f32 %v862, %v863
          %v865 = vrot.slane %v864, 2
          %v866 = vmax.f32 %v864, %v865
          %v867 = vrot.slane %v866, 1
          %v868 = vmax.f32 %v866, %v867
          %v869 = vsel %vm861, %v859, -inf
          %v870 = vrot.slane %v869, 4
          %v871 = vmax.f32 %v869, %v870
          %v872 = vrot.slane %v871, 2
          %v873 = vmax.f32 %v871, %v872
          %v874 = vrot.slane %v873, 1
          %v875 = vmax.f32 %v873, %v874
          %v878 = vcombine.low %v868, %v875
          %v880 = vsub.f32 %v857, %v878
          %v881 = vmul.f32 %v880, 1.442695
          %v882 = vpow.pop %v881
          %v884 = vcombine.high %v882, %v882
          %v886 = vsel %vm861, %v882, 0.0
          %v887 = vrot.slane %v886, 4
          %v888 = vadd.f32 %v886, %v887
          %v889 = vrot.slane %v888, 2
          %v890 = vadd.f32 %v888, %v889
          %v891 = vrot.slane %v890, 1
          %v892 = vadd.f32 %v890, %v891
          %v893 = vsel %vm861, %v884, 0.0
          %v894 = vrot.slane %v893, 4
          %v895 = vadd.f32 %v893, %v894
          %v896 = vrot.slane %v895, 2
          %v897 = vadd.f32 %v895, %v896
          %v898 = vrot.slane %v897, 1
          %v899 = vadd.f32 %v897, %v898
          %v902 = vcombine.low %v892, %v899
          %v904 = vrcp.pop %v902
          %v905 = vmul.f32 %v882, %v904
          %v906 = vld [vmem:[#allocation2] sm:$0xff]
          %v907 = vld [vmem:[#allocation2 + $0x8] sm:$0xff]
          %v908 = vld [vmem:[#allocation2 + $0x10] sm:$0xff]
          %v909 = vld [vmem:[#allocation2 + $0x18] sm:$0xff]
          %v910 = vld [vmem:[#allocation2 + $0x20] sm:$0xff]
          %v911 = vld [vmem:[#allocation2 + $0x28] sm:$0xff]
          %v912 = vpack.c.bf16 %v907, %v906
          %v913 = vpack.c.bf16 %v909, %v908
          %v914 = vpack.c.bf16 %v911, %v910
          %v915 = vld [vmem:[%s1] ss:$2 sm:$0x3]
          %s916 = scalar_lea.vmem %s1, 1
          %v917 = vld [vmem:[%s916] ss:$2 sm:$0x3]
          %v918 = vlaneseq
          %v919 = vshrl.u32 %v918, 7
          %v920 = vadd.s32 %v919, 8
          %s921 = smul.u32 %s21, 24
          %s922 = sld [smem:[#allocation3 + %s921]]
          %s923 = sadd.s32 %s921, 1
          %s924 = sld [smem:[#allocation3 + %s923]]
          %s925 = sadd.s32 %s921, 2
          %s926 = sld [smem:[#allocation3 + %s925]]
          %s927 = sadd.s32 %s921, 3
          %s928 = sld [smem:[#allocation3 + %s927]]
          %s929 = sadd.s32 %s921, 4
          %s930 = sld [smem:[#allocation3 + %s929]]
          %s931 = sadd.s32 %s921, 5
          %s932 = sld [smem:[#allocation3 + %s931]]
          %v933 = vstv %s922
          %v934 = vmul.f32 %v933, %v915
          %v935 = vstv %s924
          %v936 = vmul.f32 %v935, %v917
          %v937 = vadd.f32 %v934, %v936
          %v938 = vstv %s926
          %v939 = vadd.f32 %v937, %v938
          %v940 = vstv %s928
          %v941 = vmul.f32 %v940, %v915
          %v942 = vstv %s930
          %v943 = vmul.f32 %v942, %v917
          %v944 = vadd.f32 %v941, %v943
          %v945 = vstv %s932
          %v946 = vadd.f32 %v944, %v945
          %v947 = vadd.f32 %v939, 1.0
          %v948 = vmul.f32 %v947, 7.5
          %v949 = vadd.f32 %v946, 1.0
          %v950 = vmul.f32 %v949, 7.5
          %v951 = vfloor.f32 %v948
          %v952 = vfloor.f32 %v950
          %v953 = vsub.f32 %v948, %v951
          %v954 = vsub.f32 %v950, %v952
          %v955 = vmax.f32 %v951, -4.0
          %v956 = vmin.f32 %v955, 20.0
          %v957 = vcvt.f32.s32.to.zero.pseudo %v956
          %v958 = vmax.f32 %v952, -4.0
          %v959 = vmin.f32 %v958, 20.0
          %v960 = vcvt.f32.s32.to.zero.pseudo %v959
          %v961 = vlaneseq
          %v962 = vshrl.u32 %v961, 7
          %v963 = vsub.s32 0, %v962
          %v964 = vrot.slane %v957, %v963
          %v965 = vlaneseq
          %v966 = vshrl.u32 %v965, 7
          %v967 = vsub.s32 1, %v966
          %v968 = vrot.slane %v957, %v967
          %vm969 = vcmp.eq.s32.totalorder %v919, %v964
          %vm970 = vcmp.eq.s32.totalorder %v919, %v968
          %vm971 = vcmp.eq.s32.totalorder %v920, %v964
          %vm972 = vcmp.eq.s32.totalorder %v920, %v968
          %v973 = vsub.f32 1.0, %v953
          %v975 = vlaneseq
          %v976 = vshrl.u32 %v975, 7
          %v977 = vsub.s32 0, %v976
          %v978 = vrot.slane %v973, %v977
          %v979 = vlaneseq
          %v980 = vshrl.u32 %v979, 7
          %v981 = vsub.s32 1, %v980
          %v982 = vrot.slane %v973, %v981
          %v985 = vsel %vm969, %v978, 0.0
          %v986 = vsel %vm970, %v982, 0.0
          %v987 = vsel %vm971, %v978, 0.0
          %v988 = vsel %vm972, %v982, 0.0
          %v989 = vadd.s32 %v957, 1
          %v990 = vlaneseq
          %v991 = vshrl.u32 %v990, 7
          %v992 = vsub.s32 0, %v991
          %v993 = vrot.slane %v989, %v992
          %v994 = vlaneseq
          %v995 = vshrl.u32 %v994, 7
          %v996 = vsub.s32 1, %v995
          %v997 = vrot.slane %v989, %v996
          %vm998 = vcmp.eq.s32.totalorder %v919, %v993
          %vm999 = vcmp.eq.s32.totalorder %v919, %v997
          %vm1000 = vcmp.eq.s32.totalorder %v920, %v993
          %vm1001 = vcmp.eq.s32.totalorder %v920, %v997
          %v1003 = vlaneseq
          %v1004 = vshrl.u32 %v1003, 7
          %v1005 = vsub.s32 0, %v1004
          %v1006 = vrot.slane %v953, %v1005
          %v1007 = vlaneseq
          %v1008 = vshrl.u32 %v1007, 7
          %v1009 = vsub.s32 1, %v1008
          %v1010 = vrot.slane %v953, %v1009
          %v1013 = vsel %vm998, %v1006, 0.0
          %v1014 = vsel %vm999, %v1010, 0.0
          %v1015 = vsel %vm1000, %v1006, 0.0
          %v1016 = vsel %vm1001, %v1010, 0.0
          %v1017 = vadd.f32 %v985, %v1013
          %v1018 = vadd.f32 %v986, %v1014
          %v1019 = vadd.f32 %v987, %v1015
          %v1020 = vadd.f32 %v988, %v1016
          %v1021 = vlaneseq
          %v1022 = vshrl.u32 %v1021, 7
          %v1023 = vsub.s32 0, %v1022
          %v1024 = vrot.slane %v960, %v1023
          %v1025 = vlaneseq
          %v1026 = vshrl.u32 %v1025, 7
          %v1027 = vsub.s32 1, %v1026
          %v1028 = vrot.slane %v960, %v1027
          %vm1029 = vcmp.eq.s32.totalorder %v919, %v1024
          %vm1030 = vcmp.eq.s32.totalorder %v919, %v1028
          %vm1031 = vcmp.eq.s32.totalorder %v920, %v1024
          %vm1032 = vcmp.eq.s32.totalorder %v920, %v1028
          %v1033 = vsub.f32 1.0, %v954
          %v1035 = vlaneseq
          %v1036 = vshrl.u32 %v1035, 7
          %v1037 = vsub.s32 0, %v1036
          %v1038 = vrot.slane %v1033, %v1037
          %v1039 = vlaneseq
          %v1040 = vshrl.u32 %v1039, 7
          %v1041 = vsub.s32 1, %v1040
          %v1042 = vrot.slane %v1033, %v1041
          %v1045 = vsel %vm1029, %v1038, 0.0
          %v1046 = vsel %vm1030, %v1042, 0.0
          %v1047 = vsel %vm1031, %v1038, 0.0
          %v1048 = vsel %vm1032, %v1042, 0.0
          %v1049 = vadd.s32 %v960, 1
          %v1050 = vlaneseq
          %v1051 = vshrl.u32 %v1050, 7
          %v1052 = vsub.s32 0, %v1051
          %v1053 = vrot.slane %v1049, %v1052
          %v1054 = vlaneseq
          %v1055 = vshrl.u32 %v1054, 7
          %v1056 = vsub.s32 1, %v1055
          %v1057 = vrot.slane %v1049, %v1056
          %vm1058 = vcmp.eq.s32.totalorder %v919, %v1053
          %vm1059 = vcmp.eq.s32.totalorder %v919, %v1057
          %vm1060 = vcmp.eq.s32.totalorder %v920, %v1053
          %vm1061 = vcmp.eq.s32.totalorder %v920, %v1057
          %v1063 = vlaneseq
          %v1064 = vshrl.u32 %v1063, 7
          %v1065 = vsub.s32 0, %v1064
          %v1066 = vrot.slane %v954, %v1065
          %v1067 = vlaneseq
          %v1068 = vshrl.u32 %v1067, 7
          %v1069 = vsub.s32 1, %v1068
          %v1070 = vrot.slane %v954, %v1069
          %v1073 = vsel %vm1058, %v1066, 0.0
          %v1074 = vsel %vm1059, %v1070, 0.0
          %v1075 = vsel %vm1060, %v1066, 0.0
          %v1076 = vsel %vm1061, %v1070, 0.0
          %v1077 = vadd.f32 %v1045, %v1073
          %v1078 = vadd.f32 %v1046, %v1074
          %v1079 = vadd.f32 %v1047, %v1075
          %v1080 = vadd.f32 %v1048, %v1076
          %v1081 = vpack.c.bf16 %v1019, %v1017
          %v1082 = vpack.c.bf16 %v1020, %v1018
          %v1084 = vsel %vm845, %v912, 0
          %v1087 = vsel %vm845, %v913, 0
          %v1090 = vsel %vm845, %v914, 0
          %1092 = vmatprep.subr.bf16.mxu0 %v1082
          %1093 = vmatpush1.bf16.msra.mxu0 %v1081
          %1094 = vmatprep.subr.bf16.mxu0 0
          %1095 = vmatpush1.bf16.msra.mxu0 0
          %1096 = vmatprep.subr.bf16.mxu0 0
          %1097 = vmatpush1.bf16.msra.mxu0 0
          %1098 = vmatprep.subr.bf16.mxu0 0
          %1099 = vmatpush1.bf16.msra.mxu0 0
          %1100 = vmatprep.subr.bf16.mxu0 0
          %1101 = vmatpush1.bf16.msra.mxu0 0
          %1102 = vmatprep.subr.bf16.mxu0 0
          %1103 = vmatpush1.bf16.msra.mxu0 0
          %1104 = vmatprep.subr.bf16.mxu0 0
          %1105 = vmatpush1.bf16.msra.mxu0 0
          %1106 = vmatprep.subr.bf16.mxu0 0
          %1107 = vmatpush1.bf16.msra.mxu0 0
          %1108 = vmatprep.subr.bf16.mxu0 0
          %1109 = vmatpush1.bf16.msra.mxu0 0
          %1110 = vmatprep.subr.bf16.mxu0 0
          %1111 = vmatpush1.bf16.msra.mxu0 0
          %1112 = vmatprep.subr.bf16.mxu0 0
          %1113 = vmatpush1.bf16.msra.mxu0 0
          %1114 = vmatprep.subr.bf16.mxu0 0
          %1115 = vmatpush1.bf16.msra.mxu0 0
          %1116 = vmatprep.subr.bf16.mxu0 0
          %1117 = vmatpush1.bf16.msra.mxu0 0
          %1118 = vmatprep.subr.bf16.mxu0 0
          %1119 = vmatpush1.bf16.msra.mxu0 0
          %1120 = vmatprep.subr.bf16.mxu0 0
          %1121 = vmatpush1.bf16.msra.mxu0 0
          %1122 = vmatprep.subr.bf16.mxu0 0
          %1123 = vmatpush1.bf16.msra.mxu0 0
          %1124 = vmatprep.mubr.bf16.mxu0 0
          %1125 = vmatmul.mubr.bf16.gmra.mrb[0].mxu0 %v1084
          %v1126 = vpop.f32.mrb[0].mxu0
          %v1127 = vadd.f32 0.0, %v1126
          %v1128 = vpop.f32.mrb[0].mxu0
          %v1129 = vadd.f32 0.0, %v1128
          %v1130 = vpop.f32.mrb[0].mxu0
          %v1131 = vadd.f32 0.0, %v1130
          %v1132 = vpop.f32.mrb[0].mxu0
          %v1133 = vadd.f32 0.0, %v1132
          %1134 = vmatprep.mubr.bf16.mxu0 0
          %1135 = vmatmul.mubr.bf16.gmra.mrb[0].mxu0 %v1087
          %v1136 = vpop.f32.mrb[0].mxu0
          %v1137 = vadd.f32 0.0, %v1136
          %v1138 = vpop.f32.mrb[0].mxu0
          %v1139 = vadd.f32 0.0, %v1138
          %v1140 = vpop.f32.mrb[0].mxu0
          %v1141 = vadd.f32 0.0, %v1140
          %v1142 = vpop.f32.mrb[0].mxu0
          %v1143 = vadd.f32 0.0, %v1142
          %1144 = vmatprep.mubr.bf16.mxu0 0
          %1145 = vmatmul.mubr.bf16.gmra.mrb[0].mxu0 %v1090
          %v1146 = vpop.f32.mrb[0].mxu0
          %v1147 = vadd.f32 0.0, %v1146
          %v1148 = vpop.f32.mrb[0].mxu0
          %v1149 = vadd.f32 0.0, %v1148
          %v1150 = vpop.f32.mrb[0].mxu0
          %v1151 = vadd.f32 0.0, %v1150
          %v1152 = vpop.f32.mrb[0].mxu0
          %v1153 = vadd.f32 0.0, %v1152
          %1154 = vdwg.mxu0
          %v1156 = vlaneseq
          %v1157 = vshrl.u32 %v1156, 7
          %v1158 = vsub.s32 0, %v1157
          %v1159 = vrot.slane %v905, %v1158
          %v1160 = vlaneseq
          %v1161 = vshrl.u32 %v1160, 7
          %v1162 = vsub.s32 4, %v1161
          %v1163 = vrot.slane %v905, %v1162
          %v1166 = vlaneseq
          %v1167 = vshrl.u32 %v1166, 7
          %v1168 = vsub.s32 0, %v1167
          %v1169 = vrot.slane %v1159, %v1168
          %v1170 = vlaneseq
          %v1171 = vshrl.u32 %v1170, 7
          %v1172 = vsub.s32 0, %v1171
          %v1173 = vrot.slane %v1163, %v1172
          %v1174 = vmul.f32 %v1077, %v1169
          %v1175 = vmul.f32 %v1078, %v1173
          %v1176 = vmul.f32 %v1079, %v1169
          %v1177 = vmul.f32 %v1080, %v1173
          %v1178 = vmul.f32 %v1127, %v1174
          %v1179 = vmul.f32 %v1129, %v1175
          %v1180 = vmul.f32 %v1131, %v1176
          %v1181 = vmul.f32 %v1133, %v1177
          %v1182 = vmul.f32 %v1137, %v1174
          %v1183 = vmul.f32 %v1139, %v1175
          %v1184 = vmul.f32 %v1141, %v1176
          %v1185 = vmul.f32 %v1143, %v1177
          %v1186 = vmul.f32 %v1147, %v1174
          %v1187 = vmul.f32 %v1149, %v1175
          %v1188 = vmul.f32 %v1151, %v1176
          %v1189 = vmul.f32 %v1153, %v1177
          %v1190 = vadd.f32 %v1178, %v1180
          %v1191 = vrot.slane %v1190, 4
          %v1192 = vadd.f32 %v1190, %v1191
          %v1193 = vrot.slane %v1192, 2
          %v1194 = vadd.f32 %v1192, %v1193
          %v1195 = vrot.slane %v1194, 1
          %v1196 = vadd.f32 %v1194, %v1195
          %v1197 = vadd.f32 %v1179, %v1181
          %v1198 = vrot.slane %v1197, 4
          %v1199 = vadd.f32 %v1197, %v1198
          %v1200 = vrot.slane %v1199, 2
          %v1201 = vadd.f32 %v1199, %v1200
          %v1202 = vrot.slane %v1201, 1
          %v1203 = vadd.f32 %v1201, %v1202
          %v1204 = vadd.f32 %v1182, %v1184
          %v1205 = vrot.slane %v1204, 4
          %v1206 = vadd.f32 %v1204, %v1205
          %v1207 = vrot.slane %v1206, 2
          %v1208 = vadd.f32 %v1206, %v1207
          %v1209 = vrot.slane %v1208, 1
          %v1210 = vadd.f32 %v1208, %v1209
          %v1211 = vadd.f32 %v1183, %v1185
          %v1212 = vrot.slane %v1211, 4
          %v1213 = vadd.f32 %v1211, %v1212
          %v1214 = vrot.slane %v1213, 2
          %v1215 = vadd.f32 %v1213, %v1214
          %v1216 = vrot.slane %v1215, 1
          %v1217 = vadd.f32 %v1215, %v1216
          %v1218 = vadd.f32 %v1186, %v1188
          %v1219 = vrot.slane %v1218, 4
          %v1220 = vadd.f32 %v1218, %v1219
          %v1221 = vrot.slane %v1220, 2
          %v1222 = vadd.f32 %v1220, %v1221
          %v1223 = vrot.slane %v1222, 1
          %v1224 = vadd.f32 %v1222, %v1223
          %v1225 = vadd.f32 %v1187, %v1189
          %v1226 = vrot.slane %v1225, 4
          %v1227 = vadd.f32 %v1225, %v1226
          %v1228 = vrot.slane %v1227, 2
          %v1229 = vadd.f32 %v1227, %v1228
          %v1230 = vrot.slane %v1229, 1
          %v1231 = vadd.f32 %v1229, %v1230
          %v1232 = vadd.f32 %v1196, 0.0
          %v1233 = vadd.f32 %v1203, 0.0
          %v1234 = vadd.f32 %v1210, 0.0
          %v1235 = vadd.f32 %v1217, 0.0
          %v1236 = vadd.f32 %v1224, 0.0
          %v1237 = vadd.f32 %v1231, 0.0
          %s1238 = smul.u32 %s21, 4
          %s1239 = sadd.s32 %s1238, 1
          %s1240 = smul.u32 %s1239, 6
          %s1241 = sld [smem:[#allocation3 + %s1240]]
          %s1242 = sadd.s32 %s1240, 1
          %s1243 = sld [smem:[#allocation3 + %s1242]]
          %s1244 = sadd.s32 %s1240, 2
          %s1245 = sld [smem:[#allocation3 + %s1244]]
          %s1246 = sadd.s32 %s1240, 3
          %s1247 = sld [smem:[#allocation3 + %s1246]]
          %s1248 = sadd.s32 %s1240, 4
          %s1249 = sld [smem:[#allocation3 + %s1248]]
          %s1250 = sadd.s32 %s1240, 5
          %s1251 = sld [smem:[#allocation3 + %s1250]]
          %v1252 = vstv %s1241
          %v1253 = vmul.f32 %v1252, %v915
          %v1254 = vstv %s1243
          %v1255 = vmul.f32 %v1254, %v917
          %v1256 = vadd.f32 %v1253, %v1255
          %v1257 = vstv %s1245
          %v1258 = vadd.f32 %v1256, %v1257
          %v1259 = vstv %s1247
          %v1260 = vmul.f32 %v1259, %v915
          %v1261 = vstv %s1249
          %v1262 = vmul.f32 %v1261, %v917
          %v1263 = vadd.f32 %v1260, %v1262
          %v1264 = vstv %s1251
          %v1265 = vadd.f32 %v1263, %v1264
          %v1266 = vadd.f32 %v1258, 1.0
          %v1267 = vmul.f32 %v1266, 7.5
          %v1268 = vadd.f32 %v1265, 1.0
          %v1269 = vmul.f32 %v1268, 7.5
          %v1270 = vfloor.f32 %v1267
          %v1271 = vfloor.f32 %v1269
          %v1272 = vsub.f32 %v1267, %v1270
          %v1273 = vsub.f32 %v1269, %v1271
          %v1274 = vmax.f32 %v1270, -4.0
          %v1275 = vmin.f32 %v1274, 20.0
          %v1276 = vcvt.f32.s32.to.zero.pseudo %v1275
          %v1277 = vmax.f32 %v1271, -4.0
          %v1278 = vmin.f32 %v1277, 20.0
          %v1279 = vcvt.f32.s32.to.zero.pseudo %v1278
          %v1280 = vlaneseq
          %v1281 = vshrl.u32 %v1280, 7
          %v1282 = vsub.s32 0, %v1281
          %v1283 = vrot.slane %v1276, %v1282
          %v1284 = vlaneseq
          %v1285 = vshrl.u32 %v1284, 7
          %v1286 = vsub.s32 1, %v1285
          %v1287 = vrot.slane %v1276, %v1286
          %vm1288 = vcmp.eq.s32.totalorder %v919, %v1283
          %vm1289 = vcmp.eq.s32.totalorder %v919, %v1287
          %vm1290 = vcmp.eq.s32.totalorder %v920, %v1283
          %vm1291 = vcmp.eq.s32.totalorder %v920, %v1287
          %v1292 = vsub.f32 1.0, %v1272
          %v1294 = vlaneseq
          %v1295 = vshrl.u32 %v1294, 7
          %v1296 = vsub.s32 0, %v1295
          %v1297 = vrot.slane %v1292, %v1296
          %v1298 = vlaneseq
          %v1299 = vshrl.u32 %v1298, 7
          %v1300 = vsub.s32 1, %v1299
          %v1301 = vrot.slane %v1292, %v1300
          %v1304 = vsel %vm1288, %v1297, 0.0
          %v1305 = vsel %vm1289, %v1301, 0.0
          %v1306 = vsel %vm1290, %v1297, 0.0
          %v1307 = vsel %vm1291, %v1301, 0.0
          %v1308 = vadd.s32 %v1276, 1
          %v1309 = vlaneseq
          %v1310 = vshrl.u32 %v1309, 7
          %v1311 = vsub.s32 0, %v1310
          %v1312 = vrot.slane %v1308, %v1311
          %v1313 = vlaneseq
          %v1314 = vshrl.u32 %v1313, 7
          %v1315 = vsub.s32 1, %v1314
          %v1316 = vrot.slane %v1308, %v1315
          %vm1317 = vcmp.eq.s32.totalorder %v919, %v1312
          %vm1318 = vcmp.eq.s32.totalorder %v919, %v1316
          %vm1319 = vcmp.eq.s32.totalorder %v920, %v1312
          %vm1320 = vcmp.eq.s32.totalorder %v920, %v1316
          %v1322 = vlaneseq
          %v1323 = vshrl.u32 %v1322, 7
          %v1324 = vsub.s32 0, %v1323
          %v1325 = vrot.slane %v1272, %v1324
          %v1326 = vlaneseq
          %v1327 = vshrl.u32 %v1326, 7
          %v1328 = vsub.s32 1, %v1327
          %v1329 = vrot.slane %v1272, %v1328
          %v1332 = vsel %vm1317, %v1325, 0.0
          %v1333 = vsel %vm1318, %v1329, 0.0
          %v1334 = vsel %vm1319, %v1325, 0.0
          %v1335 = vsel %vm1320, %v1329, 0.0
          %v1336 = vadd.f32 %v1304, %v1332
          %v1337 = vadd.f32 %v1305, %v1333
          %v1338 = vadd.f32 %v1306, %v1334
          %v1339 = vadd.f32 %v1307, %v1335
          %v1340 = vlaneseq
          %v1341 = vshrl.u32 %v1340, 7
          %v1342 = vsub.s32 0, %v1341
          %v1343 = vrot.slane %v1279, %v1342
          %v1344 = vlaneseq
          %v1345 = vshrl.u32 %v1344, 7
          %v1346 = vsub.s32 1, %v1345
          %v1347 = vrot.slane %v1279, %v1346
          %vm1348 = vcmp.eq.s32.totalorder %v919, %v1343
          %vm1349 = vcmp.eq.s32.totalorder %v919, %v1347
          %vm1350 = vcmp.eq.s32.totalorder %v920, %v1343
          %vm1351 = vcmp.eq.s32.totalorder %v920, %v1347
          %v1352 = vsub.f32 1.0, %v1273
          %v1354 = vlaneseq
          %v1355 = vshrl.u32 %v1354, 7
          %v1356 = vsub.s32 0, %v1355
          %v1357 = vrot.slane %v1352, %v1356
          %v1358 = vlaneseq
          %v1359 = vshrl.u32 %v1358, 7
          %v1360 = vsub.s32 1, %v1359
          %v1361 = vrot.slane %v1352, %v1360
          %v1364 = vsel %vm1348, %v1357, 0.0
          %v1365 = vsel %vm1349, %v1361, 0.0
          %v1366 = vsel %vm1350, %v1357, 0.0
          %v1367 = vsel %vm1351, %v1361, 0.0
          %v1368 = vadd.s32 %v1279, 1
          %v1369 = vlaneseq
          %v1370 = vshrl.u32 %v1369, 7
          %v1371 = vsub.s32 0, %v1370
          %v1372 = vrot.slane %v1368, %v1371
          %v1373 = vlaneseq
          %v1374 = vshrl.u32 %v1373, 7
          %v1375 = vsub.s32 1, %v1374
          %v1376 = vrot.slane %v1368, %v1375
          %vm1377 = vcmp.eq.s32.totalorder %v919, %v1372
          %vm1378 = vcmp.eq.s32.totalorder %v919, %v1376
          %vm1379 = vcmp.eq.s32.totalorder %v920, %v1372
          %vm1380 = vcmp.eq.s32.totalorder %v920, %v1376
          %v1382 = vlaneseq
          %v1383 = vshrl.u32 %v1382, 7
          %v1384 = vsub.s32 0, %v1383
          %v1385 = vrot.slane %v1273, %v1384
          %v1386 = vlaneseq
          %v1387 = vshrl.u32 %v1386, 7
          %v1388 = vsub.s32 1, %v1387
          %v1389 = vrot.slane %v1273, %v1388
          %v1392 = vsel %vm1377, %v1385, 0.0
          %v1393 = vsel %vm1378, %v1389, 0.0
          %v1394 = vsel %vm1379, %v1385, 0.0
          %v1395 = vsel %vm1380, %v1389, 0.0
          %v1396 = vadd.f32 %v1364, %v1392
          %v1397 = vadd.f32 %v1365, %v1393
          %v1398 = vadd.f32 %v1366, %v1394
          %v1399 = vadd.f32 %v1367, %v1395
          %v1400 = vpack.c.bf16 %v1338, %v1336
          %v1401 = vpack.c.bf16 %v1339, %v1337
          %1402 = vmatprep.subr.bf16.mxu0 %v1401
          %1403 = vmatpush1.bf16.msra.mxu0 %v1400
          %1404 = vmatprep.subr.bf16.mxu0 0
          %1405 = vmatpush1.bf16.msra.mxu0 0
          %1406 = vmatprep.subr.bf16.mxu0 0
          %1407 = vmatpush1.bf16.msra.mxu0 0
          %1408 = vmatprep.subr.bf16.mxu0 0
          %1409 = vmatpush1.bf16.msra.mxu0 0
          %1410 = vmatprep.subr.bf16.mxu0 0
          %1411 = vmatpush1.bf16.msra.mxu0 0
          %1412 = vmatprep.subr.bf16.mxu0 0
          %1413 = vmatpush1.bf16.msra.mxu0 0
          %1414 = vmatprep.subr.bf16.mxu0 0
          %1415 = vmatpush1.bf16.msra.mxu0 0
          %1416 = vmatprep.subr.bf16.mxu0 0
          %1417 = vmatpush1.bf16.msra.mxu0 0
          %1418 = vmatprep.subr.bf16.mxu0 0
          %1419 = vmatpush1.bf16.msra.mxu0 0
          %1420 = vmatprep.subr.bf16.mxu0 0
          %1421 = vmatpush1.bf16.msra.mxu0 0
          %1422 = vmatprep.subr.bf16.mxu0 0
          %1423 = vmatpush1.bf16.msra.mxu0 0
          %1424 = vmatprep.subr.bf16.mxu0 0
          %1425 = vmatpush1.bf16.msra.mxu0 0
          %1426 = vmatprep.subr.bf16.mxu0 0
          %1427 = vmatpush1.bf16.msra.mxu0 0
          %1428 = vmatprep.subr.bf16.mxu0 0
          %1429 = vmatpush1.bf16.msra.mxu0 0
          %1430 = vmatprep.subr.bf16.mxu0 0
          %1431 = vmatpush1.bf16.msra.mxu0 0
          %1432 = vmatprep.subr.bf16.mxu0 0
          %1433 = vmatpush1.bf16.msra.mxu0 0
          %1434 = vmatprep.mubr.bf16.mxu0 0
          %1435 = vmatmul.mubr.bf16.gmra.mrb[0].mxu0 %v1084
          %v1436 = vpop.f32.mrb[0].mxu0
          %v1437 = vadd.f32 0.0, %v1436
          %v1438 = vpop.f32.mrb[0].mxu0
          %v1439 = vadd.f32 0.0, %v1438
          %v1440 = vpop.f32.mrb[0].mxu0
          %v1441 = vadd.f32 0.0, %v1440
          %v1442 = vpop.f32.mrb[0].mxu0
          %v1443 = vadd.f32 0.0, %v1442
          %1444 = vmatprep.mubr.bf16.mxu0 0
          %1445 = vmatmul.mubr.bf16.gmra.mrb[0].mxu0 %v1087
          %v1446 = vpop.f32.mrb[0].mxu0
          %v1447 = vadd.f32 0.0, %v1446
          %v1448 = vpop.f32.mrb[0].mxu0
          %v1449 = vadd.f32 0.0, %v1448
          %v1450 = vpop.f32.mrb[0].mxu0
          %v1451 = vadd.f32 0.0, %v1450
          %v1452 = vpop.f32.mrb[0].mxu0
          %v1453 = vadd.f32 0.0, %v1452
          %1454 = vmatprep.mubr.bf16.mxu0 0
          %1455 = vmatmul.mubr.bf16.gmra.mrb[0].mxu0 %v1090
          %v1456 = vpop.f32.mrb[0].mxu0
          %v1457 = vadd.f32 0.0, %v1456
          %v1458 = vpop.f32.mrb[0].mxu0
          %v1459 = vadd.f32 0.0, %v1458
          %v1460 = vpop.f32.mrb[0].mxu0
          %v1461 = vadd.f32 0.0, %v1460
          %v1462 = vpop.f32.mrb[0].mxu0
          %v1463 = vadd.f32 0.0, %v1462
          %1464 = vdwg.mxu0
          %v1465 = vlaneseq
          %v1466 = vshrl.u32 %v1465, 7
          %v1467 = vsub.s32 1, %v1466
          %v1468 = vrot.slane %v905, %v1467
          %v1469 = vlaneseq
          %v1470 = vshrl.u32 %v1469, 7
          %v1471 = vsub.s32 5, %v1470
          %v1472 = vrot.slane %v905, %v1471
          %v1475 = vlaneseq
          %v1476 = vshrl.u32 %v1475, 7
          %v1477 = vsub.s32 1, %v1476
          %v1478 = vrot.slane %v1468, %v1477
          %v1479 = vlaneseq
          %v1480 = vshrl.u32 %v1479, 7
          %v1481 = vsub.s32 1, %v1480
          %v1482 = vrot.slane %v1472, %v1481
          %v1483 = vmul.f32 %v1396, %v1478
          %v1484 = vmul.f32 %v1397, %v1482
          %v1485 = vmul.f32 %v1398, %v1478
          %v1486 = vmul.f32 %v1399, %v1482
          %v1487 = vmul.f32 %v1437, %v1483
          %v1488 = vmul.f32 %v1439, %v1484
          %v1489 = vmul.f32 %v1441, %v1485
          %v1490 = vmul.f32 %v1443, %v1486
          %v1491 = vmul.f32 %v1447, %v1483
          %v1492 = vmul.f32 %v1449, %v1484
          %v1493 = vmul.f32 %v1451, %v1485
          %v1494 = vmul.f32 %v1453, %v1486
          %v1495 = vmul.f32 %v1457, %v1483
          %v1496 = vmul.f32 %v1459, %v1484
          %v1497 = vmul.f32 %v1461, %v1485
          %v1498 = vmul.f32 %v1463, %v1486
          %v1499 = vadd.f32 %v1487, %v1489
          %v1500 = vrot.slane %v1499, 4
          %v1501 = vadd.f32 %v1499, %v1500
          %v1502 = vrot.slane %v1501, 2
          %v1503 = vadd.f32 %v1501, %v1502
          %v1504 = vrot.slane %v1503, 1
          %v1505 = vadd.f32 %v1503, %v1504
          %v1506 = vadd.f32 %v1488, %v1490
          %v1507 = vrot.slane %v1506, 4
          %v1508 = vadd.f32 %v1506, %v1507
          %v1509 = vrot.slane %v1508, 2
          %v1510 = vadd.f32 %v1508, %v1509
          %v1511 = vrot.slane %v1510, 1
          %v1512 = vadd.f32 %v1510, %v1511
          %v1513 = vadd.f32 %v1491, %v1493
          %v1514 = vrot.slane %v1513, 4
          %v1515 = vadd.f32 %v1513, %v1514
          %v1516 = vrot.slane %v1515, 2
          %v1517 = vadd.f32 %v1515, %v1516
          %v1518 = vrot.slane %v1517, 1
          %v1519 = vadd.f32 %v1517, %v1518
          %v1520 = vadd.f32 %v1492, %v1494
          %v1521 = vrot.slane %v1520, 4
          %v1522 = vadd.f32 %v1520, %v1521
          %v1523 = vrot.slane %v1522, 2
          %v1524 = vadd.f32 %v1522, %v1523
          %v1525 = vrot.slane %v1524, 1
          %v1526 = vadd.f32 %v1524, %v1525
          %v1527 = vadd.f32 %v1495, %v1497
          %v1528 = vrot.slane %v1527, 4
          %v1529 = vadd.f32 %v1527, %v1528
          %v1530 = vrot.slane %v1529, 2
          %v1531 = vadd.f32 %v1529, %v1530
          %v1532 = vrot.slane %v1531, 1
          %v1533 = vadd.f32 %v1531, %v1532
          %v1534 = vadd.f32 %v1496, %v1498
          %v1535 = vrot.slane %v1534, 4
          %v1536 = vadd.f32 %v1534, %v1535
          %v1537 = vrot.slane %v1536, 2
          %v1538 = vadd.f32 %v1536, %v1537
          %v1539 = vrot.slane %v1538, 1
          %v1540 = vadd.f32 %v1538, %v1539
          %v1541 = vadd.f32 %v1232, %v1505
          %v1542 = vadd.f32 %v1233, %v1512
          %v1543 = vadd.f32 %v1234, %v1519
          %v1544 = vadd.f32 %v1235, %v1526
          %v1545 = vadd.f32 %v1236, %v1533
          %v1546 = vadd.f32 %v1237, %v1540
          %s1547 = sadd.s32 %s1238, 2
          %s1548 = smul.u32 %s1547, 6
          %s1549 = sld [smem:[#allocation3 + %s1548]]
          %s1550 = sadd.s32 %s1548, 1
          %s1551 = sld [smem:[#allocation3 + %s1550]]
          %s1552 = sadd.s32 %s1548, 2
          %s1553 = sld [smem:[#allocation3 + %s1552]]
          %s1554 = sadd.s32 %s1548, 3
          %s1555 = sld [smem:[#allocation3 + %s1554]]
          %s1556 = sadd.s32 %s1548, 4
          %s1557 = sld [smem:[#allocation3 + %s1556]]
          %s1558 = sadd.s32 %s1548, 5
          %s1559 = sld [smem:[#allocation3 + %s1558]]
          %v1560 = vstv %s1549
          %v1561 = vmul.f32 %v1560, %v915
          %v1562 = vstv %s1551
          %v1563 = vmul.f32 %v1562, %v917
          %v1564 = vadd.f32 %v1561, %v1563
          %v1565 = vstv %s1553
          %v1566 = vadd.f32 %v1564, %v1565
          %v1567 = vstv %s1555
          %v1568 = vmul.f32 %v1567, %v915
          %v1569 = vstv %s1557
          %v1570 = vmul.f32 %v1569, %v917
          %v1571 = vadd.f32 %v1568, %v1570
          %v1572 = vstv %s1559
          %v1573 = vadd.f32 %v1571, %v1572
          %v1574 = vadd.f32 %v1566, 1.0
          %v1575 = vmul.f32 %v1574, 7.5
          %v1576 = vadd.f32 %v1573, 1.0
          %v1577 = vmul.f32 %v1576, 7.5
          %v1578 = vfloor.f32 %v1575
          %v1579 = vfloor.f32 %v1577
          %v1580 = vsub.f32 %v1575, %v1578
          %v1581 = vsub.f32 %v1577, %v1579
          %v1582 = vmax.f32 %v1578, -4.0
          %v1583 = vmin.f32 %v1582, 20.0
          %v1584 = vcvt.f32.s32.to.zero.pseudo %v1583
          %v1585 = vmax.f32 %v1579, -4.0
          %v1586 = vmin.f32 %v1585, 20.0
          %v1587 = vcvt.f32.s32.to.zero.pseudo %v1586
          %v1588 = vlaneseq
          %v1589 = vshrl.u32 %v1588, 7
          %v1590 = vsub.s32 0, %v1589
          %v1591 = vrot.slane %v1584, %v1590
          %v1592 = vlaneseq
          %v1593 = vshrl.u32 %v1592, 7
          %v1594 = vsub.s32 1, %v1593
          %v1595 = vrot.slane %v1584, %v1594
          %vm1596 = vcmp.eq.s32.totalorder %v919, %v1591
          %vm1597 = vcmp.eq.s32.totalorder %v919, %v1595
          %vm1598 = vcmp.eq.s32.totalorder %v920, %v1591
          %vm1599 = vcmp.eq.s32.totalorder %v920, %v1595
          %v1600 = vsub.f32 1.0, %v1580
          %v1602 = vlaneseq
          %v1603 = vshrl.u32 %v1602, 7
          %v1604 = vsub.s32 0, %v1603
          %v1605 = vrot.slane %v1600, %v1604
          %v1606 = vlaneseq
          %v1607 = vshrl.u32 %v1606, 7
          %v1608 = vsub.s32 1, %v1607
          %v1609 = vrot.slane %v1600, %v1608
          %v1612 = vsel %vm1596, %v1605, 0.0
          %v1613 = vsel %vm1597, %v1609, 0.0
          %v1614 = vsel %vm1598, %v1605, 0.0
          %v1615 = vsel %vm1599, %v1609, 0.0
          %v1616 = vadd.s32 %v1584, 1
          %v1617 = vlaneseq
          %v1618 = vshrl.u32 %v1617, 7
          %v1619 = vsub.s32 0, %v1618
          %v1620 = vrot.slane %v1616, %v1619
          %v1621 = vlaneseq
          %v1622 = vshrl.u32 %v1621, 7
          %v1623 = vsub.s32 1, %v1622
          %v1624 = vrot.slane %v1616, %v1623
          %vm1625 = vcmp.eq.s32.totalorder %v919, %v1620
          %vm1626 = vcmp.eq.s32.totalorder %v919, %v1624
          %vm1627 = vcmp.eq.s32.totalorder %v920, %v1620
          %vm1628 = vcmp.eq.s32.totalorder %v920, %v1624
          %v1630 = vlaneseq
          %v1631 = vshrl.u32 %v1630, 7
          %v1632 = vsub.s32 0, %v1631
          %v1633 = vrot.slane %v1580, %v1632
          %v1634 = vlaneseq
          %v1635 = vshrl.u32 %v1634, 7
          %v1636 = vsub.s32 1, %v1635
          %v1637 = vrot.slane %v1580, %v1636
          %v1640 = vsel %vm1625, %v1633, 0.0
          %v1641 = vsel %vm1626, %v1637, 0.0
          %v1642 = vsel %vm1627, %v1633, 0.0
          %v1643 = vsel %vm1628, %v1637, 0.0
          %v1644 = vadd.f32 %v1612, %v1640
          %v1645 = vadd.f32 %v1613, %v1641
          %v1646 = vadd.f32 %v1614, %v1642
          %v1647 = vadd.f32 %v1615, %v1643
          %v1648 = vlaneseq
          %v1649 = vshrl.u32 %v1648, 7
          %v1650 = vsub.s32 0, %v1649
          %v1651 = vrot.slane %v1587, %v1650
          %v1652 = vlaneseq
          %v1653 = vshrl.u32 %v1652, 7
          %v1654 = vsub.s32 1, %v1653
          %v1655 = vrot.slane %v1587, %v1654
          %vm1656 = vcmp.eq.s32.totalorder %v919, %v1651
          %vm1657 = vcmp.eq.s32.totalorder %v919, %v1655
          %vm1658 = vcmp.eq.s32.totalorder %v920, %v1651
          %vm1659 = vcmp.eq.s32.totalorder %v920, %v1655
          %v1660 = vsub.f32 1.0, %v1581
          %v1662 = vlaneseq
          %v1663 = vshrl.u32 %v1662, 7
          %v1664 = vsub.s32 0, %v1663
          %v1665 = vrot.slane %v1660, %v1664
          %v1666 = vlaneseq
          %v1667 = vshrl.u32 %v1666, 7
          %v1668 = vsub.s32 1, %v1667
          %v1669 = vrot.slane %v1660, %v1668
          %v1672 = vsel %vm1656, %v1665, 0.0
          %v1673 = vsel %vm1657, %v1669, 0.0
          %v1674 = vsel %vm1658, %v1665, 0.0
          %v1675 = vsel %vm1659, %v1669, 0.0
          %v1676 = vadd.s32 %v1587, 1
          %v1677 = vlaneseq
          %v1678 = vshrl.u32 %v1677, 7
          %v1679 = vsub.s32 0, %v1678
          %v1680 = vrot.slane %v1676, %v1679
          %v1681 = vlaneseq
          %v1682 = vshrl.u32 %v1681, 7
          %v1683 = vsub.s32 1, %v1682
          %v1684 = vrot.slane %v1676, %v1683
          %vm1685 = vcmp.eq.s32.totalorder %v919, %v1680
          %vm1686 = vcmp.eq.s32.totalorder %v919, %v1684
          %vm1687 = vcmp.eq.s32.totalorder %v920, %v1680
          %vm1688 = vcmp.eq.s32.totalorder %v920, %v1684
          %v1690 = vlaneseq
          %v1691 = vshrl.u32 %v1690, 7
          %v1692 = vsub.s32 0, %v1691
          %v1693 = vrot.slane %v1581, %v1692
          %v1694 = vlaneseq
          %v1695 = vshrl.u32 %v1694, 7
          %v1696 = vsub.s32 1, %v1695
          %v1697 = vrot.slane %v1581, %v1696
          %v1700 = vsel %vm1685, %v1693, 0.0
          %v1701 = vsel %vm1686, %v1697, 0.0
          %v1702 = vsel %vm1687, %v1693, 0.0
          %v1703 = vsel %vm1688, %v1697, 0.0
          %v1704 = vadd.f32 %v1672, %v1700
          %v1705 = vadd.f32 %v1673, %v1701
          %v1706 = vadd.f32 %v1674, %v1702
          %v1707 = vadd.f32 %v1675, %v1703
          %v1708 = vpack.c.bf16 %v1646, %v1644
          %v1709 = vpack.c.bf16 %v1647, %v1645
          %1710 = vmatprep.subr.bf16.mxu0 %v1709
          %1711 = vmatpush1.bf16.msra.mxu0 %v1708
          %1712 = vmatprep.subr.bf16.mxu0 0
          %1713 = vmatpush1.bf16.msra.mxu0 0
          %1714 = vmatprep.subr.bf16.mxu0 0
          %1715 = vmatpush1.bf16.msra.mxu0 0
          %1716 = vmatprep.subr.bf16.mxu0 0
          %1717 = vmatpush1.bf16.msra.mxu0 0
          %1718 = vmatprep.subr.bf16.mxu0 0
          %1719 = vmatpush1.bf16.msra.mxu0 0
          %1720 = vmatprep.subr.bf16.mxu0 0
          %1721 = vmatpush1.bf16.msra.mxu0 0
          %1722 = vmatprep.subr.bf16.mxu0 0
          %1723 = vmatpush1.bf16.msra.mxu0 0
          %1724 = vmatprep.subr.bf16.mxu0 0
          %1725 = vmatpush1.bf16.msra.mxu0 0
          %1726 = vmatprep.subr.bf16.mxu0 0
          %1727 = vmatpush1.bf16.msra.mxu0 0
          %1728 = vmatprep.subr.bf16.mxu0 0
          %1729 = vmatpush1.bf16.msra.mxu0 0
          %1730 = vmatprep.subr.bf16.mxu0 0
          %1731 = vmatpush1.bf16.msra.mxu0 0
          %1732 = vmatprep.subr.bf16.mxu0 0
          %1733 = vmatpush1.bf16.msra.mxu0 0
          %1734 = vmatprep.subr.bf16.mxu0 0
          %1735 = vmatpush1.bf16.msra.mxu0 0
          %1736 = vmatprep.subr.bf16.mxu0 0
          %1737 = vmatpush1.bf16.msra.mxu0 0
          %1738 = vmatprep.subr.bf16.mxu0 0
          %1739 = vmatpush1.bf16.msra.mxu0 0
          %1740 = vmatprep.subr.bf16.mxu0 0
          %1741 = vmatpush1.bf16.msra.mxu0 0
          %1742 = vmatprep.mubr.bf16.mxu0 0
          %1743 = vmatmul.mubr.bf16.gmra.mrb[0].mxu0 %v1084
          %v1744 = vpop.f32.mrb[0].mxu0
          %v1745 = vadd.f32 0.0, %v1744
          %v1746 = vpop.f32.mrb[0].mxu0
          %v1747 = vadd.f32 0.0, %v1746
          %v1748 = vpop.f32.mrb[0].mxu0
          %v1749 = vadd.f32 0.0, %v1748
          %v1750 = vpop.f32.mrb[0].mxu0
          %v1751 = vadd.f32 0.0, %v1750
          %1752 = vmatprep.mubr.bf16.mxu0 0
          %1753 = vmatmul.mubr.bf16.gmra.mrb[0].mxu0 %v1087
          %v1754 = vpop.f32.mrb[0].mxu0
          %v1755 = vadd.f32 0.0, %v1754
          %v1756 = vpop.f32.mrb[0].mxu0
          %v1757 = vadd.f32 0.0, %v1756
          %v1758 = vpop.f32.mrb[0].mxu0
          %v1759 = vadd.f32 0.0, %v1758
          %v1760 = vpop.f32.mrb[0].mxu0
          %v1761 = vadd.f32 0.0, %v1760
          %1762 = vmatprep.mubr.bf16.mxu0 0
          %1763 = vmatmul.mubr.bf16.gmra.mrb[0].mxu0 %v1090
          %v1764 = vpop.f32.mrb[0].mxu0
          %v1765 = vadd.f32 0.0, %v1764
          %v1766 = vpop.f32.mrb[0].mxu0
          %v1767 = vadd.f32 0.0, %v1766
          %v1768 = vpop.f32.mrb[0].mxu0
          %v1769 = vadd.f32 0.0, %v1768
          %v1770 = vpop.f32.mrb[0].mxu0
          %v1771 = vadd.f32 0.0, %v1770
          %1772 = vdwg.mxu0
          %v1773 = vlaneseq
          %v1774 = vshrl.u32 %v1773, 7
          %v1775 = vsub.s32 2, %v1774
          %v1776 = vrot.slane %v905, %v1775
          %v1777 = vlaneseq
          %v1778 = vshrl.u32 %v1777, 7
          %v1779 = vsub.s32 6, %v1778
          %v1780 = vrot.slane %v905, %v1779
          %v1783 = vlaneseq
          %v1784 = vshrl.u32 %v1783, 7
          %v1785 = vsub.s32 2, %v1784
          %v1786 = vrot.slane %v1776, %v1785
          %v1787 = vlaneseq
          %v1788 = vshrl.u32 %v1787, 7
          %v1789 = vsub.s32 2, %v1788
          %v1790 = vrot.slane %v1780, %v1789
          %v1791 = vmul.f32 %v1704, %v1786
          %v1792 = vmul.f32 %v1705, %v1790
          %v1793 = vmul.f32 %v1706, %v1786
          %v1794 = vmul.f32 %v1707, %v1790
          %v1795 = vmul.f32 %v1745, %v1791
          %v1796 = vmul.f32 %v1747, %v1792
          %v1797 = vmul.f32 %v1749, %v1793
          %v1798 = vmul.f32 %v1751, %v1794
          %v1799 = vmul.f32 %v1755, %v1791
          %v1800 = vmul.f32 %v1757, %v1792
          %v1801 = vmul.f32 %v1759, %v1793
          %v1802 = vmul.f32 %v1761, %v1794
          %v1803 = vmul.f32 %v1765, %v1791
          %v1804 = vmul.f32 %v1767, %v1792
          %v1805 = vmul.f32 %v1769, %v1793
          %v1806 = vmul.f32 %v1771, %v1794
          %v1807 = vadd.f32 %v1795, %v1797
          %v1808 = vrot.slane %v1807, 4
          %v1809 = vadd.f32 %v1807, %v1808
          %v1810 = vrot.slane %v1809, 2
          %v1811 = vadd.f32 %v1809, %v1810
          %v1812 = vrot.slane %v1811, 1
          %v1813 = vadd.f32 %v1811, %v1812
          %v1814 = vadd.f32 %v1796, %v1798
          %v1815 = vrot.slane %v1814, 4
          %v1816 = vadd.f32 %v1814, %v1815
          %v1817 = vrot.slane %v1816, 2
          %v1818 = vadd.f32 %v1816, %v1817
          %v1819 = vrot.slane %v1818, 1
          %v1820 = vadd.f32 %v1818, %v1819
          %v1821 = vadd.f32 %v1799, %v1801
          %v1822 = vrot.slane %v1821, 4
          %v1823 = vadd.f32 %v1821, %v1822
          %v1824 = vrot.slane %v1823, 2
          %v1825 = vadd.f32 %v1823, %v1824
          %v1826 = vrot.slane %v1825, 1
          %v1827 = vadd.f32 %v1825, %v1826
          %v1828 = vadd.f32 %v1800, %v1802
          %v1829 = vrot.slane %v1828, 4
          %v1830 = vadd.f32 %v1828, %v1829
          %v1831 = vrot.slane %v1830, 2
          %v1832 = vadd.f32 %v1830, %v1831
          %v1833 = vrot.slane %v1832, 1
          %v1834 = vadd.f32 %v1832, %v1833
          %v1835 = vadd.f32 %v1803, %v1805
          %v1836 = vrot.slane %v1835, 4
          %v1837 = vadd.f32 %v1835, %v1836
          %v1838 = vrot.slane %v1837, 2
          %v1839 = vadd.f32 %v1837, %v1838
          %v1840 = vrot.slane %v1839, 1
          %v1841 = vadd.f32 %v1839, %v1840
          %v1842 = vadd.f32 %v1804, %v1806
          %v1843 = vrot.slane %v1842, 4
          %v1844 = vadd.f32 %v1842, %v1843
          %v1845 = vrot.slane %v1844, 2
          %v1846 = vadd.f32 %v1844, %v1845
          %v1847 = vrot.slane %v1846, 1
          %v1848 = vadd.f32 %v1846, %v1847
          %v1849 = vadd.f32 %v1541, %v1813
          %v1850 = vadd.f32 %v1542, %v1820
          %v1851 = vadd.f32 %v1543, %v1827
          %v1852 = vadd.f32 %v1544, %v1834
          %v1853 = vadd.f32 %v1545, %v1841
          %v1854 = vadd.f32 %v1546, %v1848
          %s1855 = sadd.s32 %s1238, 3
          %s1856 = smul.u32 %s1855, 6
          %s1857 = sld [smem:[#allocation3 + %s1856]]
          %s1858 = sadd.s32 %s1856, 1
          %s1859 = sld [smem:[#allocation3 + %s1858]]
          %s1860 = sadd.s32 %s1856, 2
          %s1861 = sld [smem:[#allocation3 + %s1860]]
          %s1862 = sadd.s32 %s1856, 3
          %s1863 = sld [smem:[#allocation3 + %s1862]]
          %s1864 = sadd.s32 %s1856, 4
          %s1865 = sld [smem:[#allocation3 + %s1864]]
          %s1866 = sadd.s32 %s1856, 5
          %s1867 = sld [smem:[#allocation3 + %s1866]]
          %v1868 = vstv %s1857
          %v1869 = vmul.f32 %v1868, %v915
          %v1870 = vstv %s1859
          %v1871 = vmul.f32 %v1870, %v917
          %v1872 = vadd.f32 %v1869, %v1871
          %v1873 = vstv %s1861
          %v1874 = vadd.f32 %v1872, %v1873
          %v1875 = vstv %s1863
          %v1876 = vmul.f32 %v1875, %v915
          %v1877 = vstv %s1865
          %v1878 = vmul.f32 %v1877, %v917
          %v1879 = vadd.f32 %v1876, %v1878
          %v1880 = vstv %s1867
          %v1881 = vadd.f32 %v1879, %v1880
          %v1882 = vadd.f32 %v1874, 1.0
          %v1883 = vmul.f32 %v1882, 7.5
          %v1884 = vadd.f32 %v1881, 1.0
          %v1885 = vmul.f32 %v1884, 7.5
          %v1886 = vfloor.f32 %v1883
          %v1887 = vfloor.f32 %v1885
          %v1888 = vsub.f32 %v1883, %v1886
          %v1889 = vsub.f32 %v1885, %v1887
          %v1890 = vmax.f32 %v1886, -4.0
          %v1891 = vmin.f32 %v1890, 20.0
          %v1892 = vcvt.f32.s32.to.zero.pseudo %v1891
          %v1893 = vmax.f32 %v1887, -4.0
          %v1894 = vmin.f32 %v1893, 20.0
          %v1895 = vcvt.f32.s32.to.zero.pseudo %v1894
          %v1896 = vlaneseq
          %v1897 = vshrl.u32 %v1896, 7
          %v1898 = vsub.s32 0, %v1897
          %v1899 = vrot.slane %v1892, %v1898
          %v1900 = vlaneseq
          %v1901 = vshrl.u32 %v1900, 7
          %v1902 = vsub.s32 1, %v1901
          %v1903 = vrot.slane %v1892, %v1902
          %vm1904 = vcmp.eq.s32.totalorder %v919, %v1899
          %vm1905 = vcmp.eq.s32.totalorder %v919, %v1903
          %vm1906 = vcmp.eq.s32.totalorder %v920, %v1899
          %vm1907 = vcmp.eq.s32.totalorder %v920, %v1903
          %v1908 = vsub.f32 1.0, %v1888
          %v1910 = vlaneseq
          %v1911 = vshrl.u32 %v1910, 7
          %v1912 = vsub.s32 0, %v1911
          %v1913 = vrot.slane %v1908, %v1912
          %v1914 = vlaneseq
          %v1915 = vshrl.u32 %v1914, 7
          %v1916 = vsub.s32 1, %v1915
          %v1917 = vrot.slane %v1908, %v1916
          %v1920 = vsel %vm1904, %v1913, 0.0
          %v1921 = vsel %vm1905, %v1917, 0.0
          %v1922 = vsel %vm1906, %v1913, 0.0
          %v1923 = vsel %vm1907, %v1917, 0.0
          %v1924 = vadd.s32 %v1892, 1
          %v1925 = vlaneseq
          %v1926 = vshrl.u32 %v1925, 7
          %v1927 = vsub.s32 0, %v1926
          %v1928 = vrot.slane %v1924, %v1927
          %v1929 = vlaneseq
          %v1930 = vshrl.u32 %v1929, 7
          %v1931 = vsub.s32 1, %v1930
          %v1932 = vrot.slane %v1924, %v1931
          %vm1933 = vcmp.eq.s32.totalorder %v919, %v1928
          %vm1934 = vcmp.eq.s32.totalorder %v919, %v1932
          %vm1935 = vcmp.eq.s32.totalorder %v920, %v1928
          %vm1936 = vcmp.eq.s32.totalorder %v920, %v1932
          %v1938 = vlaneseq
          %v1939 = vshrl.u32 %v1938, 7
          %v1940 = vsub.s32 0, %v1939
          %v1941 = vrot.slane %v1888, %v1940
          %v1942 = vlaneseq
          %v1943 = vshrl.u32 %v1942, 7
          %v1944 = vsub.s32 1, %v1943
          %v1945 = vrot.slane %v1888, %v1944
          %v1948 = vsel %vm1933, %v1941, 0.0
          %v1949 = vsel %vm1934, %v1945, 0.0
          %v1950 = vsel %vm1935, %v1941, 0.0
          %v1951 = vsel %vm1936, %v1945, 0.0
          %v1952 = vadd.f32 %v1920, %v1948
          %v1953 = vadd.f32 %v1921, %v1949
          %v1954 = vadd.f32 %v1922, %v1950
          %v1955 = vadd.f32 %v1923, %v1951
          %v1956 = vlaneseq
          %v1957 = vshrl.u32 %v1956, 7
          %v1958 = vsub.s32 0, %v1957
          %v1959 = vrot.slane %v1895, %v1958
          %v1960 = vlaneseq
          %v1961 = vshrl.u32 %v1960, 7
          %v1962 = vsub.s32 1, %v1961
          %v1963 = vrot.slane %v1895, %v1962
          %vm1964 = vcmp.eq.s32.totalorder %v919, %v1959
          %vm1965 = vcmp.eq.s32.totalorder %v919, %v1963
          %vm1966 = vcmp.eq.s32.totalorder %v920, %v1959
          %vm1967 = vcmp.eq.s32.totalorder %v920, %v1963
          %v1968 = vsub.f32 1.0, %v1889
          %v1970 = vlaneseq
          %v1971 = vshrl.u32 %v1970, 7
          %v1972 = vsub.s32 0, %v1971
          %v1973 = vrot.slane %v1968, %v1972
          %v1974 = vlaneseq
          %v1975 = vshrl.u32 %v1974, 7
          %v1976 = vsub.s32 1, %v1975
          %v1977 = vrot.slane %v1968, %v1976
          %v1980 = vsel %vm1964, %v1973, 0.0
          %v1981 = vsel %vm1965, %v1977, 0.0
          %v1982 = vsel %vm1966, %v1973, 0.0
          %v1983 = vsel %vm1967, %v1977, 0.0
          %v1984 = vadd.s32 %v1895, 1
          %v1985 = vlaneseq
          %v1986 = vshrl.u32 %v1985, 7
          %v1987 = vsub.s32 0, %v1986
          %v1988 = vrot.slane %v1984, %v1987
          %v1989 = vlaneseq
          %v1990 = vshrl.u32 %v1989, 7
          %v1991 = vsub.s32 1, %v1990
          %v1992 = vrot.slane %v1984, %v1991
          %vm1993 = vcmp.eq.s32.totalorder %v919, %v1988
          %vm1994 = vcmp.eq.s32.totalorder %v919, %v1992
          %vm1995 = vcmp.eq.s32.totalorder %v920, %v1988
          %vm1996 = vcmp.eq.s32.totalorder %v920, %v1992
          %v1998 = vlaneseq
          %v1999 = vshrl.u32 %v1998, 7
          %v2000 = vsub.s32 0, %v1999
          %v2001 = vrot.slane %v1889, %v2000
          %v2002 = vlaneseq
          %v2003 = vshrl.u32 %v2002, 7
          %v2004 = vsub.s32 1, %v2003
          %v2005 = vrot.slane %v1889, %v2004
          %v2008 = vsel %vm1993, %v2001, 0.0
          %v2009 = vsel %vm1994, %v2005, 0.0
          %v2010 = vsel %vm1995, %v2001, 0.0
          %v2011 = vsel %vm1996, %v2005, 0.0
          %v2012 = vadd.f32 %v1980, %v2008
          %v2013 = vadd.f32 %v1981, %v2009
          %v2014 = vadd.f32 %v1982, %v2010
          %v2015 = vadd.f32 %v1983, %v2011
          %v2016 = vpack.c.bf16 %v1954, %v1952
          %v2017 = vpack.c.bf16 %v1955, %v1953
          %2018 = vmatprep.subr.bf16.mxu0 %v2017
          %2019 = vmatpush1.bf16.msra.mxu0 %v2016
          %2020 = vmatprep.subr.bf16.mxu0 0
          %2021 = vmatpush1.bf16.msra.mxu0 0
          %2022 = vmatprep.subr.bf16.mxu0 0
          %2023 = vmatpush1.bf16.msra.mxu0 0
          %2024 = vmatprep.subr.bf16.mxu0 0
          %2025 = vmatpush1.bf16.msra.mxu0 0
          %2026 = vmatprep.subr.bf16.mxu0 0
          %2027 = vmatpush1.bf16.msra.mxu0 0
          %2028 = vmatprep.subr.bf16.mxu0 0
          %2029 = vmatpush1.bf16.msra.mxu0 0
          %2030 = vmatprep.subr.bf16.mxu0 0
          %2031 = vmatpush1.bf16.msra.mxu0 0
          %2032 = vmatprep.subr.bf16.mxu0 0
          %2033 = vmatpush1.bf16.msra.mxu0 0
          %2034 = vmatprep.subr.bf16.mxu0 0
          %2035 = vmatpush1.bf16.msra.mxu0 0
          %2036 = vmatprep.subr.bf16.mxu0 0
          %2037 = vmatpush1.bf16.msra.mxu0 0
          %2038 = vmatprep.subr.bf16.mxu0 0
          %2039 = vmatpush1.bf16.msra.mxu0 0
          %2040 = vmatprep.subr.bf16.mxu0 0
          %2041 = vmatpush1.bf16.msra.mxu0 0
          %2042 = vmatprep.subr.bf16.mxu0 0
          %2043 = vmatpush1.bf16.msra.mxu0 0
          %2044 = vmatprep.subr.bf16.mxu0 0
          %2045 = vmatpush1.bf16.msra.mxu0 0
          %2046 = vmatprep.subr.bf16.mxu0 0
          %2047 = vmatpush1.bf16.msra.mxu0 0
          %2048 = vmatprep.subr.bf16.mxu0 0
          %2049 = vmatpush1.bf16.msra.mxu0 0
          %2050 = vmatprep.mubr.bf16.mxu0 0
          %2051 = vmatmul.mubr.bf16.gmra.mrb[0].mxu0 %v1084
          %v2052 = vpop.f32.mrb[0].mxu0
          %v2053 = vadd.f32 0.0, %v2052
          %v2054 = vpop.f32.mrb[0].mxu0
          %v2055 = vadd.f32 0.0, %v2054
          %v2056 = vpop.f32.mrb[0].mxu0
          %v2057 = vadd.f32 0.0, %v2056
          %v2058 = vpop.f32.mrb[0].mxu0
          %v2059 = vadd.f32 0.0, %v2058
          %2060 = vmatprep.mubr.bf16.mxu0 0
          %2061 = vmatmul.mubr.bf16.gmra.mrb[0].mxu0 %v1087
          %v2062 = vpop.f32.mrb[0].mxu0
          %v2063 = vadd.f32 0.0, %v2062
          %v2064 = vpop.f32.mrb[0].mxu0
          %v2065 = vadd.f32 0.0, %v2064
          %v2066 = vpop.f32.mrb[0].mxu0
          %v2067 = vadd.f32 0.0, %v2066
          %v2068 = vpop.f32.mrb[0].mxu0
          %v2069 = vadd.f32 0.0, %v2068
          %2070 = vmatprep.mubr.bf16.mxu0 0
          %2071 = vmatmul.mubr.bf16.gmra.mrb[0].mxu0 %v1090
          %v2072 = vpop.f32.mrb[0].mxu0
          %v2073 = vadd.f32 0.0, %v2072
          %v2074 = vpop.f32.mrb[0].mxu0
          %v2075 = vadd.f32 0.0, %v2074
          %v2076 = vpop.f32.mrb[0].mxu0
          %v2077 = vadd.f32 0.0, %v2076
          %v2078 = vpop.f32.mrb[0].mxu0
          %v2079 = vadd.f32 0.0, %v2078
          %2080 = vdwg.mxu0
          %v2081 = vlaneseq
          %v2082 = vshrl.u32 %v2081, 7
          %v2083 = vsub.s32 3, %v2082
          %v2084 = vrot.slane %v905, %v2083
          %v2085 = vlaneseq
          %v2086 = vshrl.u32 %v2085, 7
          %v2087 = vsub.s32 7, %v2086
          %v2088 = vrot.slane %v905, %v2087
          %v2091 = vlaneseq
          %v2092 = vshrl.u32 %v2091, 7
          %v2093 = vsub.s32 3, %v2092
          %v2094 = vrot.slane %v2084, %v2093
          %v2095 = vlaneseq
          %v2096 = vshrl.u32 %v2095, 7
          %v2097 = vsub.s32 3, %v2096
          %v2098 = vrot.slane %v2088, %v2097
          %v2099 = vmul.f32 %v2012, %v2094
          %v2100 = vmul.f32 %v2013, %v2098
          %v2101 = vmul.f32 %v2014, %v2094
          %v2102 = vmul.f32 %v2015, %v2098
          %v2103 = vmul.f32 %v2053, %v2099
          %v2104 = vmul.f32 %v2055, %v2100
          %v2105 = vmul.f32 %v2057, %v2101
          %v2106 = vmul.f32 %v2059, %v2102
          %v2107 = vmul.f32 %v2063, %v2099
          %v2108 = vmul.f32 %v2065, %v2100
          %v2109 = vmul.f32 %v2067, %v2101
          %v2110 = vmul.f32 %v2069, %v2102
          %v2111 = vmul.f32 %v2073, %v2099
          %v2112 = vmul.f32 %v2075, %v2100
          %v2113 = vmul.f32 %v2077, %v2101
          %v2114 = vmul.f32 %v2079, %v2102
          %v2115 = vadd.f32 %v2103, %v2105
          %v2116 = vrot.slane %v2115, 4
          %v2117 = vadd.f32 %v2115, %v2116
          %v2118 = vrot.slane %v2117, 2
          %v2119 = vadd.f32 %v2117, %v2118
          %v2120 = vrot.slane %v2119, 1
          %v2121 = vadd.f32 %v2119, %v2120
          %v2122 = vadd.f32 %v2104, %v2106
          %v2123 = vrot.slane %v2122, 4
          %v2124 = vadd.f32 %v2122, %v2123
          %v2125 = vrot.slane %v2124, 2
          %v2126 = vadd.f32 %v2124, %v2125
          %v2127 = vrot.slane %v2126, 1
          %v2128 = vadd.f32 %v2126, %v2127
          %v2129 = vadd.f32 %v2107, %v2109
          %v2130 = vrot.slane %v2129, 4
          %v2131 = vadd.f32 %v2129, %v2130
          %v2132 = vrot.slane %v2131, 2
          %v2133 = vadd.f32 %v2131, %v2132
          %v2134 = vrot.slane %v2133, 1
          %v2135 = vadd.f32 %v2133, %v2134
          %v2136 = vadd.f32 %v2108, %v2110
          %v2137 = vrot.slane %v2136, 4
          %v2138 = vadd.f32 %v2136, %v2137
          %v2139 = vrot.slane %v2138, 2
          %v2140 = vadd.f32 %v2138, %v2139
          %v2141 = vrot.slane %v2140, 1
          %v2142 = vadd.f32 %v2140, %v2141
          %v2143 = vadd.f32 %v2111, %v2113
          %v2144 = vrot.slane %v2143, 4
          %v2145 = vadd.f32 %v2143, %v2144
          %v2146 = vrot.slane %v2145, 2
          %v2147 = vadd.f32 %v2145, %v2146
          %v2148 = vrot.slane %v2147, 1
          %v2149 = vadd.f32 %v2147, %v2148
          %v2150 = vadd.f32 %v2112, %v2114
          %v2151 = vrot.slane %v2150, 4
          %v2152 = vadd.f32 %v2150, %v2151
          %v2153 = vrot.slane %v2152, 2
          %v2154 = vadd.f32 %v2152, %v2153
          %v2155 = vrot.slane %v2154, 1
          %v2156 = vadd.f32 %v2154, %v2155
          %v2157 = vadd.f32 %v1849, %v2121
          %v2158 = vadd.f32 %v1850, %v2128
          %v2159 = vadd.f32 %v1851, %v2135
          %v2160 = vadd.f32 %v1852, %v2142
          %v2161 = vadd.f32 %v1853, %v2149
          %v2162 = vadd.f32 %v1854, %v2156
          %v2169 = vcombine.low %v2157, %v2158
          %v2170 = vcombine.low %v2159, %v2160
          %v2171 = vcombine.low %v2161, %v2162
          %v2172 = vrot.slane %v2170, 7
          %v2173 = vsel %vm715, %v2172, %v2169
          %v2174 = vsel %vm723, %v2172, %v2173
          %v2175 = vrot.slane %v2171, 6
          %v2176 = vsel %vm717, %v2175, %v2174
          %v2177 = vsel %vm725, %v2175, %v2176
          %2179 = vst [vmem:[%s409] sm:$0x77] %v2177
        $region89: #{novel_view_homography.1} parent=76 // pred_fallthru
          _
        %p2180 = scmp.lt.s32.totalorder %s21, 1
        %s2181 = scalar_select %p2180, %s21, 1
        %s2182 = smul.addr %s2181, 2
        %s2183 = smul.addr %s2182, 4
        %s2184 = scalar_lea.vmem %s5, %s2183
        // Predicated region
        $region90: #{novel_view_homography.1} parent=76 // pred_check
          %p2185 = pneg %p164
        $region91: #{novel_view_homography.1} parent=76 // pred_check_branch
          %2187 = sbr.rel (%p2185) target = $region93
        $region92: #{novel_view_homography.1} parent=76 // pred_region
          _
        $region93: #{novel_view_homography.1} parent=76 // pred_fallthru
          _
      $region77: #{novel_view_homography.1} parent=5 // pred_fallthru
        _
      %p2188 = scmp.le.s32.totalorder 2, %s12
      // Predicated region
      $region94: #{novel_view_homography.1} parent=5 // pred_check
        %p2189 = pneg %p2188
      $region95: #{novel_view_homography.1} parent=5 // pred_check_branch
        %2191 = sbr.rel (%p2189) target = $region97
      $region96: #{novel_view_homography.1} parent=5 // pred_region
        %s2192 = ssub.s32 %s12, 2
        // Predicated region
        $region98: #{novel_view_homography.1} parent=96 // pred_check
          %p2193 = pneg %p170
        $region99: #{novel_view_homography.1} parent=96 // pred_check_branch
          %2195 = sbr.rel (%p2193) target = $region101
        $region100: #{novel_view_homography.1} parent=96 // pred_region
          %p2196 = scmp.lt.s32.totalorder %s23, 1
          %s2197 = scalar_select %p2196, %s23, 1
          %s2198 = smul.addr %s2197, 2
          %s2199 = smul.addr %s2198, 4
          %s2200 = scalar_lea.vmem %s5, %s2199
        $region101: #{novel_view_homography.1} parent=96 // pred_fallthru
          _
      $region97: #{novel_view_homography.1} parent=5 // pred_fallthru
        _
    $region6: #{novel_view_homography.1} parent=1 // loop_footer
      %s16 = sadd.s32 1, %s12
    $region7: #{novel_view_homography.1} parent=1 // loop_footer_branch
      %11 = sbr.rel target = $region3
    $region8: #{novel_view_homography.1} parent=1 // loop_exit
      _
    %2201 = vsyncpa [#allocation4], 1
    %s2202 = scalar_lea.sflag [#allocation4], 1
    %2203 = vsyncpa %s2202, 1

</llo_original>
